<compile_context>
chip_gen: v6e
topology: v6e:2x2x1
jax: 0.10.0
libtpu: 0.0.40
codegen_flags: <defaults>
</compile_context>

<pallas_src>
import functools
import math

import jax
import jax.numpy as jnp
from jax import lax
from jax.experimental import pallas as pl
from jax.experimental.pallas import tpu as pltpu

EPS = 1e-6
NEG_INF = -1e9

_LAYER_WEIGHTS = (
    "self_wqkv", "self_bqkv", "self_wo", "self_bo",
    "src_wq", "src_bq", "src_wkv", "src_bkv", "src_wo", "src_bo",
    "w1", "b1", "w2", "b2", "ln_g", "ln_b",
)
_CONST_WEIGHTS = ("norm_g", "norm_b")


# ------------------------------- fused kernel -------------------------------

def _decoder_kernel(
    x_ref, mem_ref, src_mask_ref,
    self_wqkv, self_bqkv, self_wo, self_bo,
    src_wq, src_bq, src_wkv, src_bkv, src_wo, src_bo,
    w1, b1, w2, b2, ln_g, ln_b, norm_g, norm_b,
    o_ref, x_scr, *, num_heads,
):
    layer = pl.program_id(1)
    last_layer = pl.num_programs(1) - 1

    # Initialize the residual-stream carry at the first layer step of this batch element.
    @pl.when(layer == 0)
    def _():
        x_scr[...] = x_ref[0]

    x = x_scr[...]                    # (T, D) f32 residual stream (carried across layers)
    mem = mem_ref[0]                  # (S, D) f32 encoder memory
    src_ok = src_mask_ref[0] > 0.5    # (1, S) bool padding mask

    T, D = x.shape
    H = num_heads
    dk = D // H
    scale = 1.0 / math.sqrt(dk)

    # Causal (subsequent-position) target mask generated on-chip, already stacked per-head
    # along sublanes: (H*T, T).  TODO(synk): an arbitrary (non-causal) tgt_mask would have
    # to be passed as an int8 input instead of being synthesized here.
    rows = lax.broadcasted_iota(jnp.int32, (H * T, T), 0)
    cols = lax.broadcasted_iota(jnp.int32, (H * T, T), 1)
    causal_ok = (rows % T) >= cols

    def layernorm(z, g, b):
        d = z.shape[-1]
        mean = jnp.mean(z, axis=-1, keepdims=True)
        # torch.std default is unbiased (ddof=1), as in the Annotated Transformer.
        var = jnp.sum((z - mean) ** 2, axis=-1, keepdims=True) / (d - 1)
        inv = pl.reciprocal(jnp.sqrt(var) + EPS, approx=True)   # EUP slot, frees VALU
        return g * (z - mean) * inv + b

    def proj(a, w_ref, b_ref):
        # bf16 MXU feed, f32 accumulation, f32 bias add.
        return jnp.dot(a.astype(jnp.bfloat16), w_ref[0],
                       preferred_element_type=jnp.float32) + b_ref[0]

    def mha(q, k, v, ok):
        # q: (T, D) f32; k, v: (Lk, D) f32; ok: bool mask broadcastable to (H*T, Lk).
        qb = q.astype(jnp.bfloat16)
        kb = k.astype(jnp.bfloat16)
        vb = v.astype(jnp.bfloat16)
        # Per-head Q K^T (contract on dim 1 of both operands: no K transpose materialized),
        # stacked along sublanes so mask/max/exp/reciprocal run once for all heads.
        s = jnp.concatenate(
            [lax.dot_general(qb[:, h * dk:(h + 1) * dk], kb[:, h * dk:(h + 1) * dk],
                             (((1,), (1,)), ((), ())),
                             preferred_element_type=jnp.float32)
             for h in range(H)], axis=0) * scale                       # (H*T, Lk) f32
        s = jnp.where(ok, s, jnp.float32(NEG_INF))
        s = s - jnp.max(s, axis=-1, keepdims=True)
        p = jnp.exp(s)
        p = p * pl.reciprocal(jnp.sum(p, axis=-1, keepdims=True), approx=True)
        p = p.astype(jnp.bfloat16)
        # Per-head P V, re-assembled in vregs (no scratch round-trip).
        return jnp.concatenate(
            [jnp.dot(p[h * T:(h + 1) * T, :], vb[:, h * dk:(h + 1) * dk],
                     preferred_element_type=jnp.float32)
             for h in range(H)], axis=-1)                              # (T, D) f32

    # --- sublayer 0: masked self-attention (pre-norm + in-kernel residual) ---
    h0 = layernorm(x, ln_g[0], ln_b[0])
    qkv = proj(h0, self_wqkv, self_bqkv)                               # fused QKV (T, 3D)
    ctx = mha(qkv[:, :D], qkv[:, D:2 * D], qkv[:, 2 * D:], causal_ok)
    x = x + proj(ctx, self_wo, self_bo)

    # --- sublayer 1: source attention over encoder memory (fused K/V) ---
    h1 = layernorm(x, ln_g[1], ln_b[1])
    q = proj(h1, src_wq, src_bq)
    kv = proj(mem, src_wkv, src_bkv)                                   # (S, 2D)
    ctx = mha(q, kv[:, :D], kv[:, D:], src_ok)
    x = x + proj(ctx, src_wo, src_bo)

    # --- sublayer 2: position-wise feed-forward ---
    h2 = layernorm(x, ln_g[2], ln_b[2])
    x = x + proj(jnp.maximum(proj(h2, w1, b1), 0.0), w2, b2)

    x_scr[...] = x

    # Final LayerNorm + output store only after the last layer.
    @pl.when(layer == last_layer)
    def _():
        o_ref[0] = layernorm(x, norm_g[...], norm_b[...])


# ------------------------------ model wrapper --------------------------------

def decoder_forward(params, x, memory, src_mask, num_heads):
    B, T, D = x.shape
    S = memory.shape[1]
    L = params["self_wqkv"].shape[0]
    F = params["w1"].shape[-1]
    assert D % num_heads == 0

    layer_w = [params[n] for n in _LAYER_WEIGHTS]
    const_w = [params[n] for n in _CONST_WEIGHTS]

    def batch_spec(a):
        nz = a.ndim - 1
        return pl.BlockSpec((1,) + a.shape[1:], lambda b, l, nz=nz: (b,) + (0,) * nz)

    def layer_spec(a, rows=1):
        nz = a.ndim - 1
        return pl.BlockSpec((rows,) + a.shape[1:], lambda b, l, nz=nz: (l,) + (0,) * nz)

    def const_spec(a):
        nd = a.ndim
        return pl.BlockSpec(a.shape, lambda b, l, nd=nd: (0,) * nd)

    in_specs = [batch_spec(x), batch_spec(memory), batch_spec(src_mask)]
    for name, w in zip(_LAYER_WEIGHTS, layer_w):
        in_specs.append(layer_spec(w, rows=3 if name in ("ln_g", "ln_b") else 1))
    in_specs += [const_spec(w) for w in const_w]

    # Advisory cost estimate so XLA can schedule around the fused decoder.
    flops_per_bl = 2 * (
        T * D * 3 * D            # fused QKV projection
        + 2 * T * T * D          # self-attn scores + PV
        + T * D * D              # self-attn output projection
        + T * D * D              # src-attn Q projection
        + S * D * 2 * D          # src-attn fused KV projection
        + 2 * T * S * D          # src-attn scores + PV
        + T * D * D              # src-attn output projection
        + 2 * T * D * F          # FFN
    )
    flops = int(B * L * flops_per_bl)
    transcendentals = int(B * L * (num_heads * T * (T + S) + 5 * T))
    bytes_accessed = int(
        sum(int(w.size) * w.dtype.itemsize for w in layer_w + const_w)
        + 2 * x.size * 4 + memory.size * 4 + src_mask.size * 4
    )

    kernel = functools.partial(_decoder_kernel, num_heads=num_heads)

    return pl.pallas_call(
        kernel,
        out_shape=jax.ShapeDtypeStruct((B, T, D), jnp.float32),
        grid=(B, L),                                   # layer axis innermost (carried)
        in_specs=in_specs,
        out_specs=pl.BlockSpec((1, T, D), lambda b, l: (b, 0, 0)),
        scratch_shapes=[pltpu.VMEM((T, D), jnp.float32)],   # residual-stream carry
        compiler_params=pltpu.CompilerParams(
            dimension_semantics=("parallel", "arbitrary"),
            vmem_limit_bytes=32 * 1024 * 1024,
        ),
        cost_estimate=pl.CostEstimate(
            flops=flops, transcendentals=transcendentals, bytes_accessed=bytes_accessed),
    )(x, memory, src_mask, *layer_w, *const_w)


# --------------------------- deterministic params ----------------------------

def init_params(key, num_layers, d_model, d_ff):
    def nrm(k, shape, scale=0.1, dtype=jnp.float32):
        return (scale * jax.random.normal(k, shape)).astype(dtype)

    L, D, F = num_layers, d_model, d_ff
    bf = jnp.bfloat16
    ks = jax.random.split(key, 18)
    return {
        # Matmul weights stored bf16 (MXU-native feed; halves weight DMA + VMEM).
        "self_wqkv": nrm(ks[0], (L, D, 3 * D), dtype=bf),
        "self_bqkv": nrm(ks[1], (L, 1, 3 * D)),
        "self_wo":   nrm(ks[2], (L, D, D), dtype=bf),
        "self_bo":   nrm(ks[3], (L, 1, D)),
        "src_wq":    nrm(ks[4], (L, D, D), dtype=bf),
        "src_bq":    nrm(ks[5], (L, 1, D)),
        "src_wkv":   nrm(ks[6], (L, D, 2 * D), dtype=bf),
        "src_bkv":   nrm(ks[7], (L, 1, 2 * D)),
        "src_wo":    nrm(ks[8], (L, D, D), dtype=bf),
        "src_bo":    nrm(ks[9], (L, 1, D)),
        "w1":        nrm(ks[10], (L, D, F), dtype=bf),
        "b1":        nrm(ks[11], (L, 1, F)),
        "w2":        nrm(ks[12], (L, F, D), dtype=bf),
        "b2":        nrm(ks[13], (L, 1, D)),
        "ln_g": 1.0 + nrm(ks[14], (3 * L, 1, D)),
        "ln_b":      nrm(ks[15], (3 * L, 1, D)),
        "norm_g": 1.0 + nrm(ks[16], (1, D)),
        "norm_b":    nrm(ks[17], (1, D)),
    }


# ------------------------------ pure-JAX reference ----------------------------

def _ref_ln(x, g, b):
    d = x.shape[-1]
    mean = x.mean(-1, keepdims=True)
    std = jnp.sqrt(((x - mean) ** 2).sum(-1, keepdims=True) / (d - 1))
    return g * (x - mean) / (std + EPS) + b


def _ref_mha(q_in, k_in, v_in, mask, wq, bq, wk, bk, wv, bv, wo, bo, num_heads):
    f32 = jnp.float32
    B, Lq, D = q_in.shape
    Lk = k_in.shape[1]
    dk = D // num_heads
    q = (q_in @ wq.astype(f32) + bq).reshape(B, Lq, num_heads, dk).transpose(0, 2, 1, 3)
    k = (k_in @ wk.astype(f32) + bk).reshape(B, Lk, num_heads, dk).transpose(0, 2, 1, 3)
    v = (v_in @ wv.astype(f32) + bv).reshape(B, Lk, num_heads, dk).transpose(0, 2, 1, 3)
    s = jnp.einsum("bhqd,bhkd->bhqk", q, k) / math.sqrt(dk)
    s = jnp.where(mask[:, None, :, :] > 0.5, s, -1e9)
    a = jax.nn.softmax(s, axis=-1)
    o = jnp.einsum("bhqk,bhkd->bhqd", a, v).transpose(0, 2, 1, 3).reshape(B, Lq, D)
    return o @ wo.astype(f32) + bo


def _ref_decoder(p, x, memory, src_mask, tgt_mask, num_heads, num_layers):
    f32 = jnp.float32
    D = x.shape[-1]
    for l in range(num_layers):
        h = _ref_ln(x, p["ln_g"][3 * l], p["ln_b"][3 * l])
        wqkv, bqkv = p["self_wqkv"][l], p["self_bqkv"][l]
        x = x + _ref_mha(
            h, h, h, tgt_mask,
            wqkv[:, :D], bqkv[:, :D],
            wqkv[:, D:2 * D], bqkv[:, D:2 * D],
            wqkv[:, 2 * D:], bqkv[:, 2 * D:],
            p["self_wo"][l], p["self_bo"][l], num_heads,
        )
        h = _ref_ln(x, p["ln_g"][3 * l + 1], p["ln_b"][3 * l + 1])
        wkv, bkv = p["src_wkv"][l], p["src_bkv"][l]
        x = x + _ref_mha(
            h, memory, memory, src_mask,
            p["src_wq"][l], p["src_bq"][l],
            wkv[:, :D], bkv[:, :D], wkv[:, D:], bkv[:, D:],
            p["src_wo"][l], p["src_bo"][l], num_heads,
        )
        h = _ref_ln(x, p["ln_g"][3 * l + 2], p["ln_b"][3 * l + 2])
        ff = jnp.maximum(h @ p["w1"][l].astype(f32) + p["b1"][l], 0.0)
        x = x + ff @ p["w2"][l].astype(f32) + p["b2"][l]
    return _ref_ln(x, p["norm_g"], p["norm_b"])


# ----------------------------------- main -------------------------------------

if __name__ == "__main__":
    B, T, S = 2, 8, 8          # batch, target len, source (memory) len
    D, H, F = 32, 4, 64        # d_model, heads, d_ff
    NUM_LAYERS = 2

    key = jax.random.PRNGKey(0)
    key, kx, km, kp = jax.random.split(key, 4)
    x = jax.random.normal(kx, (B, T, D), jnp.float32)
    memory = jax.random.normal(km, (B, S, D), jnp.float32)

    # src_mask: padding mask, shape (B, 1, S); mask out last 2 source positions of batch 1.
    src_mask = jnp.ones((B, 1, S), jnp.float32)
    src_mask = src_mask.at[1, 0, S - 2:].set(0.0)
    # tgt_mask: causal (subsequent) mask — the kernel synthesizes it on-chip; the
    # reference uses the explicit version.
    tgt_mask = jnp.broadcast_to(
        jnp.tril(jnp.ones((T, T), jnp.float32))[None], (B, T, T)
    )

    params = init_params(kp, NUM_LAYERS, D, F)

    out = decoder_forward(params, x, memory, src_mask, num_heads=H)
    out = jax.block_until_ready(out)

    ref = _ref_decoder(params, x, memory, src_mask, tgt_mask, H, NUM_LAYERS)
    assert out.shape == (B, T, D)
    # bf16 MXU feed + approx reciprocals loosen the tolerance vs. the pure-f32 reference.
    assert jnp.allclose(out, ref, atol=5e-2, rtol=5e-2), float(jnp.max(jnp.abs(out - ref)))

    # TODO(synk): dropout layers are identity here (eval mode), matching the reference forward.
    print("KERNEL_OK")
</pallas_src>

<mosaic_0001>
module attributes {stable_mosaic.version = 11 : i64} {
  func.func @_decoder_kernel(%arg0: i32, %arg1: i32, %arg2: memref<1x8x32xf32, #tpu.memory_space<vmem>>, %arg3: memref<1x8x32xf32, #tpu.memory_space<vmem>>, %arg4: memref<1x1x8xf32, #tpu.memory_space<vmem>>, %arg5: memref<1x32x96xbf16, #tpu.memory_space<vmem>>, %arg6: memref<1x1x96xf32, #tpu.memory_space<vmem>>, %arg7: memref<1x32x32xbf16, #tpu.memory_space<vmem>>, %arg8: memref<1x1x32xf32, #tpu.memory_space<vmem>>, %arg9: memref<1x32x32xbf16, #tpu.memory_space<vmem>>, %arg10: memref<1x1x32xf32, #tpu.memory_space<vmem>>, %arg11: memref<1x32x64xbf16, #tpu.memory_space<vmem>>, %arg12: memref<1x1x64xf32, #tpu.memory_space<vmem>>, %arg13: memref<1x32x32xbf16, #tpu.memory_space<vmem>>, %arg14: memref<1x1x32xf32, #tpu.memory_space<vmem>>, %arg15: memref<1x32x64xbf16, #tpu.memory_space<vmem>>, %arg16: memref<1x1x64xf32, #tpu.memory_space<vmem>>, %arg17: memref<1x64x32xbf16, #tpu.memory_space<vmem>>, %arg18: memref<1x1x32xf32, #tpu.memory_space<vmem>>, %arg19: memref<3x1x32xf32, #tpu.memory_space<vmem>>, %arg20: memref<3x1x32xf32, #tpu.memory_space<vmem>>, %arg21: memref<1x32xf32, #tpu.memory_space<vmem>>, %arg22: memref<1x32xf32, #tpu.memory_space<vmem>>, %arg23: memref<1x8x32xf32, #tpu.memory_space<vmem>>, %arg24: memref<8x32xf32, #tpu.memory_space<vmem>>) attributes {dimension_semantics = [#tpu.dimension_semantics<parallel>, #tpu.dimension_semantics<arbitrary>], iteration_bounds = array<i64: 2, 2>, scalar_prefetch = 0 : i64, scratch_operands = 1 : i64, tpu.core_type = #tpu.core_type<tc>, window_params = [{transform_indices = @transform_0, window_bounds = array<i64: 1, 8, 32>}, {transform_indices = @transform_1, window_bounds = array<i64: 1, 8, 32>}, {transform_indices = @transform_2, window_bounds = array<i64: 1, 1, 8>}, {transform_indices = @transform_3, window_bounds = array<i64: 1, 32, 96>}, {transform_indices = @transform_4, window_bounds = array<i64: 1, 1, 96>}, {transform_indices = @transform_5, window_bounds = array<i64: 1, 32, 32>}, {transform_indices = @transform_6, window_bounds = array<i64: 1, 1, 32>}, {transform_indices = @transform_7, window_bounds = array<i64: 1, 32, 32>}, {transform_indices = @transform_8, window_bounds = array<i64: 1, 1, 32>}, {transform_indices = @transform_9, window_bounds = array<i64: 1, 32, 64>}, {transform_indices = @transform_10, window_bounds = array<i64: 1, 1, 64>}, {transform_indices = @transform_11, window_bounds = array<i64: 1, 32, 32>}, {transform_indices = @transform_12, window_bounds = array<i64: 1, 1, 32>}, {transform_indices = @transform_13, window_bounds = array<i64: 1, 32, 64>}, {transform_indices = @transform_14, window_bounds = array<i64: 1, 1, 64>}, {transform_indices = @transform_15, window_bounds = array<i64: 1, 64, 32>}, {transform_indices = @transform_16, window_bounds = array<i64: 1, 1, 32>}, {transform_indices = @transform_17, window_bounds = array<i64: 3, 1, 32>}, {transform_indices = @transform_18, window_bounds = array<i64: 3, 1, 32>}, {pipeline_mode = #tpu.pipeline_mode<synchronous>, transform_indices = @transform_19, window_bounds = array<i64: 1, 32>}, {pipeline_mode = #tpu.pipeline_mode<synchronous>, transform_indices = @transform_20, window_bounds = array<i64: 1, 32>}, {transform_indices = @transform_21, window_bounds = array<i64: 1, 8, 32>}]} {
    %c0_i32 = arith.constant 0 : i32
    %0 = arith.cmpi eq, %arg1, %c0_i32 : i32
    %1 = arith.extui %0 : i1 to i32
    %c0_i32_0 = arith.constant 0 : i32
    %2 = arith.cmpi ne, %1, %c0_i32_0 : i32
    scf.if %2 {
      %c0_121 = arith.constant 0 : index
      %c0_122 = arith.constant 0 : index
      %c0_123 = arith.constant 0 : index
      %270 = vector.load %arg2[%c0_121, %c0_122, %c0_123] : memref<1x8x32xf32, #tpu.memory_space<vmem>>, vector<1x8x32xf32>
      %271 = vector.shape_cast %270 : vector<1x8x32xf32> to vector<8x32xf32>
      %c0_124 = arith.constant 0 : index
      %c0_125 = arith.constant 0 : index
      %272 = vector.load %arg24[%c0_124, %c0_125] : memref<8x32xf32, #tpu.memory_space<vmem>>, vector<8x32xf32>
      tpu.vector_store %arg24[%c0_124, %c0_125], %271 {strides = array<i32>} : memref<8x32xf32, #tpu.memory_space<vmem>>, vector<8x32xf32>,
    } else {
    }
    %c0 = arith.constant 0 : index
    %c0_1 = arith.constant 0 : index
    %3 = vector.load %arg24[%c0, %c0_1] : memref<8x32xf32, #tpu.memory_space<vmem>>, vector<8x32xf32>
    %c0_2 = arith.constant 0 : index
    %c0_3 = arith.constant 0 : index
    %c0_4 = arith.constant 0 : index
    %4 = vector.load %arg3[%c0_2, %c0_3, %c0_4] : memref<1x8x32xf32, #tpu.memory_space<vmem>>, vector<1x8x32xf32>
    %5 = vector.shape_cast %4 : vector<1x8x32xf32> to vector<8x32xf32>
    %c0_5 = arith.constant 0 : index
    %c0_6 = arith.constant 0 : index
    %c0_7 = arith.constant 0 : index
    %6 = vector.load %arg4[%c0_5, %c0_6, %c0_7] : memref<1x1x8xf32, #tpu.memory_space<vmem>>, vector<1x1x8xf32>
    %7 = vector.shape_cast %6 : vector<1x1x8xf32> to vector<1x8xf32>
    %cst = arith.constant 5.000000e-01 : f32
    %8 = vector.broadcast %cst : f32 to vector<1x8xf32>
    %9 = arith.cmpf ogt, %7, %8 : vector<1x8xf32>
    %10 = tpu.iota {dimensions = array<i32: 0>} : vector<32x8xi32>
    %11 = tpu.iota {dimensions = array<i32: 1>} : vector<32x8xi32>
    %c8_i32 = arith.constant 8 : i32
    %c0_i32_8 = arith.constant 0 : i32
    %12 = arith.cmpi eq, %c8_i32, %c0_i32_8 : i32
    %c1_i32 = arith.constant 1 : i32
    %13 = arith.select %12, %c1_i32, %c8_i32 : i32
    %14 = vector.broadcast %13 : i32 to vector<32x8xi32>
    %15 = arith.remsi %10, %14 : vector<32x8xi32>
    %c0_i32_9 = arith.constant 0 : i32
    %16 = vector.broadcast %c0_i32_9 : i32 to vector<32x8xi32>
    %17 = arith.cmpi ne, %15, %16 : vector<32x8xi32>
    %c0_i32_10 = arith.constant 0 : i32
    %18 = vector.broadcast %c0_i32_10 : i32 to vector<32x8xi32>
    %19 = arith.cmpi slt, %15, %18 : vector<32x8xi32>
    %c0_i32_11 = arith.constant 0 : i32
    %20 = arith.cmpi slt, %13, %c0_i32_11 : i32
    %21 = vector.broadcast %20 : i1 to vector<32x8xi1>
    %22 = vector.broadcast %21 : vector<32x8xi1> to vector<32x8xi1>
    %23 = arith.xori %19, %22 : vector<32x8xi1>
    %24 = arith.andi %23, %17 : vector<32x8xi1>
    %25 = vector.broadcast %13 : i32 to vector<32x8xi32>
    %26 = arith.addi %15, %25 : vector<32x8xi32>
    %27 = arith.select %24, %26, %15 : vector<32x8xi1>, vector<32x8xi32>
    %28 = arith.cmpi sge, %27, %11 : vector<32x8xi32>
    %c0_12 = arith.constant 0 : index
    %c0_13 = arith.constant 0 : index
    %c0_14 = arith.constant 0 : index
    %29 = vector.load %arg19[%c0_12, %c0_13, %c0_14] : memref<3x1x32xf32, #tpu.memory_space<vmem>>, vector<1x1x32xf32>
    %30 = vector.shape_cast %29 : vector<1x1x32xf32> to vector<1x32xf32>
    %c0_15 = arith.constant 0 : index
    %c0_16 = arith.constant 0 : index
    %c0_17 = arith.constant 0 : index
    %31 = vector.load %arg20[%c0_15, %c0_16, %c0_17] : memref<3x1x32xf32, #tpu.memory_space<vmem>>, vector<1x1x32xf32>
    %32 = vector.shape_cast %31 : vector<1x1x32xf32> to vector<1x32xf32>
    %cst_18 = arith.constant dense<0.000000e+00> : vector<8xf32>
    %33 = vector.multi_reduction <add>, %3, %cst_18 [1] : vector<8x32xf32> to vector<8xf32>
    %34 = vector.shape_cast %33 : vector<8xf32> to vector<8x1xf32>
    %cst_19 = arith.constant 3.200000e+01 : f32
    %35 = vector.broadcast %cst_19 : f32 to vector<8x1xf32>
    %36 = arith.divf %34, %35 : vector<8x1xf32>
    %37 = vector.broadcast %36 : vector<8x1xf32> to vector<8x32xf32>
    %38 = arith.subf %3, %37 : vector<8x32xf32>
    %39 = arith.mulf %38, %38 : vector<8x32xf32>
    %cst_20 = arith.constant dense<0.000000e+00> : vector<8xf32>
    %40 = vector.multi_reduction <add>, %39, %cst_20 [1] : vector<8x32xf32> to vector<8xf32>
    %41 = vector.shape_cast %40 : vector<8xf32> to vector<8x1xf32>
    %cst_21 = arith.constant 3.100000e+01 : f32
    %42 = vector.broadcast %cst_21 : f32 to vector<8x1xf32>
    %43 = arith.divf %41, %42 : vector<8x1xf32>
    %44 = math.sqrt %43 : vector<8x1xf32>
    %cst_22 = arith.constant 9.99999997E-7 : f32
    %45 = vector.broadcast %cst_22 : f32 to vector<8x1xf32>
    %46 = arith.addf %44, %45 : vector<8x1xf32>
    %47 = tpu.reciprocal %46 {approx = true} : vector<8x1xf32> -> vector<8x1xf32>
    %48 = vector.broadcast %36 : vector<8x1xf32> to vector<8x32xf32>
    %49 = arith.subf %3, %48 : vector<8x32xf32>
    %50 = vector.broadcast %30 : vector<1x32xf32> to vector<8x32xf32>
    %51 = arith.mulf %50, %49 : vector<8x32xf32>
    %52 = vector.broadcast %47 : vector<8x1xf32> to vector<8x32xf32>
    %53 = arith.mulf %51, %52 : vector<8x32xf32>
    %54 = vector.broadcast %32 : vector<1x32xf32> to vector<8x32xf32>
    %55 = arith.addf %53, %54 : vector<8x32xf32>
    %56 = arith.truncf %55 : vector<8x32xf32> to vector<8x32xbf16>
    %c0_23 = arith.constant 0 : index
    %c0_24 = arith.constant 0 : index
    %c0_25 = arith.constant 0 : index
    %57 = vector.load %arg5[%c0_23, %c0_24, %c0_25] : memref<1x32x96xbf16, #tpu.memory_space<vmem>>, vector<1x32x96xbf16>
    %58 = vector.shape_cast %57 : vector<1x32x96xbf16> to vector<32x96xbf16>
    %cst_26 = arith.constant dense<0.000000e+00> : vector<8x96xf32>
    %59 = tpu.matmul %56, %58, %cst_26 {dimension_numbers = #tpu.dot_dimension_numbers<[1], [0], [0], [1], [0, 0, 1, 1], [], []>} : vector<8x32xbf16>, vector<32x96xbf16>, vector<8x96xf32> -> vector<8x96xf32>
    %c0_27 = arith.constant 0 : index
    %c0_28 = arith.constant 0 : index
    %c0_29 = arith.constant 0 : index
    %60 = vector.load %arg6[%c0_27, %c0_28, %c0_29] : memref<1x1x96xf32, #tpu.memory_space<vmem>>, vector<1x1x96xf32>
    %61 = vector.shape_cast %60 : vector<1x1x96xf32> to vector<1x96xf32>
    %62 = vector.broadcast %61 : vector<1x96xf32> to vector<8x96xf32>
    %63 = arith.addf %59, %62 : vector<8x96xf32>
    %64 = vector.extract_strided_slice %63 {offsets = [0, 0], sizes = [8, 32], strides = [1, 1]} : vector<8x96xf32> to vector<8x32xf32>
    %65 = vector.extract_strided_slice %63 {offsets = [0, 32], sizes = [8, 32], strides = [1, 1]} : vector<8x96xf32> to vector<8x32xf32>
    %66 = vector.extract_strided_slice %63 {offsets = [0, 64], sizes = [8, 32], strides = [1, 1]} : vector<8x96xf32> to vector<8x32xf32>
    %67 = arith.truncf %64 : vector<8x32xf32> to vector<8x32xbf16>
    %68 = arith.truncf %65 : vector<8x32xf32> to vector<8x32xbf16>
    %69 = arith.truncf %66 : vector<8x32xf32> to vector<8x32xbf16>
    %70 = vector.extract_strided_slice %67 {offsets = [0, 0], sizes = [8, 8], strides = [1, 1]} : vector<8x32xbf16> to vector<8x8xbf16>
    %71 = vector.extract_strided_slice %68 {offsets = [0, 0], sizes = [8, 8], strides = [1, 1]} : vector<8x32xbf16> to vector<8x8xbf16>
    %cst_30 = arith.constant dense<0.000000e+00> : vector<8x8xf32>
    %72 = tpu.matmul %70, %71, %cst_30 {dimension_numbers = #tpu.dot_dimension_numbers<[1], [1], [0], [0], [0, 0, 1, 0], [], []>} : vector<8x8xbf16>, vector<8x8xbf16>, vector<8x8xf32> -> vector<8x8xf32>
    %73 = vector.extract_strided_slice %67 {offsets = [0, 8], sizes = [8, 8], strides = [1, 1]} : vector<8x32xbf16> to vector<8x8xbf16>
    %74 = vector.extract_strided_slice %68 {offsets = [0, 8], sizes = [8, 8], strides = [1, 1]} : vector<8x32xbf16> to vector<8x8xbf16>
    %cst_31 = arith.constant dense<0.000000e+00> : vector<8x8xf32>
    %75 = tpu.matmul %73, %74, %cst_31 {dimension_numbers = #tpu.dot_dimension_numbers<[1], [1], [0], [0], [0, 0, 1, 0], [], []>} : vector<8x8xbf16>, vector<8x8xbf16>, vector<8x8xf32> -> vector<8x8xf32>
    %76 = vector.extract_strided_slice %67 {offsets = [0, 16], sizes = [8, 8], strides = [1, 1]} : vector<8x32xbf16> to vector<8x8xbf16>
    %77 = vector.extract_strided_slice %68 {offsets = [0, 16], sizes = [8, 8], strides = [1, 1]} : vector<8x32xbf16> to vector<8x8xbf16>
    %cst_32 = arith.constant dense<0.000000e+00> : vector<8x8xf32>
    %78 = tpu.matmul %76, %77, %cst_32 {dimension_numbers = #tpu.dot_dimension_numbers<[1], [1], [0], [0], [0, 0, 1, 0], [], []>} : vector<8x8xbf16>, vector<8x8xbf16>, vector<8x8xf32> -> vector<8x8xf32>
    %79 = vector.extract_strided_slice %67 {offsets = [0, 24], sizes = [8, 8], strides = [1, 1]} : vector<8x32xbf16> to vector<8x8xbf16>
    %80 = vector.extract_strided_slice %68 {offsets = [0, 24], sizes = [8, 8], strides = [1, 1]} : vector<8x32xbf16> to vector<8x8xbf16>
    %cst_33 = arith.constant dense<0.000000e+00> : vector<8x8xf32>
    %81 = tpu.matmul %79, %80, %cst_33 {dimension_numbers = #tpu.dot_dimension_numbers<[1], [1], [0], [0], [0, 0, 1, 0], [], []>} : vector<8x8xbf16>, vector<8x8xbf16>, vector<8x8xf32> -> vector<8x8xf32>
    %82 = tpu.concatenate %72, %75, %78, %81 in 0 : vector<8x8xf32>, vector<8x8xf32>, vector<8x8xf32>, vector<8x8xf32> -> vector<32x8xf32>
    %cst_34 = arith.constant 0.353553385 : f32
    %83 = vector.broadcast %cst_34 : f32 to vector<32x8xf32>
    %84 = arith.mulf %82, %83 : vector<32x8xf32>
    %cst_35 = arith.constant -1.000000e+09 : f32
    %85 = vector.broadcast %cst_35 : f32 to vector<32x8xf32>
    %86 = arith.select %28, %84, %85 : vector<32x8xi1>, vector<32x8xf32>
    %cst_36 = arith.constant dense<0xFF800000> : vector<32xf32>
    %87 = vector.multi_reduction <maximumf>, %86, %cst_36 [1] : vector<32x8xf32> to vector<32xf32>
    %88 = vector.shape_cast %87 : vector<32xf32> to vector<32x1xf32>
    %89 = vector.broadcast %88 : vector<32x1xf32> to vector<32x8xf32>
    %90 = arith.subf %86, %89 : vector<32x8xf32>
    %91 = math.exp %90 : vector<32x8xf32>
    %cst_37 = arith.constant dense<0.000000e+00> : vector<32xf32>
    %92 = vector.multi_reduction <add>, %91, %cst_37 [1] : vector<32x8xf32> to vector<32xf32>
    %93 = vector.shape_cast %92 : vector<32xf32> to vector<32x1xf32>
    %94 = tpu.reciprocal %93 {approx = true} : vector<32x1xf32> -> vector<32x1xf32>
    %95 = vector.broadcast %94 : vector<32x1xf32> to vector<32x8xf32>
    %96 = arith.mulf %91, %95 : vector<32x8xf32>
    %97 = arith.truncf %96 : vector<32x8xf32> to vector<32x8xbf16>
    %98 = vector.extract_strided_slice %97 {offsets = [0, 0], sizes = [8, 8], strides = [1, 1]} : vector<32x8xbf16> to vector<8x8xbf16>
    %99 = vector.extract_strided_slice %69 {offsets = [0, 0], sizes = [8, 8], strides = [1, 1]} : vector<8x32xbf16> to vector<8x8xbf16>
    %cst_38 = arith.constant dense<0.000000e+00> : vector<8x8xf32>
    %100 = tpu.matmul %98, %99, %cst_38 {dimension_numbers = #tpu.dot_dimension_numbers<[1], [0], [0], [1], [0, 0, 1, 1], [], []>} : vector<8x8xbf16>, vector<8x8xbf16>, vector<8x8xf32> -> vector<8x8xf32>
    %101 = vector.extract_strided_slice %97 {offsets = [8, 0], sizes = [8, 8], strides = [1, 1]} : vector<32x8xbf16> to vector<8x8xbf16>
    %102 = vector.extract_strided_slice %69 {offsets = [0, 8], sizes = [8, 8], strides = [1, 1]} : vector<8x32xbf16> to vector<8x8xbf16>
    %cst_39 = arith.constant dense<0.000000e+00> : vector<8x8xf32>
    %103 = tpu.matmul %101, %102, %cst_39 {dimension_numbers = #tpu.dot_dimension_numbers<[1], [0], [0], [1], [0, 0, 1, 1], [], []>} : vector<8x8xbf16>, vector<8x8xbf16>, vector<8x8xf32> -> vector<8x8xf32>
    %104 = vector.extract_strided_slice %97 {offsets = [16, 0], sizes = [8, 8], strides = [1, 1]} : vector<32x8xbf16> to vector<8x8xbf16>
    %105 = vector.extract_strided_slice %69 {offsets = [0, 16], sizes = [8, 8], strides = [1, 1]} : vector<8x32xbf16> to vector<8x8xbf16>
    %cst_40 = arith.constant dense<0.000000e+00> : vector<8x8xf32>
    %106 = tpu.matmul %104, %105, %cst_40 {dimension_numbers = #tpu.dot_dimension_numbers<[1], [0], [0], [1], [0, 0, 1, 1], [], []>} : vector<8x8xbf16>, vector<8x8xbf16>, vector<8x8xf32> -> vector<8x8xf32>
    %107 = vector.extract_strided_slice %97 {offsets = [24, 0], sizes = [8, 8], strides = [1, 1]} : vector<32x8xbf16> to vector<8x8xbf16>
    %108 = vector.extract_strided_slice %69 {offsets = [0, 24], sizes = [8, 8], strides = [1, 1]} : vector<8x32xbf16> to vector<8x8xbf16>
    %cst_41 = arith.constant dense<0.000000e+00> : vector<8x8xf32>
    %109 = tpu.matmul %107, %108, %cst_41 {dimension_numbers = #tpu.dot_dimension_numbers<[1], [0], [0], [1], [0, 0, 1, 1], [], []>} : vector<8x8xbf16>, vector<8x8xbf16>, vector<8x8xf32> -> vector<8x8xf32>
    %110 = tpu.concatenate %100, %103, %106, %109 in 1 : vector<8x8xf32>, vector<8x8xf32>, vector<8x8xf32>, vector<8x8xf32> -> vector<8x32xf32>
    %111 = arith.truncf %110 : vector<8x32xf32> to vector<8x32xbf16>
    %c0_42 = arith.constant 0 : index
    %c0_43 = arith.constant 0 : index
    %c0_44 = arith.constant 0 : index
    %112 = vector.load %arg7[%c0_42, %c0_43, %c0_44] : memref<1x32x32xbf16, #tpu.memory_space<vmem>>, vector<1x32x32xbf16>
    %113 = vector.shape_cast %112 : vector<1x32x32xbf16> to vector<32x32xbf16>
    %cst_45 = arith.constant dense<0.000000e+00> : vector<8x32xf32>
    %114 = tpu.matmul %111, %113, %cst_45 {dimension_numbers = #tpu.dot_dimension_numbers<[1], [0], [0], [1], [0, 0, 1, 1], [], []>} : vector<8x32xbf16>, vector<32x32xbf16>, vector<8x32xf32> -> vector<8x32xf32>
    %c0_46 = arith.constant 0 : index
    %c0_47 = arith.constant 0 : index
    %c0_48 = arith.constant 0 : index
    %115 = vector.load %arg8[%c0_46, %c0_47, %c0_48] : memref<1x1x32xf32, #tpu.memory_space<vmem>>, vector<1x1x32xf32>
    %116 = vector.shape_cast %115 : vector<1x1x32xf32> to vector<1x32xf32>
    %117 = vector.broadcast %116 : vector<1x32xf32> to vector<8x32xf32>
    %118 = arith.addf %114, %117 : vector<8x32xf32>
    %119 = arith.addf %3, %118 : vector<8x32xf32>
    %c1 = arith.constant 1 : index
    %c0_49 = arith.constant 0 : index
    %c0_50 = arith.constant 0 : index
    %120 = vector.load %arg19[%c1, %c0_49, %c0_50] : memref<3x1x32xf32, #tpu.memory_space<vmem>>, vector<1x1x32xf32>
    %121 = vector.shape_cast %120 : vector<1x1x32xf32> to vector<1x32xf32>
    %c1_51 = arith.constant 1 : index
    %c0_52 = arith.constant 0 : index
    %c0_53 = arith.constant 0 : index
    %122 = vector.load %arg20[%c1_51, %c0_52, %c0_53] : memref<3x1x32xf32, #tpu.memory_space<vmem>>, vector<1x1x32xf32>
    %123 = vector.shape_cast %122 : vector<1x1x32xf32> to vector<1x32xf32>
    %cst_54 = arith.constant dense<0.000000e+00> : vector<8xf32>
    %124 = vector.multi_reduction <add>, %119, %cst_54 [1] : vector<8x32xf32> to vector<8xf32>
    %125 = vector.shape_cast %124 : vector<8xf32> to vector<8x1xf32>
    %cst_55 = arith.constant 3.200000e+01 : f32
    %126 = vector.broadcast %cst_55 : f32 to vector<8x1xf32>
    %127 = arith.divf %125, %126 : vector<8x1xf32>
    %128 = vector.broadcast %127 : vector<8x1xf32> to vector<8x32xf32>
    %129 = arith.subf %119, %128 : vector<8x32xf32>
    %130 = arith.mulf %129, %129 : vector<8x32xf32>
    %cst_56 = arith.constant dense<0.000000e+00> : vector<8xf32>
    %131 = vector.multi_reduction <add>, %130, %cst_56 [1] : vector<8x32xf32> to vector<8xf32>
    %132 = vector.shape_cast %131 : vector<8xf32> to vector<8x1xf32>
    %cst_57 = arith.constant 3.100000e+01 : f32
    %133 = vector.broadcast %cst_57 : f32 to vector<8x1xf32>
    %134 = arith.divf %132, %133 : vector<8x1xf32>
    %135 = math.sqrt %134 : vector<8x1xf32>
    %cst_58 = arith.constant 9.99999997E-7 : f32
    %136 = vector.broadcast %cst_58 : f32 to vector<8x1xf32>
    %137 = arith.addf %135, %136 : vector<8x1xf32>
    %138 = tpu.reciprocal %137 {approx = true} : vector<8x1xf32> -> vector<8x1xf32>
    %139 = vector.broadcast %127 : vector<8x1xf32> to vector<8x32xf32>
    %140 = arith.subf %119, %139 : vector<8x32xf32>
    %141 = vector.broadcast %121 : vector<1x32xf32> to vector<8x32xf32>
    %142 = arith.mulf %141, %140 : vector<8x32xf32>
    %143 = vector.broadcast %138 : vector<8x1xf32> to vector<8x32xf32>
    %144 = arith.mulf %142, %143 : vector<8x32xf32>
    %145 = vector.broadcast %123 : vector<1x32xf32> to vector<8x32xf32>
    %146 = arith.addf %144, %145 : vector<8x32xf32>
    %147 = arith.truncf %146 : vector<8x32xf32> to vector<8x32xbf16>
    %c0_59 = arith.constant 0 : index
    %c0_60 = arith.constant 0 : index
    %c0_61 = arith.constant 0 : index
    %148 = vector.load %arg9[%c0_59, %c0_60, %c0_61] : memref<1x32x32xbf16, #tpu.memory_space<vmem>>, vector<1x32x32xbf16>
    %149 = vector.shape_cast %148 : vector<1x32x32xbf16> to vector<32x32xbf16>
    %cst_62 = arith.constant dense<0.000000e+00> : vector<8x32xf32>
    %150 = tpu.matmul %147, %149, %cst_62 {dimension_numbers = #tpu.dot_dimension_numbers<[1], [0], [0], [1], [0, 0, 1, 1], [], []>} : vector<8x32xbf16>, vector<32x32xbf16>, vector<8x32xf32> -> vector<8x32xf32>
    %c0_63 = arith.constant 0 : index
    %c0_64 = arith.constant 0 : index
    %c0_65 = arith.constant 0 : index
    %151 = vector.load %arg10[%c0_63, %c0_64, %c0_65] : memref<1x1x32xf32, #tpu.memory_space<vmem>>, vector<1x1x32xf32>
    %152 = vector.shape_cast %151 : vector<1x1x32xf32> to vector<1x32xf32>
    %153 = vector.broadcast %152 : vector<1x32xf32> to vector<8x32xf32>
    %154 = arith.addf %150, %153 : vector<8x32xf32>
    %155 = arith.truncf %5 : vector<8x32xf32> to vector<8x32xbf16>
    %c0_66 = arith.constant 0 : index
    %c0_67 = arith.constant 0 : index
    %c0_68 = arith.constant 0 : index
    %156 = vector.load %arg11[%c0_66, %c0_67, %c0_68] : memref<1x32x64xbf16, #tpu.memory_space<vmem>>, vector<1x32x64xbf16>
    %157 = vector.shape_cast %156 : vector<1x32x64xbf16> to vector<32x64xbf16>
    %cst_69 = arith.constant dense<0.000000e+00> : vector<8x64xf32>
    %158 = tpu.matmul %155, %157, %cst_69 {dimension_numbers = #tpu.dot_dimension_numbers<[1], [0], [0], [1], [0, 0, 1, 1], [], []>} : vector<8x32xbf16>, vector<32x64xbf16>, vector<8x64xf32> -> vector<8x64xf32>
    %c0_70 = arith.constant 0 : index
    %c0_71 = arith.constant 0 : index
    %c0_72 = arith.constant 0 : index
    %159 = vector.load %arg12[%c0_70, %c0_71, %c0_72] : memref<1x1x64xf32, #tpu.memory_space<vmem>>, vector<1x1x64xf32>
    %160 = vector.shape_cast %159 : vector<1x1x64xf32> to vector<1x64xf32>
    %161 = vector.broadcast %160 : vector<1x64xf32> to vector<8x64xf32>
    %162 = arith.addf %158, %161 : vector<8x64xf32>
    %163 = vector.extract_strided_slice %162 {offsets = [0, 0], sizes = [8, 32], strides = [1, 1]} : vector<8x64xf32> to vector<8x32xf32>
    %164 = vector.extract_strided_slice %162 {offsets = [0, 32], sizes = [8, 32], strides = [1, 1]} : vector<8x64xf32> to vector<8x32xf32>
    %165 = arith.truncf %154 : vector<8x32xf32> to vector<8x32xbf16>
    %166 = arith.truncf %163 : vector<8x32xf32> to vector<8x32xbf16>
    %167 = arith.truncf %164 : vector<8x32xf32> to vector<8x32xbf16>
    %168 = vector.extract_strided_slice %165 {offsets = [0, 0], sizes = [8, 8], strides = [1, 1]} : vector<8x32xbf16> to vector<8x8xbf16>
    %169 = vector.extract_strided_slice %166 {offsets = [0, 0], sizes = [8, 8], strides = [1, 1]} : vector<8x32xbf16> to vector<8x8xbf16>
    %cst_73 = arith.constant dense<0.000000e+00> : vector<8x8xf32>
    %170 = tpu.matmul %168, %169, %cst_73 {dimension_numbers = #tpu.dot_dimension_numbers<[1], [1], [0], [0], [0, 0, 1, 0], [], []>} : vector<8x8xbf16>, vector<8x8xbf16>, vector<8x8xf32> -> vector<8x8xf32>
    %171 = vector.extract_strided_slice %165 {offsets = [0, 8], sizes = [8, 8], strides = [1, 1]} : vector<8x32xbf16> to vector<8x8xbf16>
    %172 = vector.extract_strided_slice %166 {offsets = [0, 8], sizes = [8, 8], strides = [1, 1]} : vector<8x32xbf16> to vector<8x8xbf16>
    %cst_74 = arith.constant dense<0.000000e+00> : vector<8x8xf32>
    %173 = tpu.matmul %171, %172, %cst_74 {dimension_numbers = #tpu.dot_dimension_numbers<[1], [1], [0], [0], [0, 0, 1, 0], [], []>} : vector<8x8xbf16>, vector<8x8xbf16>, vector<8x8xf32> -> vector<8x8xf32>
    %174 = vector.extract_strided_slice %165 {offsets = [0, 16], sizes = [8, 8], strides = [1, 1]} : vector<8x32xbf16> to vector<8x8xbf16>
    %175 = vector.extract_strided_slice %166 {offsets = [0, 16], sizes = [8, 8], strides = [1, 1]} : vector<8x32xbf16> to vector<8x8xbf16>
    %cst_75 = arith.constant dense<0.000000e+00> : vector<8x8xf32>
    %176 = tpu.matmul %174, %175, %cst_75 {dimension_numbers = #tpu.dot_dimension_numbers<[1], [1], [0], [0], [0, 0, 1, 0], [], []>} : vector<8x8xbf16>, vector<8x8xbf16>, vector<8x8xf32> -> vector<8x8xf32>
    %177 = vector.extract_strided_slice %165 {offsets = [0, 24], sizes = [8, 8], strides = [1, 1]} : vector<8x32xbf16> to vector<8x8xbf16>
    %178 = vector.extract_strided_slice %166 {offsets = [0, 24], sizes = [8, 8], strides = [1, 1]} : vector<8x32xbf16> to vector<8x8xbf16>
    %cst_76 = arith.constant dense<0.000000e+00> : vector<8x8xf32>
    %179 = tpu.matmul %177, %178, %cst_76 {dimension_numbers = #tpu.dot_dimension_numbers<[1], [1], [0], [0], [0, 0, 1, 0], [], []>} : vector<8x8xbf16>, vector<8x8xbf16>, vector<8x8xf32> -> vector<8x8xf32>
    %180 = tpu.concatenate %170, %173, %176, %179 in 0 : vector<8x8xf32>, vector<8x8xf32>, vector<8x8xf32>, vector<8x8xf32> -> vector<32x8xf32>
    %cst_77 = arith.constant 0.353553385 : f32
    %181 = vector.broadcast %cst_77 : f32 to vector<32x8xf32>
    %182 = arith.mulf %180, %181 : vector<32x8xf32>
    %cst_78 = arith.constant -1.000000e+09 : f32
    %183 = vector.shape_cast %9 : vector<1x8xi1> to vector<1x8xi1>
    %184 = vector.broadcast %183 : vector<1x8xi1> to vector<32x8xi1>
    %185 = vector.broadcast %cst_78 : f32 to vector<32x8xf32>
    %186 = arith.select %184, %182, %185 : vector<32x8xi1>, vector<32x8xf32>
    %cst_79 = arith.constant dense<0xFF800000> : vector<32xf32>
    %187 = vector.multi_reduction <maximumf>, %186, %cst_79 [1] : vector<32x8xf32> to vector<32xf32>
    %188 = vector.shape_cast %187 : vector<32xf32> to vector<32x1xf32>
    %189 = vector.broadcast %188 : vector<32x1xf32> to vector<32x8xf32>
    %190 = arith.subf %186, %189 : vector<32x8xf32>
    %191 = math.exp %190 : vector<32x8xf32>
    %cst_80 = arith.constant dense<0.000000e+00> : vector<32xf32>
    %192 = vector.multi_reduction <add>, %191, %cst_80 [1] : vector<32x8xf32> to vector<32xf32>
    %193 = vector.shape_cast %192 : vector<32xf32> to vector<32x1xf32>
    %194 = tpu.reciprocal %193 {approx = true} : vector<32x1xf32> -> vector<32x1xf32>
    %195 = vector.broadcast %194 : vector<32x1xf32> to vector<32x8xf32>
    %196 = arith.mulf %191, %195 : vector<32x8xf32>
    %197 = arith.truncf %196 : vector<32x8xf32> to vector<32x8xbf16>
    %198 = vector.extract_strided_slice %197 {offsets = [0, 0], sizes = [8, 8], strides = [1, 1]} : vector<32x8xbf16> to vector<8x8xbf16>
    %199 = vector.extract_strided_slice %167 {offsets = [0, 0], sizes = [8, 8], strides = [1, 1]} : vector<8x32xbf16> to vector<8x8xbf16>
    %cst_81 = arith.constant dense<0.000000e+00> : vector<8x8xf32>
    %200 = tpu.matmul %198, %199, %cst_81 {dimension_numbers = #tpu.dot_dimension_numbers<[1], [0], [0], [1], [0, 0, 1, 1], [], []>} : vector<8x8xbf16>, vector<8x8xbf16>, vector<8x8xf32> -> vector<8x8xf32>
    %201 = vector.extract_strided_slice %197 {offsets = [8, 0], sizes = [8, 8], strides = [1, 1]} : vector<32x8xbf16> to vector<8x8xbf16>
    %202 = vector.extract_strided_slice %167 {offsets = [0, 8], sizes = [8, 8], strides = [1, 1]} : vector<8x32xbf16> to vector<8x8xbf16>
    %cst_82 = arith.constant dense<0.000000e+00> : vector<8x8xf32>
    %203 = tpu.matmul %201, %202, %cst_82 {dimension_numbers = #tpu.dot_dimension_numbers<[1], [0], [0], [1], [0, 0, 1, 1], [], []>} : vector<8x8xbf16>, vector<8x8xbf16>, vector<8x8xf32> -> vector<8x8xf32>
    %204 = vector.extract_strided_slice %197 {offsets = [16, 0], sizes = [8, 8], strides = [1, 1]} : vector<32x8xbf16> to vector<8x8xbf16>
    %205 = vector.extract_strided_slice %167 {offsets = [0, 16], sizes = [8, 8], strides = [1, 1]} : vector<8x32xbf16> to vector<8x8xbf16>
    %cst_83 = arith.constant dense<0.000000e+00> : vector<8x8xf32>
    %206 = tpu.matmul %204, %205, %cst_83 {dimension_numbers = #tpu.dot_dimension_numbers<[1], [0], [0], [1], [0, 0, 1, 1], [], []>} : vector<8x8xbf16>, vector<8x8xbf16>, vector<8x8xf32> -> vector<8x8xf32>
    %207 = vector.extract_strided_slice %197 {offsets = [24, 0], sizes = [8, 8], strides = [1, 1]} : vector<32x8xbf16> to vector<8x8xbf16>
    %208 = vector.extract_strided_slice %167 {offsets = [0, 24], sizes = [8, 8], strides = [1, 1]} : vector<8x32xbf16> to vector<8x8xbf16>
    %cst_84 = arith.constant dense<0.000000e+00> : vector<8x8xf32>
    %209 = tpu.matmul %207, %208, %cst_84 {dimension_numbers = #tpu.dot_dimension_numbers<[1], [0], [0], [1], [0, 0, 1, 1], [], []>} : vector<8x8xbf16>, vector<8x8xbf16>, vector<8x8xf32> -> vector<8x8xf32>
    %210 = tpu.concatenate %200, %203, %206, %209 in 1 : vector<8x8xf32>, vector<8x8xf32>, vector<8x8xf32>, vector<8x8xf32> -> vector<8x32xf32>
    %211 = arith.truncf %210 : vector<8x32xf32> to vector<8x32xbf16>
    %c0_85 = arith.constant 0 : index
    %c0_86 = arith.constant 0 : index
    %c0_87 = arith.constant 0 : index
    %212 = vector.load %arg13[%c0_85, %c0_86, %c0_87] : memref<1x32x32xbf16, #tpu.memory_space<vmem>>, vector<1x32x32xbf16>
    %213 = vector.shape_cast %212 : vector<1x32x32xbf16> to vector<32x32xbf16>
    %cst_88 = arith.constant dense<0.000000e+00> : vector<8x32xf32>
    %214 = tpu.matmul %211, %213, %cst_88 {dimension_numbers = #tpu.dot_dimension_numbers<[1], [0], [0], [1], [0, 0, 1, 1], [], []>} : vector<8x32xbf16>, vector<32x32xbf16>, vector<8x32xf32> -> vector<8x32xf32>
    %c0_89 = arith.constant 0 : index
    %c0_90 = arith.constant 0 : index
    %c0_91 = arith.constant 0 : index
    %215 = vector.load %arg14[%c0_89, %c0_90, %c0_91] : memref<1x1x32xf32, #tpu.memory_space<vmem>>, vector<1x1x32xf32>
    %216 = vector.shape_cast %215 : vector<1x1x32xf32> to vector<1x32xf32>
    %217 = vector.broadcast %216 : vector<1x32xf32> to vector<8x32xf32>
    %218 = arith.addf %214, %217 : vector<8x32xf32>
    %219 = arith.addf %119, %218 : vector<8x32xf32>
    %c2 = arith.constant 2 : index
    %c0_92 = arith.constant 0 : index
    %c0_93 = arith.constant 0 : index
    %220 = vector.load %arg19[%c2, %c0_92, %c0_93] : memref<3x1x32xf32, #tpu.memory_space<vmem>>, vector<1x1x32xf32>
    %221 = vector.shape_cast %220 : vector<1x1x32xf32> to vector<1x32xf32>
    %c2_94 = arith.constant 2 : index
    %c0_95 = arith.constant 0 : index
    %c0_96 = arith.constant 0 : index
    %222 = vector.load %arg20[%c2_94, %c0_95, %c0_96] : memref<3x1x32xf32, #tpu.memory_space<vmem>>, vector<1x1x32xf32>
    %223 = vector.shape_cast %222 : vector<1x1x32xf32> to vector<1x32xf32>
    %cst_97 = arith.constant dense<0.000000e+00> : vector<8xf32>
    %224 = vector.multi_reduction <add>, %219, %cst_97 [1] : vector<8x32xf32> to vector<8xf32>
    %225 = vector.shape_cast %224 : vector<8xf32> to vector<8x1xf32>
    %cst_98 = arith.constant 3.200000e+01 : f32
    %226 = vector.broadcast %cst_98 : f32 to vector<8x1xf32>
    %227 = arith.divf %225, %226 : vector<8x1xf32>
    %228 = vector.broadcast %227 : vector<8x1xf32> to vector<8x32xf32>
    %229 = arith.subf %219, %228 : vector<8x32xf32>
    %230 = arith.mulf %229, %229 : vector<8x32xf32>
    %cst_99 = arith.constant dense<0.000000e+00> : vector<8xf32>
    %231 = vector.multi_reduction <add>, %230, %cst_99 [1] : vector<8x32xf32> to vector<8xf32>
    %232 = vector.shape_cast %231 : vector<8xf32> to vector<8x1xf32>
    %cst_100 = arith.constant 3.100000e+01 : f32
    %233 = vector.broadcast %cst_100 : f32 to vector<8x1xf32>
    %234 = arith.divf %232, %233 : vector<8x1xf32>
    %235 = math.sqrt %234 : vector<8x1xf32>
    %cst_101 = arith.constant 9.99999997E-7 : f32
    %236 = vector.broadcast %cst_101 : f32 to vector<8x1xf32>
    %237 = arith.addf %235, %236 : vector<8x1xf32>
    %238 = tpu.reciprocal %237 {approx = true} : vector<8x1xf32> -> vector<8x1xf32>
    %239 = vector.broadcast %227 : vector<8x1xf32> to vector<8x32xf32>
    %240 = arith.subf %219, %239 : vector<8x32xf32>
    %241 = vector.broadcast %221 : vector<1x32xf32> to vector<8x32xf32>
    %242 = arith.mulf %241, %240 : vector<8x32xf32>
    %243 = vector.broadcast %238 : vector<8x1xf32> to vector<8x32xf32>
    %244 = arith.mulf %242, %243 : vector<8x32xf32>
    %245 = vector.broadcast %223 : vector<1x32xf32> to vector<8x32xf32>
    %246 = arith.addf %244, %245 : vector<8x32xf32>
    %247 = arith.truncf %246 : vector<8x32xf32> to vector<8x32xbf16>
    %c0_102 = arith.constant 0 : index
    %c0_103 = arith.constant 0 : index
    %c0_104 = arith.constant 0 : index
    %248 = vector.load %arg15[%c0_102, %c0_103, %c0_104] : memref<1x32x64xbf16, #tpu.memory_space<vmem>>, vector<1x32x64xbf16>
    %249 = vector.shape_cast %248 : vector<1x32x64xbf16> to vector<32x64xbf16>
    %cst_105 = arith.constant dense<0.000000e+00> : vector<8x64xf32>
    %250 = tpu.matmul %247, %249, %cst_105 {dimension_numbers = #tpu.dot_dimension_numbers<[1], [0], [0], [1], [0, 0, 1, 1], [], []>} : vector<8x32xbf16>, vector<32x64xbf16>, vector<8x64xf32> -> vector<8x64xf32>
    %c0_106 = arith.constant 0 : index
    %c0_107 = arith.constant 0 : index
    %c0_108 = arith.constant 0 : index
    %251 = vector.load %arg16[%c0_106, %c0_107, %c0_108] : memref<1x1x64xf32, #tpu.memory_space<vmem>>, vector<1x1x64xf32>
    %252 = vector.shape_cast %251 : vector<1x1x64xf32> to vector<1x64xf32>
    %253 = vector.broadcast %252 : vector<1x64xf32> to vector<8x64xf32>
    %254 = arith.addf %250, %253 : vector<8x64xf32>
    %cst_109 = arith.constant 0.000000e+00 : f32
    %255 = vector.broadcast %cst_109 : f32 to vector<8x64xf32>
    %256 = arith.maximumf %254, %255 : vector<8x64xf32>
    %257 = arith.truncf %256 : vector<8x64xf32> to vector<8x64xbf16>
    %c0_110 = arith.constant 0 : index
    %c0_111 = arith.constant 0 : index
    %c0_112 = arith.constant 0 : index
    %258 = vector.load %arg17[%c0_110, %c0_111, %c0_112] : memref<1x64x32xbf16, #tpu.memory_space<vmem>>, vector<1x64x32xbf16>
    %259 = vector.shape_cast %258 : vector<1x64x32xbf16> to vector<64x32xbf16>
    %cst_113 = arith.constant dense<0.000000e+00> : vector<8x32xf32>
    %260 = tpu.matmul %257, %259, %cst_113 {dimension_numbers = #tpu.dot_dimension_numbers<[1], [0], [0], [1], [0, 0, 1, 1], [], []>} : vector<8x64xbf16>, vector<64x32xbf16>, vector<8x32xf32> -> vector<8x32xf32>
    %c0_114 = arith.constant 0 : index
    %c0_115 = arith.constant 0 : index
    %c0_116 = arith.constant 0 : index
    %261 = vector.load %arg18[%c0_114, %c0_115, %c0_116] : memref<1x1x32xf32, #tpu.memory_space<vmem>>, vector<1x1x32xf32>
    %262 = vector.shape_cast %261 : vector<1x1x32xf32> to vector<1x32xf32>
    %263 = vector.broadcast %262 : vector<1x32xf32> to vector<8x32xf32>
    %264 = arith.addf %260, %263 : vector<8x32xf32>
    %265 = arith.addf %219, %264 : vector<8x32xf32>
    %c0_117 = arith.constant 0 : index
    %c0_118 = arith.constant 0 : index
    %266 = vector.load %arg24[%c0_117, %c0_118] : memref<8x32xf32, #tpu.memory_space<vmem>>, vector<8x32xf32>
    tpu.vector_store %arg24[%c0_117, %c0_118], %265 {strides = array<i32>} : memref<8x32xf32, #tpu.memory_space<vmem>>, vector<8x32xf32>,
    %c1_i32_119 = arith.constant 1 : i32
    %267 = arith.cmpi eq, %arg1, %c1_i32_119 : i32
    %268 = arith.extui %267 : i1 to i32
    %c0_i32_120 = arith.constant 0 : i32
    %269 = arith.cmpi ne, %268, %c0_i32_120 : i32
    scf.if %269 {
      %c0_121 = arith.constant 0 : index
      %c0_122 = arith.constant 0 : index
      %270 = vector.load %arg21[%c0_121, %c0_122] : memref<1x32xf32, #tpu.memory_space<vmem>>, vector<1x32xf32>
      %c0_123 = arith.constant 0 : index
      %c0_124 = arith.constant 0 : index
      %271 = vector.load %arg22[%c0_123, %c0_124] : memref<1x32xf32, #tpu.memory_space<vmem>>, vector<1x32xf32>
      %cst_125 = arith.constant dense<0.000000e+00> : vector<8xf32>
      %272 = vector.multi_reduction <add>, %265, %cst_125 [1] : vector<8x32xf32> to vector<8xf32>
      %273 = vector.shape_cast %272 : vector<8xf32> to vector<8x1xf32>
      %cst_126 = arith.constant 3.200000e+01 : f32
      %274 = vector.broadcast %cst_126 : f32 to vector<8x1xf32>
      %275 = arith.divf %273, %274 : vector<8x1xf32>
      %276 = vector.broadcast %275 : vector<8x1xf32> to vector<8x32xf32>
      %277 = arith.subf %265, %276 : vector<8x32xf32>
      %278 = arith.mulf %277, %277 : vector<8x32xf32>
      %cst_127 = arith.constant dense<0.000000e+00> : vector<8xf32>
      %279 = vector.multi_reduction <add>, %278, %cst_127 [1] : vector<8x32xf32> to vector<8xf32>
      %280 = vector.shape_cast %279 : vector<8xf32> to vector<8x1xf32>
      %cst_128 = arith.constant 3.100000e+01 : f32
      %281 = vector.broadcast %cst_128 : f32 to vector<8x1xf32>
      %282 = arith.divf %280, %281 : vector<8x1xf32>
      %283 = math.sqrt %282 : vector<8x1xf32>
      %cst_129 = arith.constant 9.99999997E-7 : f32
      %284 = vector.broadcast %cst_129 : f32 to vector<8x1xf32>
      %285 = arith.addf %283, %284 : vector<8x1xf32>
      %286 = tpu.reciprocal %285 {approx = true} : vector<8x1xf32> -> vector<8x1xf32>
      %287 = vector.broadcast %275 : vector<8x1xf32> to vector<8x32xf32>
      %288 = arith.subf %265, %287 : vector<8x32xf32>
      %289 = vector.broadcast %270 : vector<1x32xf32> to vector<8x32xf32>
      %290 = arith.mulf %289, %288 : vector<8x32xf32>
      %291 = vector.broadcast %286 : vector<8x1xf32> to vector<8x32xf32>
      %292 = arith.mulf %290, %291 : vector<8x32xf32>
      %293 = vector.broadcast %271 : vector<1x32xf32> to vector<8x32xf32>
      %294 = arith.addf %292, %293 : vector<8x32xf32>
      %c0_130 = arith.constant 0 : index
      %c0_131 = arith.constant 0 : index
      %c0_132 = arith.constant 0 : index
      %295 = vector.load %arg23[%c0_130, %c0_131, %c0_132] : memref<1x8x32xf32, #tpu.memory_space<vmem>>, vector<1x8x32xf32>
      %296 = vector.shape_cast %295 : vector<1x8x32xf32> to vector<8x32xf32>
      %297 = vector.shape_cast %294 : vector<8x32xf32> to vector<1x8x32xf32>
      tpu.vector_store %arg23[%c0_130, %c0_131, %c0_132], %297 {strides = array<i32>} : memref<1x8x32xf32, #tpu.memory_space<vmem>>, vector<1x8x32xf32>,
    } else {
    }
    return
  }
  func.func @transform_0(%arg0: i32, %arg1: i32) -> (i32, i32, i32) {
    %c0_i32 = arith.constant 0 : i32
    %c0_i32_0 = arith.constant 0 : i32
    %c0_i32_1 = arith.constant 0 : i32
    return %arg0, %c0_i32, %c0_i32_0 : i32, i32, i32
  }
  func.func @transform_1(%arg0: i32, %arg1: i32) -> (i32, i32, i32) {
    %c0_i32 = arith.constant 0 : i32
    %c0_i32_0 = arith.constant 0 : i32
    %c0_i32_1 = arith.constant 0 : i32
    return %arg0, %c0_i32, %c0_i32_0 : i32, i32, i32
  }
  func.func @transform_2(%arg0: i32, %arg1: i32) -> (i32, i32, i32) {
    %c0_i32 = arith.constant 0 : i32
    %c0_i32_0 = arith.constant 0 : i32
    %c0_i32_1 = arith.constant 0 : i32
    return %arg0, %c0_i32, %c0_i32_0 : i32, i32, i32
  }
  func.func @transform_3(%arg0: i32, %arg1: i32) -> (i32, i32, i32) {
    %c0_i32 = arith.constant 0 : i32
    %c0_i32_0 = arith.constant 0 : i32
    %c0_i32_1 = arith.constant 0 : i32
    return %arg1, %c0_i32, %c0_i32_0 : i32, i32, i32
  }
  func.func @transform_4(%arg0: i32, %arg1: i32) -> (i32, i32, i32) {
    %c0_i32 = arith.constant 0 : i32
    %c0_i32_0 = arith.constant 0 : i32
    %c0_i32_1 = arith.constant 0 : i32
    return %arg1, %c0_i32, %c0_i32_0 : i32, i32, i32
  }
  func.func @transform_5(%arg0: i32, %arg1: i32) -> (i32, i32, i32) {
    %c0_i32 = arith.constant 0 : i32
    %c0_i32_0 = arith.constant 0 : i32
    %c0_i32_1 = arith.constant 0 : i32
    return %arg1, %c0_i32, %c0_i32_0 : i32, i32, i32
  }
  func.func @transform_6(%arg0: i32, %arg1: i32) -> (i32, i32, i32) {
    %c0_i32 = arith.constant 0 : i32
    %c0_i32_0 = arith.constant 0 : i32
    %c0_i32_1 = arith.constant 0 : i32
    return %arg1, %c0_i32, %c0_i32_0 : i32, i32, i32
  }
  func.func @transform_7(%arg0: i32, %arg1: i32) -> (i32, i32, i32) {
    %c0_i32 = arith.constant 0 : i32
    %c0_i32_0 = arith.constant 0 : i32
    %c0_i32_1 = arith.constant 0 : i32
    return %arg1, %c0_i32, %c0_i32_0 : i32, i32, i32
  }
  func.func @transform_8(%arg0: i32, %arg1: i32) -> (i32, i32, i32) {
    %c0_i32 = arith.constant 0 : i32
    %c0_i32_0 = arith.constant 0 : i32
    %c0_i32_1 = arith.constant 0 : i32
    return %arg1, %c0_i32, %c0_i32_0 : i32, i32, i32
  }
  func.func @transform_9(%arg0: i32, %arg1: i32) -> (i32, i32, i32) {
    %c0_i32 = arith.constant 0 : i32
    %c0_i32_0 = arith.constant 0 : i32
    %c0_i32_1 = arith.constant 0 : i32
    return %arg1, %c0_i32, %c0_i32_0 : i32, i32, i32
  }
  func.func @transform_10(%arg0: i32, %arg1: i32) -> (i32, i32, i32) {
    %c0_i32 = arith.constant 0 : i32
    %c0_i32_0 = arith.constant 0 : i32
    %c0_i32_1 = arith.constant 0 : i32
    return %arg1, %c0_i32, %c0_i32_0 : i32, i32, i32
  }
  func.func @transform_11(%arg0: i32, %arg1: i32) -> (i32, i32, i32) {
    %c0_i32 = arith.constant 0 : i32
    %c0_i32_0 = arith.constant 0 : i32
    %c0_i32_1 = arith.constant 0 : i32
    return %arg1, %c0_i32, %c0_i32_0 : i32, i32, i32
  }
  func.func @transform_12(%arg0: i32, %arg1: i32) -> (i32, i32, i32) {
    %c0_i32 = arith.constant 0 : i32
    %c0_i32_0 = arith.constant 0 : i32
    %c0_i32_1 = arith.constant 0 : i32
    return %arg1, %c0_i32, %c0_i32_0 : i32, i32, i32
  }
  func.func @transform_13(%arg0: i32, %arg1: i32) -> (i32, i32, i32) {
    %c0_i32 = arith.constant 0 : i32
    %c0_i32_0 = arith.constant 0 : i32
    %c0_i32_1 = arith.constant 0 : i32
    return %arg1, %c0_i32, %c0_i32_0 : i32, i32, i32
  }
  func.func @transform_14(%arg0: i32, %arg1: i32) -> (i32, i32, i32) {
    %c0_i32 = arith.constant 0 : i32
    %c0_i32_0 = arith.constant 0 : i32
    %c0_i32_1 = arith.constant 0 : i32
    return %arg1, %c0_i32, %c0_i32_0 : i32, i32, i32
  }
  func.func @transform_15(%arg0: i32, %arg1: i32) -> (i32, i32, i32) {
    %c0_i32 = arith.constant 0 : i32
    %c0_i32_0 = arith.constant 0 : i32
    %c0_i32_1 = arith.constant 0 : i32
    return %arg1, %c0_i32, %c0_i32_0 : i32, i32, i32
  }
  func.func @transform_16(%arg0: i32, %arg1: i32) -> (i32, i32, i32) {
    %c0_i32 = arith.constant 0 : i32
    %c0_i32_0 = arith.constant 0 : i32
    %c0_i32_1 = arith.constant 0 : i32
    return %arg1, %c0_i32, %c0_i32_0 : i32, i32, i32
  }
  func.func @transform_17(%arg0: i32, %arg1: i32) -> (i32, i32, i32) {
    %c0_i32 = arith.constant 0 : i32
    %c0_i32_0 = arith.constant 0 : i32
    %c0_i32_1 = arith.constant 0 : i32
    return %arg1, %c0_i32, %c0_i32_0 : i32, i32, i32
  }
  func.func @transform_18(%arg0: i32, %arg1: i32) -> (i32, i32, i32) {
    %c0_i32 = arith.constant 0 : i32
    %c0_i32_0 = arith.constant 0 : i32
    %c0_i32_1 = arith.constant 0 : i32
    return %arg1, %c0_i32, %c0_i32_0 : i32, i32, i32
  }
  func.func @transform_19(%arg0: i32, %arg1: i32) -> (i32, i32) {
    %c0_i32 = arith.constant 0 : i32
    %c0_i32_0 = arith.constant 0 : i32
    %c0_i32_1 = arith.constant 0 : i32
    return %c0_i32, %c0_i32_0 : i32, i32
  }
  func.func @transform_20(%arg0: i32, %arg1: i32) -> (i32, i32) {
    %c0_i32 = arith.constant 0 : i32
    %c0_i32_0 = arith.constant 0 : i32
    %c0_i32_1 = arith.constant 0 : i32
    return %c0_i32, %c0_i32_0 : i32, i32
  }
  func.func @transform_21(%arg0: i32, %arg1: i32) -> (i32, i32, i32) {
    %c0_i32 = arith.constant 0 : i32
    %c0_i32_0 = arith.constant 0 : i32
    %c0_i32_1 = arith.constant 0 : i32
    return %arg0, %c0_i32, %c0_i32_0 : i32, i32, i32
  }
}

</mosaic_0001>

<llo_original>
// kernel: tpu_custom_call.1
$region0: #{tpu_custom_call.1}
  #allocation0 [shape = 'u32[]', space=smem, size = 0x4, offset = 0x4, fixed_abs, tag = 'smem constant byte address 0x4 - core index']
  #allocation1 [shape = 'u32[144,128]{1,0:T(1,128)}', space=vmem, size = 0x12000, scoped, tag = 'internal scratch']
  #allocation2 [shape = 'f32[8,32]{1,0:T(8,128)}', space=vmem, size = 0x1000, scoped, tag = 'scratch operand']
  %s0 = inlined_call_operand.hbm [shape: f32[2,8,32], index: 0, kind: input, shape index: {}]
  %s1 = inlined_call_operand.hbm [shape: f32[2,8,32], index: 1, kind: input, shape index: {}]
  %s2 = inlined_call_operand.hbm [shape: f32[2,1,8], index: 2, kind: input, shape index: {}]
  %s3 = inlined_call_operand.vmem [shape: bf16[2,32,96], index: 3, kind: input, shape index: {}]
  %s4 = inlined_call_operand.hbm [shape: f32[2,1,96], index: 4, kind: input, shape index: {}]
  %s5 = inlined_call_operand.vmem [shape: bf16[2,32,32], index: 5, kind: input, shape index: {}]
  %s6 = inlined_call_operand.hbm [shape: f32[2,1,32], index: 6, kind: input, shape index: {}]
  %s7 = inlined_call_operand.vmem [shape: bf16[2,32,32], index: 7, kind: input, shape index: {}]
  %s8 = inlined_call_operand.vmem [shape: f32[2,1,32], index: 8, kind: input, shape index: {}]
  %s9 = inlined_call_operand.hbm [shape: bf16[2,32,64], index: 9, kind: input, shape index: {}]
  %s10 = inlined_call_operand.vmem [shape: f32[2,1,64], index: 10, kind: input, shape index: {}]
  %s11 = inlined_call_operand.hbm [shape: bf16[2,32,32], index: 11, kind: input, shape index: {}]
  %s12 = inlined_call_operand.vmem [shape: f32[2,1,32], index: 12, kind: input, shape index: {}]
  %s13 = inlined_call_operand.hbm [shape: bf16[2,32,64], index: 13, kind: input, shape index: {}]
  %s14 = inlined_call_operand.vmem [shape: f32[2,1,64], index: 14, kind: input, shape index: {}]
  %s15 = inlined_call_operand.vmem [shape: bf16[2,64,32], index: 15, kind: input, shape index: {}]
  %s16 = inlined_call_operand.vmem [shape: f32[2,1,32], index: 16, kind: input, shape index: {}]
  %s17 = inlined_call_operand.vmem [shape: f32[6,1,32], index: 17, kind: input, shape index: {}]
  %s18 = inlined_call_operand.vmem [shape: f32[6,1,32], index: 18, kind: input, shape index: {}]
  %s19 = inlined_call_operand.vmem [shape: f32[1,32], index: 19, kind: input, shape index: {}]
  %s20 = inlined_call_operand.vmem [shape: f32[1,32], index: 20, kind: input, shape index: {}]
  %s21 = inlined_call_operand.hbm [shape: f32[2,8,32], index: 21, kind: output, shape index: {}]
  %s22 = sld [smem:[#allocation0]]
  $region157: #{tpu_custom_call.1} parent=0
    _
  %s24 = ssub.s32 1, %s22
  %s25 = scalar_select 0, %s24, %s22
  $region1: #{tpu_custom_call.1} parent=0
    #allocation3 [shape = 'u8[8192]{0}', space=vmem, size = 0x2000, scoped, tag = 'input window, operand 0']
    #allocation4 [shape = 's32[2]{0}', space=sflag, size = 0x8, scoped, tag = 'scoped memory for tpu_custom_call.1']
    #allocation5 [shape = 's32[2]{0}', space=sflag, size = 0x8, scoped, tag = 'scoped memory for tpu_custom_call.1']
    #allocation6 [shape = 'u8[8192]{0}', space=vmem, size = 0x2000, scoped, tag = 'input window, operand 1']
    #allocation7 [shape = 's32[2]{0}', space=sflag, size = 0x8, scoped, tag = 'scoped memory for tpu_custom_call.1']
    #allocation8 [shape = 'u8[1024]{0}', space=vmem, size = 0x400, scoped, tag = 'input window, operand 2']
    #allocation9 [shape = 'u8[1024]{0}', space=vmem, size = 0x400, scoped, tag = 'input window, operand 4']
    #allocation10 [shape = 's32[2]{0}', space=sflag, size = 0x8, scoped, tag = 'scoped memory for tpu_custom_call.1']
    #allocation11 [shape = 'u8[1024]{0}', space=vmem, size = 0x400, scoped, tag = 'input window, operand 6']
    #allocation12 [shape = 'u8[16384]{0}', space=vmem, size = 0x4000, scoped, tag = 'input window, operand 9']
    #allocation13 [shape = 's32[2]{0}', space=sflag, size = 0x8, scoped, tag = 'scoped memory for tpu_custom_call.1']
    #allocation14 [shape = 'u8[16384]{0}', space=vmem, size = 0x4000, scoped, tag = 'input window, operand 11']
    #allocation15 [shape = 'u8[16384]{0}', space=vmem, size = 0x4000, scoped, tag = 'input window, operand 13']
    #allocation16 [shape = 's32[2]{0}', space=sflag, size = 0x8, scoped, tag = 'scoped memory for tpu_custom_call.1']
    #allocation17 [shape = 'u8[8192]{0}', space=vmem, size = 0x2000, scoped, tag = 'output window, operand 0']
    %26 = vsyncpa [#allocation4], 0
    %s27 = scalar_lea.sflag [#allocation4], 1
    %28 = vsyncpa %s27, 0
    %29 = vsyncpa [#allocation7], 0
    %s30 = scalar_lea.sflag [#allocation7], 1
    %31 = vsyncpa %s30, 0
    %32 = vsyncpa [#allocation10], 0
    %s33 = scalar_lea.sflag [#allocation10], 1
    %34 = vsyncpa %s33, 0
    %35 = vsyncpa [#allocation13], 0
    %s36 = scalar_lea.sflag [#allocation13], 1
    %37 = vsyncpa %s36, 0
    %38 = vsyncpa [#allocation16], 0
    %s39 = scalar_lea.sflag [#allocation16], 1
    %40 = vsyncpa %s39, 0
    %41 = vsyncpa [#allocation5], 0
    %s42 = scalar_lea.sflag [#allocation5], 1
    %43 = vsyncpa %s42, 0
    loop: start=0, step=1, limit=6
    $region2: #{tpu_custom_call.1} parent=1 // loop_pre_header
      _
    $region3: #{tpu_custom_call.1} parent=1 // loop_header
      %s45 = sphi 0, %s49
      %p46 = scmp.ge.s32.totalorder %s45, 6
      %s52 = sphi 0, %s64
      %s53 = sphi 0, %s60
      %s54 = sphi 0, %s52
      %s55 = sphi 0, %s53
      %s56 = sphi 0, %s54
      %s57 = sphi 0, %s55
      %s67 = sphi 0, %s69
      %s70 = sphi 0, %s67
      %s71 = sphi 0, %s70
      %s87 = sphi 0, %s71
      %s93 = sphi 0, %s95
      %s96 = sphi 0, %s93
      %s97 = sphi 0, %s96
      %s113 = sphi 0, %s97
      %s119 = sphi 0, %s121
      %s122 = sphi 0, %s119
      %s123 = sphi 0, %s122
      %s139 = sphi 0, %s123
      %s145 = sphi 0, %s147
      %s148 = sphi 0, %s145
      %s149 = sphi 0, %s148
      %s165 = sphi 0, %s149
      %s171 = sphi 0, %s173
      %s174 = sphi 0, %s171
      %s175 = sphi 0, %s174
      %s191 = sphi 0, %s175
      %s197 = sphi 0, %s199
      %s200 = sphi 0, %s197
      %s201 = sphi 0, %s200
      %s217 = sphi 0, %s201
      %s223 = sphi 0, %s225
      %s226 = sphi 0, %s223
      %s227 = sphi 0, %s226
      %s243 = sphi 0, %s227
      %s249 = sphi 0, %s251
      %s252 = sphi 0, %s249
      %s253 = sphi 0, %s252
      %s269 = sphi 0, %s253
      %s275 = sphi 0, %s277
      %s278 = sphi 0, %s275
      %s279 = sphi 0, %s278
      %s295 = sphi 0, %s279
      %s301 = sphi 0, %s303
      %s304 = sphi 0, %s301
      %s305 = sphi 0, %s304
      %s321 = sphi 0, %s305
      %s327 = sphi 0, %s329
      %s330 = sphi 0, %s327
      %s331 = sphi 0, %s330
      %s347 = sphi 0, %s331
      %s353 = sphi 0, %s355
      %s356 = sphi 0, %s353
      %s357 = sphi 0, %s356
      %s373 = sphi 0, %s357
      %s379 = sphi 0, %s381
      %s382 = sphi 0, %s379
      %s383 = sphi 0, %s382
      %s399 = sphi 0, %s383
      %s405 = sphi 0, %s407
      %s408 = sphi 0, %s405
      %s409 = sphi 0, %s408
      %s425 = sphi 0, %s409
      %s431 = sphi 0, %s433
      %s434 = sphi 0, %s431
      %s435 = sphi 0, %s434
      %s451 = sphi 0, %s435
      %s457 = sphi 0, %s459
      %s460 = sphi 0, %s457
      %s461 = sphi 0, %s460
      %s477 = sphi 0, %s461
      %s483 = sphi 0, %s485
      %s486 = sphi 0, %s483
      %s487 = sphi 0, %s486
      %s503 = sphi 0, %s487
      %s509 = sphi 0, %s511
      %s512 = sphi 0, %s509
      %s513 = sphi 0, %s512
      %s529 = sphi 0, %s513
      %s535 = sphi 0, %s537
      %s538 = sphi 0, %s535
      %s539 = sphi 0, %s538
      %s555 = sphi 0, %s539
      %s559 = sphi 0, %s559
      %s561 = sphi 0, %s559
      %s562 = sphi 0, %s561
      %s576 = sphi 0, %s562
      %s580 = sphi 0, %s580
      %s582 = sphi 0, %s580
      %s583 = sphi 0, %s582
      %s597 = sphi 0, %s583
      %s603 = sphi 0, %s605
      %s606 = sphi 0, %s603
      %s607 = sphi 0, %s606
      %s623 = sphi 0, %s607
    $region4: #{tpu_custom_call.1} parent=1 // loop_header_branch
      %48 = sbr.rel (%p46) target = $region8
    $region5: #{tpu_custom_call.1} parent=1 // loop_body
      %s50 = ssub.s32 %s45, 1
      %s51 = ssub.s32 %s45, 2
      %s58 = sadd.s32 1, %s53
      %p59 = scmp.ge.s32.totalorder %s58, 2
      %s60 = scalar_select %p59, 0, %s58
      %s61 = sadd.s32 1, %s52
      %s62 = scalar_select %p59, %s61, %s52
      %p63 = scmp.ge.s32.totalorder %s62, 2
      %s64 = scalar_select %p63, 0, %s62
      %s65 = ssub.s32 %s52, %s64
      %p66 = scmp.eq.s32.totalorder %s65, 0
      %s68 = sadd.s32 %s67, 1
      %s69 = scalar_select %p66, %s67, %s68
      %p72 = pneg %p66
      %p73 = scmp.eq.s32.totalorder %s45, 3
      %p74 = por %p72, %p73
      %p75 = scmp.ne.s32.totalorder %s67, %s70
      %p76 = scmp.eq.s32.totalorder %s45, 0
      %p77 = por %p75, %p76
      %p78 = scmp.ne.s32.totalorder %s67, %s70
      %p79 = scmp.eq.s32.totalorder %s50, 3
      %p80 = por %p78, %p79
      %p81 = scmp.ne.s32.totalorder %s70, %s71
      %p82 = scmp.eq.s32.totalorder %s50, 0
      %p83 = por %p81, %p82
      %p84 = scmp.ne.s32.totalorder %s70, %s71
      %p85 = scmp.eq.s32.totalorder %s51, 3
      %p86 = por %p84, %p85
      %p88 = scmp.ne.s32.totalorder %s71, %s87
      %p89 = scmp.eq.s32.totalorder %s51, 0
      %p90 = por %p88, %p89
      %s91 = ssub.s32 %s52, %s64
      %p92 = scmp.eq.s32.totalorder %s91, 0
      %s94 = sadd.s32 %s93, 1
      %s95 = scalar_select %p92, %s93, %s94
      %p98 = pneg %p92
      %p99 = scmp.eq.s32.totalorder %s45, 3
      %p100 = por %p98, %p99
      %p101 = scmp.ne.s32.totalorder %s93, %s96
      %p102 = scmp.eq.s32.totalorder %s45, 0
      %p103 = por %p101, %p102
      %p104 = scmp.ne.s32.totalorder %s93, %s96
      %p105 = scmp.eq.s32.totalorder %s50, 3
      %p106 = por %p104, %p105
      %p107 = scmp.ne.s32.totalorder %s96, %s97
      %p108 = scmp.eq.s32.totalorder %s50, 0
      %p109 = por %p107, %p108
      %p110 = scmp.ne.s32.totalorder %s96, %s97
      %p111 = scmp.eq.s32.totalorder %s51, 3
      %p112 = por %p110, %p111
      %p114 = scmp.ne.s32.totalorder %s97, %s113
      %p115 = scmp.eq.s32.totalorder %s51, 0
      %p116 = por %p114, %p115
      %s117 = ssub.s32 %s52, %s64
      %p118 = scmp.eq.s32.totalorder %s117, 0
      %s120 = sadd.s32 %s119, 1
      %s121 = scalar_select %p118, %s119, %s120
      %p124 = pneg %p118
      %p125 = scmp.eq.s32.totalorder %s45, 3
      %p126 = por %p124, %p125
      %p127 = scmp.ne.s32.totalorder %s119, %s122
      %p128 = scmp.eq.s32.totalorder %s45, 0
      %p129 = por %p127, %p128
      %p130 = scmp.ne.s32.totalorder %s119, %s122
      %p131 = scmp.eq.s32.totalorder %s50, 3
      %p132 = por %p130, %p131
      %p133 = scmp.ne.s32.totalorder %s122, %s123
      %p134 = scmp.eq.s32.totalorder %s50, 0
      %p135 = por %p133, %p134
      %p136 = scmp.ne.s32.totalorder %s122, %s123
      %p137 = scmp.eq.s32.totalorder %s51, 3
      %p138 = por %p136, %p137
      %p140 = scmp.ne.s32.totalorder %s123, %s139
      %p141 = scmp.eq.s32.totalorder %s51, 0
      %p142 = por %p140, %p141
      %s143 = ssub.s32 %s53, %s60
      %p144 = scmp.eq.s32.totalorder %s143, 0
      %s146 = sadd.s32 %s145, 1
      %s147 = scalar_select %p144, %s145, %s146
      %p150 = pneg %p144
      %p151 = scmp.eq.s32.totalorder %s45, 3
      %p152 = por %p150, %p151
      %p153 = scmp.ne.s32.totalorder %s145, %s148
      %p154 = scmp.eq.s32.totalorder %s45, 0
      %p155 = por %p153, %p154
      %p156 = scmp.ne.s32.totalorder %s145, %s148
      %p157 = scmp.eq.s32.totalorder %s50, 3
      %p158 = por %p156, %p157
      %p159 = scmp.ne.s32.totalorder %s148, %s149
      %p160 = scmp.eq.s32.totalorder %s50, 0
      %p161 = por %p159, %p160
      %p162 = scmp.ne.s32.totalorder %s148, %s149
      %p163 = scmp.eq.s32.totalorder %s51, 3
      %p164 = por %p162, %p163
      %p166 = scmp.ne.s32.totalorder %s149, %s165
      %p167 = scmp.eq.s32.totalorder %s51, 0
      %p168 = por %p166, %p167
      %s169 = ssub.s32 %s53, %s60
      %p170 = scmp.eq.s32.totalorder %s169, 0
      %s172 = sadd.s32 %s171, 1
      %s173 = scalar_select %p170, %s171, %s172
      %p176 = pneg %p170
      %p177 = scmp.eq.s32.totalorder %s45, 3
      %p178 = por %p176, %p177
      %p179 = scmp.ne.s32.totalorder %s171, %s174
      %p180 = scmp.eq.s32.totalorder %s45, 0
      %p181 = por %p179, %p180
      %p182 = scmp.ne.s32.totalorder %s171, %s174
      %p183 = scmp.eq.s32.totalorder %s50, 3
      %p184 = por %p182, %p183
      %p185 = scmp.ne.s32.totalorder %s174, %s175
      %p186 = scmp.eq.s32.totalorder %s50, 0
      %p187 = por %p185, %p186
      %p188 = scmp.ne.s32.totalorder %s174, %s175
      %p189 = scmp.eq.s32.totalorder %s51, 3
      %p190 = por %p188, %p189
      %p192 = scmp.ne.s32.totalorder %s175, %s191
      %p193 = scmp.eq.s32.totalorder %s51, 0
      %p194 = por %p192, %p193
      %s195 = ssub.s32 %s53, %s60
      %p196 = scmp.eq.s32.totalorder %s195, 0
      %s198 = sadd.s32 %s197, 1
      %s199 = scalar_select %p196, %s197, %s198
      %p202 = pneg %p196
      %p203 = scmp.eq.s32.totalorder %s45, 3
      %p204 = por %p202, %p203
      %p205 = scmp.ne.s32.totalorder %s197, %s200
      %p206 = scmp.eq.s32.totalorder %s45, 0
      %p207 = por %p205, %p206
      %p208 = scmp.ne.s32.totalorder %s197, %s200
      %p209 = scmp.eq.s32.totalorder %s50, 3
      %p210 = por %p208, %p209
      %p211 = scmp.ne.s32.totalorder %s200, %s201
      %p212 = scmp.eq.s32.totalorder %s50, 0
      %p213 = por %p211, %p212
      %p214 = scmp.ne.s32.totalorder %s200, %s201
      %p215 = scmp.eq.s32.totalorder %s51, 3
      %p216 = por %p214, %p215
      %p218 = scmp.ne.s32.totalorder %s201, %s217
      %p219 = scmp.eq.s32.totalorder %s51, 0
      %p220 = por %p218, %p219
      %s221 = ssub.s32 %s53, %s60
      %p222 = scmp.eq.s32.totalorder %s221, 0
      %s224 = sadd.s32 %s223, 1
      %s225 = scalar_select %p222, %s223, %s224
      %p228 = pneg %p222
      %p229 = scmp.eq.s32.totalorder %s45, 3
      %p230 = por %p228, %p229
      %p231 = scmp.ne.s32.totalorder %s223, %s226
      %p232 = scmp.eq.s32.totalorder %s45, 0
      %p233 = por %p231, %p232
      %p234 = scmp.ne.s32.totalorder %s223, %s226
      %p235 = scmp.eq.s32.totalorder %s50, 3
      %p236 = por %p234, %p235
      %p237 = scmp.ne.s32.totalorder %s226, %s227
      %p238 = scmp.eq.s32.totalorder %s50, 0
      %p239 = por %p237, %p238
      %p240 = scmp.ne.s32.totalorder %s226, %s227
      %p241 = scmp.eq.s32.totalorder %s51, 3
      %p242 = por %p240, %p241
      %p244 = scmp.ne.s32.totalorder %s227, %s243
      %p245 = scmp.eq.s32.totalorder %s51, 0
      %p246 = por %p244, %p245
      %s247 = ssub.s32 %s53, %s60
      %p248 = scmp.eq.s32.totalorder %s247, 0
      %s250 = sadd.s32 %s249, 1
      %s251 = scalar_select %p248, %s249, %s250
      %p254 = pneg %p248
      %p255 = scmp.eq.s32.totalorder %s45, 3
      %p256 = por %p254, %p255
      %p257 = scmp.ne.s32.totalorder %s249, %s252
      %p258 = scmp.eq.s32.totalorder %s45, 0
      %p259 = por %p257, %p258
      %p260 = scmp.ne.s32.totalorder %s249, %s252
      %p261 = scmp.eq.s32.totalorder %s50, 3
      %p262 = por %p260, %p261
      %p263 = scmp.ne.s32.totalorder %s252, %s253
      %p264 = scmp.eq.s32.totalorder %s50, 0
      %p265 = por %p263, %p264
      %p266 = scmp.ne.s32.totalorder %s252, %s253
      %p267 = scmp.eq.s32.totalorder %s51, 3
      %p268 = por %p266, %p267
      %p270 = scmp.ne.s32.totalorder %s253, %s269
      %p271 = scmp.eq.s32.totalorder %s51, 0
      %p272 = por %p270, %p271
      %s273 = ssub.s32 %s53, %s60
      %p274 = scmp.eq.s32.totalorder %s273, 0
      %s276 = sadd.s32 %s275, 1
      %s277 = scalar_select %p274, %s275, %s276
      %p280 = pneg %p274
      %p281 = scmp.eq.s32.totalorder %s45, 3
      %p282 = por %p280, %p281
      %p283 = scmp.ne.s32.totalorder %s275, %s278
      %p284 = scmp.eq.s32.totalorder %s45, 0
      %p285 = por %p283, %p284
      %p286 = scmp.ne.s32.totalorder %s275, %s278
      %p287 = scmp.eq.s32.totalorder %s50, 3
      %p288 = por %p286, %p287
      %p289 = scmp.ne.s32.totalorder %s278, %s279
      %p290 = scmp.eq.s32.totalorder %s50, 0
      %p291 = por %p289, %p290
      %p292 = scmp.ne.s32.totalorder %s278, %s279
      %p293 = scmp.eq.s32.totalorder %s51, 3
      %p294 = por %p292, %p293
      %p296 = scmp.ne.s32.totalorder %s279, %s295
      %p297 = scmp.eq.s32.totalorder %s51, 0
      %p298 = por %p296, %p297
      %s299 = ssub.s32 %s53, %s60
      %p300 = scmp.eq.s32.totalorder %s299, 0
      %s302 = sadd.s32 %s301, 1
      %s303 = scalar_select %p300, %s301, %s302
      %p306 = pneg %p300
      %p307 = scmp.eq.s32.totalorder %s45, 3
      %p308 = por %p306, %p307
      %p309 = scmp.ne.s32.totalorder %s301, %s304
      %p310 = scmp.eq.s32.totalorder %s45, 0
      %p311 = por %p309, %p310
      %p312 = scmp.ne.s32.totalorder %s301, %s304
      %p313 = scmp.eq.s32.totalorder %s50, 3
      %p314 = por %p312, %p313
      %p315 = scmp.ne.s32.totalorder %s304, %s305
      %p316 = scmp.eq.s32.totalorder %s50, 0
      %p317 = por %p315, %p316
      %p318 = scmp.ne.s32.totalorder %s304, %s305
      %p319 = scmp.eq.s32.totalorder %s51, 3
      %p320 = por %p318, %p319
      %p322 = scmp.ne.s32.totalorder %s305, %s321
      %p323 = scmp.eq.s32.totalorder %s51, 0
      %p324 = por %p322, %p323
      %s325 = ssub.s32 %s53, %s60
      %p326 = scmp.eq.s32.totalorder %s325, 0
      %s328 = sadd.s32 %s327, 1
      %s329 = scalar_select %p326, %s327, %s328
      %p332 = pneg %p326
      %p333 = scmp.eq.s32.totalorder %s45, 3
      %p334 = por %p332, %p333
      %p335 = scmp.ne.s32.totalorder %s327, %s330
      %p336 = scmp.eq.s32.totalorder %s45, 0
      %p337 = por %p335, %p336
      %p338 = scmp.ne.s32.totalorder %s327, %s330
      %p339 = scmp.eq.s32.totalorder %s50, 3
      %p340 = por %p338, %p339
      %p341 = scmp.ne.s32.totalorder %s330, %s331
      %p342 = scmp.eq.s32.totalorder %s50, 0
      %p343 = por %p341, %p342
      %p344 = scmp.ne.s32.totalorder %s330, %s331
      %p345 = scmp.eq.s32.totalorder %s51, 3
      %p346 = por %p344, %p345
      %p348 = scmp.ne.s32.totalorder %s331, %s347
      %p349 = scmp.eq.s32.totalorder %s51, 0
      %p350 = por %p348, %p349
      %s351 = ssub.s32 %s53, %s60
      %p352 = scmp.eq.s32.totalorder %s351, 0
      %s354 = sadd.s32 %s353, 1
      %s355 = scalar_select %p352, %s353, %s354
      %p358 = pneg %p352
      %p359 = scmp.eq.s32.totalorder %s45, 3
      %p360 = por %p358, %p359
      %p361 = scmp.ne.s32.totalorder %s353, %s356
      %p362 = scmp.eq.s32.totalorder %s45, 0
      %p363 = por %p361, %p362
      %p364 = scmp.ne.s32.totalorder %s353, %s356
      %p365 = scmp.eq.s32.totalorder %s50, 3
      %p366 = por %p364, %p365
      %p367 = scmp.ne.s32.totalorder %s356, %s357
      %p368 = scmp.eq.s32.totalorder %s50, 0
      %p369 = por %p367, %p368
      %p370 = scmp.ne.s32.totalorder %s356, %s357
      %p371 = scmp.eq.s32.totalorder %s51, 3
      %p372 = por %p370, %p371
      %p374 = scmp.ne.s32.totalorder %s357, %s373
      %p375 = scmp.eq.s32.totalorder %s51, 0
      %p376 = por %p374, %p375
      %s377 = ssub.s32 %s53, %s60
      %p378 = scmp.eq.s32.totalorder %s377, 0
      %s380 = sadd.s32 %s379, 1
      %s381 = scalar_select %p378, %s379, %s380
      %p384 = pneg %p378
      %p385 = scmp.eq.s32.totalorder %s45, 3
      %p386 = por %p384, %p385
      %p387 = scmp.ne.s32.totalorder %s379, %s382
      %p388 = scmp.eq.s32.totalorder %s45, 0
      %p389 = por %p387, %p388
      %p390 = scmp.ne.s32.totalorder %s379, %s382
      %p391 = scmp.eq.s32.totalorder %s50, 3
      %p392 = por %p390, %p391
      %p393 = scmp.ne.s32.totalorder %s382, %s383
      %p394 = scmp.eq.s32.totalorder %s50, 0
      %p395 = por %p393, %p394
      %p396 = scmp.ne.s32.totalorder %s382, %s383
      %p397 = scmp.eq.s32.totalorder %s51, 3
      %p398 = por %p396, %p397
      %p400 = scmp.ne.s32.totalorder %s383, %s399
      %p401 = scmp.eq.s32.totalorder %s51, 0
      %p402 = por %p400, %p401
      %s403 = ssub.s32 %s53, %s60
      %p404 = scmp.eq.s32.totalorder %s403, 0
      %s406 = sadd.s32 %s405, 1
      %s407 = scalar_select %p404, %s405, %s406
      %p410 = pneg %p404
      %p411 = scmp.eq.s32.totalorder %s45, 3
      %p412 = por %p410, %p411
      %p413 = scmp.ne.s32.totalorder %s405, %s408
      %p414 = scmp.eq.s32.totalorder %s45, 0
      %p415 = por %p413, %p414
      %p416 = scmp.ne.s32.totalorder %s405, %s408
      %p417 = scmp.eq.s32.totalorder %s50, 3
      %p418 = por %p416, %p417
      %p419 = scmp.ne.s32.totalorder %s408, %s409
      %p420 = scmp.eq.s32.totalorder %s50, 0
      %p421 = por %p419, %p420
      %p422 = scmp.ne.s32.totalorder %s408, %s409
      %p423 = scmp.eq.s32.totalorder %s51, 3
      %p424 = por %p422, %p423
      %p426 = scmp.ne.s32.totalorder %s409, %s425
      %p427 = scmp.eq.s32.totalorder %s51, 0
      %p428 = por %p426, %p427
      %s429 = ssub.s32 %s53, %s60
      %p430 = scmp.eq.s32.totalorder %s429, 0
      %s432 = sadd.s32 %s431, 1
      %s433 = scalar_select %p430, %s431, %s432
      %p436 = pneg %p430
      %p437 = scmp.eq.s32.totalorder %s45, 3
      %p438 = por %p436, %p437
      %p439 = scmp.ne.s32.totalorder %s431, %s434
      %p440 = scmp.eq.s32.totalorder %s45, 0
      %p441 = por %p439, %p440
      %p442 = scmp.ne.s32.totalorder %s431, %s434
      %p443 = scmp.eq.s32.totalorder %s50, 3
      %p444 = por %p442, %p443
      %p445 = scmp.ne.s32.totalorder %s434, %s435
      %p446 = scmp.eq.s32.totalorder %s50, 0
      %p447 = por %p445, %p446
      %p448 = scmp.ne.s32.totalorder %s434, %s435
      %p449 = scmp.eq.s32.totalorder %s51, 3
      %p450 = por %p448, %p449
      %p452 = scmp.ne.s32.totalorder %s435, %s451
      %p453 = scmp.eq.s32.totalorder %s51, 0
      %p454 = por %p452, %p453
      %s455 = ssub.s32 %s53, %s60
      %p456 = scmp.eq.s32.totalorder %s455, 0
      %s458 = sadd.s32 %s457, 1
      %s459 = scalar_select %p456, %s457, %s458
      %p462 = pneg %p456
      %p463 = scmp.eq.s32.totalorder %s45, 3
      %p464 = por %p462, %p463
      %p465 = scmp.ne.s32.totalorder %s457, %s460
      %p466 = scmp.eq.s32.totalorder %s45, 0
      %p467 = por %p465, %p466
      %p468 = scmp.ne.s32.totalorder %s457, %s460
      %p469 = scmp.eq.s32.totalorder %s50, 3
      %p470 = por %p468, %p469
      %p471 = scmp.ne.s32.totalorder %s460, %s461
      %p472 = scmp.eq.s32.totalorder %s50, 0
      %p473 = por %p471, %p472
      %p474 = scmp.ne.s32.totalorder %s460, %s461
      %p475 = scmp.eq.s32.totalorder %s51, 3
      %p476 = por %p474, %p475
      %p478 = scmp.ne.s32.totalorder %s461, %s477
      %p479 = scmp.eq.s32.totalorder %s51, 0
      %p480 = por %p478, %p479
      %s481 = ssub.s32 %s53, %s60
      %p482 = scmp.eq.s32.totalorder %s481, 0
      %s484 = sadd.s32 %s483, 1
      %s485 = scalar_select %p482, %s483, %s484
      %p488 = pneg %p482
      %p489 = scmp.eq.s32.totalorder %s45, 3
      %p490 = por %p488, %p489
      %p491 = scmp.ne.s32.totalorder %s483, %s486
      %p492 = scmp.eq.s32.totalorder %s45, 0
      %p493 = por %p491, %p492
      %p494 = scmp.ne.s32.totalorder %s483, %s486
      %p495 = scmp.eq.s32.totalorder %s50, 3
      %p496 = por %p494, %p495
      %p497 = scmp.ne.s32.totalorder %s486, %s487
      %p498 = scmp.eq.s32.totalorder %s50, 0
      %p499 = por %p497, %p498
      %p500 = scmp.ne.s32.totalorder %s486, %s487
      %p501 = scmp.eq.s32.totalorder %s51, 3
      %p502 = por %p500, %p501
      %p504 = scmp.ne.s32.totalorder %s487, %s503
      %p505 = scmp.eq.s32.totalorder %s51, 0
      %p506 = por %p504, %p505
      %s507 = ssub.s32 %s53, %s60
      %p508 = scmp.eq.s32.totalorder %s507, 0
      %s510 = sadd.s32 %s509, 1
      %s511 = scalar_select %p508, %s509, %s510
      %p514 = pneg %p508
      %p515 = scmp.eq.s32.totalorder %s45, 3
      %p516 = por %p514, %p515
      %p517 = scmp.ne.s32.totalorder %s509, %s512
      %p518 = scmp.eq.s32.totalorder %s45, 0
      %p519 = por %p517, %p518
      %p520 = scmp.ne.s32.totalorder %s509, %s512
      %p521 = scmp.eq.s32.totalorder %s50, 3
      %p522 = por %p520, %p521
      %p523 = scmp.ne.s32.totalorder %s512, %s513
      %p524 = scmp.eq.s32.totalorder %s50, 0
      %p525 = por %p523, %p524
      %p526 = scmp.ne.s32.totalorder %s512, %s513
      %p527 = scmp.eq.s32.totalorder %s51, 3
      %p528 = por %p526, %p527
      %p530 = scmp.ne.s32.totalorder %s513, %s529
      %p531 = scmp.eq.s32.totalorder %s51, 0
      %p532 = por %p530, %p531
      %s533 = ssub.s32 %s53, %s60
      %p534 = scmp.eq.s32.totalorder %s533, 0
      %s536 = sadd.s32 %s535, 1
      %s537 = scalar_select %p534, %s535, %s536
      %p540 = pneg %p534
      %p541 = scmp.eq.s32.totalorder %s45, 3
      %p542 = por %p540, %p541
      %p543 = scmp.ne.s32.totalorder %s535, %s538
      %p544 = scmp.eq.s32.totalorder %s45, 0
      %p545 = por %p543, %p544
      %p546 = scmp.ne.s32.totalorder %s535, %s538
      %p547 = scmp.eq.s32.totalorder %s50, 3
      %p548 = por %p546, %p547
      %p549 = scmp.ne.s32.totalorder %s538, %s539
      %p550 = scmp.eq.s32.totalorder %s50, 0
      %p551 = por %p549, %p550
      %p552 = scmp.ne.s32.totalorder %s538, %s539
      %p553 = scmp.eq.s32.totalorder %s51, 3
      %p554 = por %p552, %p553
      %p556 = scmp.ne.s32.totalorder %s539, %s555
      %p557 = scmp.eq.s32.totalorder %s51, 0
      %p558 = por %p556, %p557
      %s560 = sadd.s32 %s559, 1
      %p563 = scmp.eq.s32.totalorder %s45, 3
      %p564 = scmp.ne.s32.totalorder %s559, %s561
      %p565 = scmp.eq.s32.totalorder %s45, 0
      %p566 = por %p564, %p565
      %p567 = scmp.ne.s32.totalorder %s559, %s561
      %p568 = scmp.eq.s32.totalorder %s50, 3
      %p569 = por %p567, %p568
      %p570 = scmp.ne.s32.totalorder %s561, %s562
      %p571 = scmp.eq.s32.totalorder %s50, 0
      %p572 = por %p570, %p571
      %p573 = scmp.ne.s32.totalorder %s561, %s562
      %p574 = scmp.eq.s32.totalorder %s51, 3
      %p575 = por %p573, %p574
      %p577 = scmp.ne.s32.totalorder %s562, %s576
      %p578 = scmp.eq.s32.totalorder %s51, 0
      %p579 = por %p577, %p578
      %s581 = sadd.s32 %s580, 1
      %p584 = scmp.eq.s32.totalorder %s45, 3
      %p585 = scmp.ne.s32.totalorder %s580, %s582
      %p586 = scmp.eq.s32.totalorder %s45, 0
      %p587 = por %p585, %p586
      %p588 = scmp.ne.s32.totalorder %s580, %s582
      %p589 = scmp.eq.s32.totalorder %s50, 3
      %p590 = por %p588, %p589
      %p591 = scmp.ne.s32.totalorder %s582, %s583
      %p592 = scmp.eq.s32.totalorder %s50, 0
      %p593 = por %p591, %p592
      %p594 = scmp.ne.s32.totalorder %s582, %s583
      %p595 = scmp.eq.s32.totalorder %s51, 3
      %p596 = por %p594, %p595
      %p598 = scmp.ne.s32.totalorder %s583, %s597
      %p599 = scmp.eq.s32.totalorder %s51, 0
      %p600 = por %p598, %p599
      %s601 = ssub.s32 %s52, %s64
      %p602 = scmp.eq.s32.totalorder %s601, 0
      %s604 = sadd.s32 %s603, 1
      %s605 = scalar_select %p602, %s603, %s604
      %p608 = pneg %p602
      %p609 = scmp.eq.s32.totalorder %s45, 3
      %p610 = por %p608, %p609
      %p611 = scmp.ne.s32.totalorder %s603, %s606
      %p612 = scmp.eq.s32.totalorder %s45, 0
      %p613 = por %p611, %p612
      %p614 = scmp.ne.s32.totalorder %s603, %s606
      %p615 = scmp.eq.s32.totalorder %s50, 3
      %p616 = por %p614, %p615
      %p617 = scmp.ne.s32.totalorder %s606, %s607
      %p618 = scmp.eq.s32.totalorder %s50, 0
      %p619 = por %p617, %p618
      %p620 = scmp.ne.s32.totalorder %s606, %s607
      %p621 = scmp.eq.s32.totalorder %s51, 3
      %p622 = por %p620, %p621
      %p624 = scmp.ne.s32.totalorder %s607, %s623
      %p625 = scmp.eq.s32.totalorder %s51, 0
      %p626 = por %p624, %p625
      %p627 = scmp.le.s32.totalorder 1, %s45
      %p628 = scmp.lt.s32.totalorder %s45, 5
      %p629 = pnand %p627, %p628
      %p630 = pneg %p629
      // Predicated region
      $region9: #{tpu_custom_call.1} parent=5 // pred_check
        _
      $region10: #{tpu_custom_call.1} parent=5 // pred_check_branch
        %632 = sbr.rel (%p629) target = $region12
      $region11: #{tpu_custom_call.1} parent=5 // pred_region
        %s633 = ssub.s32 %s45, 1
        // Predicated region
        $region13: #{tpu_custom_call.1} parent=11 // pred_check
          %p634 = pneg %p572
        $region14: #{tpu_custom_call.1} parent=11 // pred_check_branch
          %636 = sbr.rel (%p634) target = $region16
        $region15: #{tpu_custom_call.1} parent=11 // pred_region
          _
        $region16: #{tpu_custom_call.1} parent=11 // pred_fallthru
          _
        // Predicated region
        $region17: #{tpu_custom_call.1} parent=11 // pred_check
          %p637 = pneg %p593
        $region18: #{tpu_custom_call.1} parent=11 // pred_check_branch
          %639 = sbr.rel (%p637) target = $region20
        $region19: #{tpu_custom_call.1} parent=11 // pred_region
          _
        $region20: #{tpu_custom_call.1} parent=11 // pred_fallthru
          _
      $region12: #{tpu_custom_call.1} parent=5 // pred_fallthru
        _
      %p640 = scmp.lt.s32.totalorder %s45, 4
      // Predicated region
      $region21: #{tpu_custom_call.1} parent=5 // pred_check
        %p641 = pneg %p640
      $region22: #{tpu_custom_call.1} parent=5 // pred_check_branch
        %643 = sbr.rel (%p641) target = $region24
      $region23: #{tpu_custom_call.1} parent=5 // pred_region
        // Predicated region
        $region25: #{tpu_custom_call.1} parent=23 // pred_check
          %p644 = pneg %p77
        $region26: #{tpu_custom_call.1} parent=23 // pred_check_branch
          %646 = sbr.rel (%p644) target = $region28
        $region27: #{tpu_custom_call.1} parent=23 // pred_region
          %s647 = sand.u32 %s67, 1
          %s648 = scalar_lea.sflag [#allocation4], %s647
          %s649 = sand.u32 %s67, 1
          %s650 = smul.addr %s649, 8
          %s651 = scalar_lea.vmem [#allocation3], %s650
          %s653 = ssub.s32 128, 128
          %654 = vsyncadd %s648, %s653
          %s655 = smul.addr %s52, 128
          %s656 = scalar_lea.hbm %s0, %s655
          %s658 = sshll.u32 %s651, 4
          %s659 = int_to_ptr.vmem [resolvable:$true] %s658
          %661 = dma.hbm_to_vmem [thread:$0]  %s656, 128, %s659, %s648
        $region28: #{tpu_custom_call.1} parent=23 // pred_fallthru
          _
        // Predicated region
        $region29: #{tpu_custom_call.1} parent=23 // pred_check
          %p662 = pneg %p103
        $region30: #{tpu_custom_call.1} parent=23 // pred_check_branch
          %664 = sbr.rel (%p662) target = $region32
        $region31: #{tpu_custom_call.1} parent=23 // pred_region
          %s665 = sand.u32 %s45, 1
          %s666 = scalar_lea.sflag [#allocation7], %s665
          %s667 = sand.u32 %s93, 1
          %s668 = smul.addr %s667, 8
          %s669 = scalar_lea.vmem [#allocation6], %s668
          %s671 = ssub.s32 128, 128
          %672 = vsyncadd %s666, %s671
          %s673 = smul.addr %s52, 128
          %s674 = scalar_lea.hbm %s1, %s673
          %s676 = sshll.u32 %s669, 4
          %s677 = int_to_ptr.vmem [resolvable:$true] %s676
          %679 = dma.hbm_to_vmem [thread:$0]  %s674, 128, %s677, %s666
        $region32: #{tpu_custom_call.1} parent=23 // pred_fallthru
          _
        // Predicated region
        $region33: #{tpu_custom_call.1} parent=23 // pred_check
          %p680 = pneg %p129
        $region34: #{tpu_custom_call.1} parent=23 // pred_check_branch
          %682 = sbr.rel (%p680) target = $region36
        $region35: #{tpu_custom_call.1} parent=23 // pred_region
          %s683 = sand.u32 %s45, 1
          %s684 = scalar_lea.sflag [#allocation7], %s683
          %s685 = sand.u32 %s119, 1
          %s686 = scalar_lea.vmem [#allocation8], %s685
          %s688 = ssub.s32 16, 16
          %689 = vsyncadd %s684, %s688
          %s690 = smul.addr %s52, 16
          %s691 = scalar_lea.hbm %s2, %s690
          %s693 = sshll.u32 %s686, 4
          %s694 = int_to_ptr.vmem [resolvable:$true] %s693
          %696 = dma.hbm_to_vmem [thread:$0]  %s691, 16, %s694, %s684
        $region36: #{tpu_custom_call.1} parent=23 // pred_fallthru
          _
        // Predicated region
        $region37: #{tpu_custom_call.1} parent=23 // pred_check
          %p697 = pneg %p155
        $region38: #{tpu_custom_call.1} parent=23 // pred_check_branch
          %699 = sbr.rel (%p697) target = $region40
        $region39: #{tpu_custom_call.1} parent=23 // pred_region
          %p700 = scmp.lt.s32.totalorder %s53, 1
          %s701 = scalar_select %p700, %s53, 1
          %s702 = smul.addr %s701, 4
          %s703 = smul.addr %s702, 4
          %s704 = scalar_lea.vmem %s3, %s703
        $region40: #{tpu_custom_call.1} parent=23 // pred_fallthru
          _
        // Predicated region
        $region41: #{tpu_custom_call.1} parent=23 // pred_check
          %p705 = pneg %p181
        $region42: #{tpu_custom_call.1} parent=23 // pred_check_branch
          %707 = sbr.rel (%p705) target = $region44
        $region43: #{tpu_custom_call.1} parent=23 // pred_region
          %s708 = sand.u32 %s45, 1
          %s709 = scalar_lea.sflag [#allocation10], %s708
          %s710 = sand.u32 %s171, 1
          %s711 = scalar_lea.vmem [#allocation9], %s710
          %s713 = ssub.s32 16, 16
          %714 = vsyncadd %s709, %s713
          %s715 = smul.addr %s53, 16
          %s716 = scalar_lea.hbm %s4, %s715
          %s718 = sshll.u32 %s711, 4
          %s719 = int_to_ptr.vmem [resolvable:$true] %s718
          %721 = dma.hbm_to_vmem [thread:$0]  %s716, 16, %s719, %s709
        $region44: #{tpu_custom_call.1} parent=23 // pred_fallthru
          _
        // Predicated region
        $region45: #{tpu_custom_call.1} parent=23 // pred_check
          %p722 = pneg %p207
        $region46: #{tpu_custom_call.1} parent=23 // pred_check_branch
          %724 = sbr.rel (%p722) target = $region48
        $region47: #{tpu_custom_call.1} parent=23 // pred_region
          %p725 = scmp.lt.s32.totalorder %s53, 1
          %s726 = scalar_select %p725, %s53, 1
          %s727 = smul.addr %s726, 4
          %s728 = smul.addr %s727, 4
          %s729 = scalar_lea.vmem %s5, %s728
        $region48: #{tpu_custom_call.1} parent=23 // pred_fallthru
          _
        // Predicated region
        $region49: #{tpu_custom_call.1} parent=23 // pred_check
          %p730 = pneg %p233
        $region50: #{tpu_custom_call.1} parent=23 // pred_check_branch
          %732 = sbr.rel (%p730) target = $region52
        $region51: #{tpu_custom_call.1} parent=23 // pred_region
          %s733 = sand.u32 %s45, 1
          %s734 = scalar_lea.sflag [#allocation10], %s733
          %s735 = sand.u32 %s223, 1
          %s736 = scalar_lea.vmem [#allocation11], %s735
          %s738 = ssub.s32 16, 16
          %739 = vsyncadd %s734, %s738
          %s740 = smul.addr %s53, 16
          %s741 = scalar_lea.hbm %s6, %s740
          %s743 = sshll.u32 %s736, 4
          %s744 = int_to_ptr.vmem [resolvable:$true] %s743
          %746 = dma.hbm_to_vmem [thread:$0]  %s741, 16, %s744, %s734
        $region52: #{tpu_custom_call.1} parent=23 // pred_fallthru
          _
        // Predicated region
        $region53: #{tpu_custom_call.1} parent=23 // pred_check
          %p747 = pneg %p259
        $region54: #{tpu_custom_call.1} parent=23 // pred_check_branch
          %749 = sbr.rel (%p747) target = $region56
        $region55: #{tpu_custom_call.1} parent=23 // pred_region
          %p750 = scmp.lt.s32.totalorder %s53, 1
          %s751 = scalar_select %p750, %s53, 1
          %s752 = smul.addr %s751, 4
          %s753 = smul.addr %s752, 4
          %s754 = scalar_lea.vmem %s7, %s753
        $region56: #{tpu_custom_call.1} parent=23 // pred_fallthru
          _
        // Predicated region
        $region57: #{tpu_custom_call.1} parent=23 // pred_check
          %p755 = pneg %p285
        $region58: #{tpu_custom_call.1} parent=23 // pred_check_branch
          %757 = sbr.rel (%p755) target = $region60
        $region59: #{tpu_custom_call.1} parent=23 // pred_region
          %p758 = scmp.lt.s32.totalorder %s53, 1
          %s759 = scalar_select %p758, %s53, 1
          %s760 = scalar_lea.vmem %s8, %s759
        $region60: #{tpu_custom_call.1} parent=23 // pred_fallthru
          _
        // Predicated region
        $region61: #{tpu_custom_call.1} parent=23 // pred_check
          %p761 = pneg %p311
        $region62: #{tpu_custom_call.1} parent=23 // pred_check_branch
          %763 = sbr.rel (%p761) target = $region64
        $region63: #{tpu_custom_call.1} parent=23 // pred_region
          %s764 = sand.u32 %s45, 1
          %s765 = scalar_lea.sflag [#allocation13], %s764
          %s766 = sand.u32 %s301, 1
          %s767 = smul.addr %s766, 16
          %s768 = scalar_lea.vmem [#allocation12], %s767
          %s770 = ssub.s32 256, 256
          %771 = vsyncadd %s765, %s770
          %s772 = smul.addr %s53, 4
          %s773 = smul.addr %s772, 64
          %s774 = scalar_lea.hbm %s9, %s773
          %s775 = sshll.u32 %s768, 4
          %s776 = int_to_ptr.vmem [resolvable:$true] %s775
          %781 = dma.hbm_to_vmem [thread:$0]  %s774, 256, %s776, %s765, 64, 64, 4
        $region64: #{tpu_custom_call.1} parent=23 // pred_fallthru
          _
        // Predicated region
        $region65: #{tpu_custom_call.1} parent=23 // pred_check
          %p782 = pneg %p337
        $region66: #{tpu_custom_call.1} parent=23 // pred_check_branch
          %784 = sbr.rel (%p782) target = $region68
        $region67: #{tpu_custom_call.1} parent=23 // pred_region
          %p785 = scmp.lt.s32.totalorder %s53, 1
          %s786 = scalar_select %p785, %s53, 1
          %s787 = scalar_lea.vmem %s10, %s786
        $region68: #{tpu_custom_call.1} parent=23 // pred_fallthru
          _
        // Predicated region
        $region69: #{tpu_custom_call.1} parent=23 // pred_check
          %p788 = pneg %p363
        $region70: #{tpu_custom_call.1} parent=23 // pred_check_branch
          %790 = sbr.rel (%p788) target = $region72
        $region71: #{tpu_custom_call.1} parent=23 // pred_region
          %s791 = sand.u32 %s45, 1
          %s792 = scalar_lea.sflag [#allocation13], %s791
          %s793 = sand.u32 %s353, 1
          %s794 = smul.addr %s793, 16
          %s795 = scalar_lea.vmem [#allocation14], %s794
          %s797 = ssub.s32 256, 256
          %798 = vsyncadd %s792, %s797
          %s799 = smul.addr %s53, 4
          %s800 = smul.addr %s799, 64
          %s801 = scalar_lea.hbm %s11, %s800
          %s802 = sshll.u32 %s795, 4
          %s803 = int_to_ptr.vmem [resolvable:$true] %s802
          %808 = dma.hbm_to_vmem [thread:$0]  %s801, 256, %s803, %s792, 64, 64, 4
        $region72: #{tpu_custom_call.1} parent=23 // pred_fallthru
          _
        // Predicated region
        $region73: #{tpu_custom_call.1} parent=23 // pred_check
          %p809 = pneg %p389
        $region74: #{tpu_custom_call.1} parent=23 // pred_check_branch
          %811 = sbr.rel (%p809) target = $region76
        $region75: #{tpu_custom_call.1} parent=23 // pred_region
          %p812 = scmp.lt.s32.totalorder %s53, 1
          %s813 = scalar_select %p812, %s53, 1
          %s814 = scalar_lea.vmem %s12, %s813
        $region76: #{tpu_custom_call.1} parent=23 // pred_fallthru
          _
        // Predicated region
        $region77: #{tpu_custom_call.1} parent=23 // pred_check
          %p815 = pneg %p415
        $region78: #{tpu_custom_call.1} parent=23 // pred_check_branch
          %817 = sbr.rel (%p815) target = $region80
        $region79: #{tpu_custom_call.1} parent=23 // pred_region
          %s818 = sand.u32 %s405, 1
          %s819 = scalar_lea.sflag [#allocation16], %s818
          %s820 = sand.u32 %s405, 1
          %s821 = smul.addr %s820, 16
          %s822 = scalar_lea.vmem [#allocation15], %s821
          %s824 = ssub.s32 256, 256
          %825 = vsyncadd %s819, %s824
          %s826 = smul.addr %s53, 4
          %s827 = smul.addr %s826, 64
          %s828 = scalar_lea.hbm %s13, %s827
          %s829 = sshll.u32 %s822, 4
          %s830 = int_to_ptr.vmem [resolvable:$true] %s829
          %835 = dma.hbm_to_vmem [thread:$0]  %s828, 256, %s830, %s819, 64, 64, 4
        $region80: #{tpu_custom_call.1} parent=23 // pred_fallthru
          _
        // Predicated region
        $region81: #{tpu_custom_call.1} parent=23 // pred_check
          %p836 = pneg %p441
        $region82: #{tpu_custom_call.1} parent=23 // pred_check_branch
          %838 = sbr.rel (%p836) target = $region84
        $region83: #{tpu_custom_call.1} parent=23 // pred_region
          %p839 = scmp.lt.s32.totalorder %s53, 1
          %s840 = scalar_select %p839, %s53, 1
          %s841 = scalar_lea.vmem %s14, %s840
        $region84: #{tpu_custom_call.1} parent=23 // pred_fallthru
          _
        // Predicated region
        $region85: #{tpu_custom_call.1} parent=23 // pred_check
          %p842 = pneg %p467
        $region86: #{tpu_custom_call.1} parent=23 // pred_check_branch
          %844 = sbr.rel (%p842) target = $region88
        $region87: #{tpu_custom_call.1} parent=23 // pred_region
          %p845 = scmp.lt.s32.totalorder %s53, 1
          %s846 = scalar_select %p845, %s53, 1
          %s847 = smul.addr %s846, 8
          %s848 = smul.addr %s847, 4
          %s849 = scalar_lea.vmem %s15, %s848
        $region88: #{tpu_custom_call.1} parent=23 // pred_fallthru
          _
        // Predicated region
        $region89: #{tpu_custom_call.1} parent=23 // pred_check
          %p850 = pneg %p493
        $region90: #{tpu_custom_call.1} parent=23 // pred_check_branch
          %852 = sbr.rel (%p850) target = $region92
        $region91: #{tpu_custom_call.1} parent=23 // pred_region
          %p853 = scmp.lt.s32.totalorder %s53, 1
          %s854 = scalar_select %p853, %s53, 1
          %s855 = scalar_lea.vmem %s16, %s854
        $region92: #{tpu_custom_call.1} parent=23 // pred_fallthru
          _
        // Predicated region
        $region93: #{tpu_custom_call.1} parent=23 // pred_check
          %p856 = pneg %p519
        $region94: #{tpu_custom_call.1} parent=23 // pred_check_branch
          %858 = sbr.rel (%p856) target = $region96
        $region95: #{tpu_custom_call.1} parent=23 // pred_region
          %s859 = smul.u32 3, %s53
          %p860 = scmp.lt.s32.totalorder %s859, 5
          %s861 = scalar_select %p860, %s859, 5
          %s862 = scalar_lea.vmem %s17, %s861
          %s863 = smul.u32 3, %s53
        $region96: #{tpu_custom_call.1} parent=23 // pred_fallthru
          _
        // Predicated region
        $region97: #{tpu_custom_call.1} parent=23 // pred_check
          %p864 = pneg %p545
        $region98: #{tpu_custom_call.1} parent=23 // pred_check_branch
          %866 = sbr.rel (%p864) target = $region100
        $region99: #{tpu_custom_call.1} parent=23 // pred_region
          %s867 = smul.u32 3, %s53
          %p868 = scmp.lt.s32.totalorder %s867, 5
          %s869 = scalar_select %p868, %s867, 5
          %s870 = scalar_lea.vmem %s18, %s869
          %s871 = smul.u32 3, %s53
        $region100: #{tpu_custom_call.1} parent=23 // pred_fallthru
          _
      $region24: #{tpu_custom_call.1} parent=5 // pred_fallthru
        _
      %p872 = scmp.le.s32.totalorder 1, %s45
      %p873 = scmp.lt.s32.totalorder %s45, 5
      %p874 = pnand %p872, %p873
      %p875 = pneg %p874
      // Predicated region
      $region101: #{tpu_custom_call.1} parent=5 // pred_check
        _
      $region102: #{tpu_custom_call.1} parent=5 // pred_check_branch
        %877 = sbr.rel (%p874) target = $region104
      $region103: #{tpu_custom_call.1} parent=5 // pred_region
        %s878 = ssub.s32 %s45, 1
        %s879 = sand.u32 %s70, 1
        %s880 = scalar_lea.sflag [#allocation4], %s879
        %s881 = sand.u32 %s70, 1
        %s882 = smul.addr %s881, 8
        %s883 = scalar_lea.vmem [#allocation3], %s882
        // Predicated region
        $region105: #{tpu_custom_call.1} parent=103 // pred_check
          %p884 = pneg %p83
        $region106: #{tpu_custom_call.1} parent=103 // pred_check_branch
          %886 = sbr.rel (%p884) target = $region108
        $region107: #{tpu_custom_call.1} parent=103 // pred_region
          %887 = dma.done %s880, 128
        $region108: #{tpu_custom_call.1} parent=103 // pred_fallthru
          _
        %s888 = sand.u32 %s50, 1
        %s889 = scalar_lea.sflag [#allocation7], %s888
        %s890 = sand.u32 %s96, 1
        %s891 = smul.addr %s890, 8
        %s892 = scalar_lea.vmem [#allocation6], %s891
        // Predicated region
        $region109: #{tpu_custom_call.1} parent=103 // pred_check
          %p893 = pneg %p109
        $region110: #{tpu_custom_call.1} parent=103 // pred_check_branch
          %895 = sbr.rel (%p893) target = $region112
        $region111: #{tpu_custom_call.1} parent=103 // pred_region
          %896 = dma.done %s889, 128
        $region112: #{tpu_custom_call.1} parent=103 // pred_fallthru
          _
        %s897 = sand.u32 %s50, 1
        %s898 = scalar_lea.sflag [#allocation7], %s897
        %s899 = sand.u32 %s122, 1
        %s900 = scalar_lea.vmem [#allocation8], %s899
        // Predicated region
        $region113: #{tpu_custom_call.1} parent=103 // pred_check
          %p901 = pneg %p135
        $region114: #{tpu_custom_call.1} parent=103 // pred_check_branch
          %903 = sbr.rel (%p901) target = $region116
        $region115: #{tpu_custom_call.1} parent=103 // pred_region
          %904 = dma.done %s898, 16
        $region116: #{tpu_custom_call.1} parent=103 // pred_fallthru
          _
        %s905 = sand.u32 %s50, 1
        %s906 = scalar_lea.sflag [#allocation10], %s905
        %s907 = sand.u32 %s174, 1
        %s908 = scalar_lea.vmem [#allocation9], %s907
        // Predicated region
        $region117: #{tpu_custom_call.1} parent=103 // pred_check
          %p909 = pneg %p187
        $region118: #{tpu_custom_call.1} parent=103 // pred_check_branch
          %911 = sbr.rel (%p909) target = $region120
        $region119: #{tpu_custom_call.1} parent=103 // pred_region
          %912 = dma.done %s906, 16
        $region120: #{tpu_custom_call.1} parent=103 // pred_fallthru
          _
        %s913 = sand.u32 %s50, 1
        %s914 = scalar_lea.sflag [#allocation10], %s913
        %s915 = sand.u32 %s226, 1
        %s916 = scalar_lea.vmem [#allocation11], %s915
        // Predicated region
        $region121: #{tpu_custom_call.1} parent=103 // pred_check
          %p917 = pneg %p239
        $region122: #{tpu_custom_call.1} parent=103 // pred_check_branch
          %919 = sbr.rel (%p917) target = $region124
        $region123: #{tpu_custom_call.1} parent=103 // pred_region
          %920 = dma.done %s914, 16
        $region124: #{tpu_custom_call.1} parent=103 // pred_fallthru
          _
        %s921 = sand.u32 %s50, 1
        %s922 = scalar_lea.sflag [#allocation13], %s921
        %s923 = sand.u32 %s304, 1
        %s924 = smul.addr %s923, 16
        %s925 = scalar_lea.vmem [#allocation12], %s924
        // Predicated region
        $region125: #{tpu_custom_call.1} parent=103 // pred_check
          %p926 = pneg %p317
        $region126: #{tpu_custom_call.1} parent=103 // pred_check_branch
          %928 = sbr.rel (%p926) target = $region128
        $region127: #{tpu_custom_call.1} parent=103 // pred_region
          %929 = dma.done %s922, 256
        $region128: #{tpu_custom_call.1} parent=103 // pred_fallthru
          _
        %s930 = sand.u32 %s50, 1
        %s931 = scalar_lea.sflag [#allocation13], %s930
        %s932 = sand.u32 %s356, 1
        %s933 = smul.addr %s932, 16
        %s934 = scalar_lea.vmem [#allocation14], %s933
        // Predicated region
        $region129: #{tpu_custom_call.1} parent=103 // pred_check
          %p935 = pneg %p369
        $region130: #{tpu_custom_call.1} parent=103 // pred_check_branch
          %937 = sbr.rel (%p935) target = $region132
        $region131: #{tpu_custom_call.1} parent=103 // pred_region
          %938 = dma.done %s931, 256
        $region132: #{tpu_custom_call.1} parent=103 // pred_fallthru
          _
        %s939 = sand.u32 %s408, 1
        %s940 = scalar_lea.sflag [#allocation16], %s939
        %s941 = sand.u32 %s408, 1
        %s942 = smul.addr %s941, 16
        %s943 = scalar_lea.vmem [#allocation15], %s942
        // Predicated region
        $region133: #{tpu_custom_call.1} parent=103 // pred_check
          %p944 = pneg %p421
        $region134: #{tpu_custom_call.1} parent=103 // pred_check_branch
          %946 = sbr.rel (%p944) target = $region136
        $region135: #{tpu_custom_call.1} parent=103 // pred_region
          %947 = dma.done %s940, 256
        $region136: #{tpu_custom_call.1} parent=103 // pred_fallthru
          _
        %s948 = sand.u32 %s70, 1
        %s949 = scalar_lea.sflag [#allocation4], %s948
        %s950 = sand.u32 %s70, 1
        %s951 = smul.addr %s950, 8
        %s952 = scalar_lea.vmem [#allocation3], %s951
        %p953 = pneg %p83
        %p954 = pneg %p80
        %s955 = sand.u32 %s50, 1
        %s956 = scalar_lea.sflag [#allocation7], %s955
        %s957 = sand.u32 %s96, 1
        %s958 = smul.addr %s957, 8
        %s959 = scalar_lea.vmem [#allocation6], %s958
        %p960 = pneg %p109
        %p961 = pneg %p106
        %s962 = sand.u32 %s50, 1
        %s963 = scalar_lea.sflag [#allocation7], %s962
        %s964 = sand.u32 %s122, 1
        %s965 = scalar_lea.vmem [#allocation8], %s964
        %p966 = pneg %p135
        %p967 = pneg %p132
        %p968 = scmp.lt.s32.totalorder %s55, 1
        %s969 = scalar_select %p968, %s55, 1
        %s970 = smul.addr %s969, 4
        %s971 = smul.addr %s970, 4
        %s972 = scalar_lea.vmem %s3, %s971
        %p973 = pneg %p161
        %p974 = pneg %p158
        %s975 = sand.u32 %s50, 1
        %s976 = scalar_lea.sflag [#allocation10], %s975
        %s977 = sand.u32 %s174, 1
        %s978 = scalar_lea.vmem [#allocation9], %s977
        %p979 = pneg %p187
        %p980 = pneg %p184
        %p981 = scmp.lt.s32.totalorder %s55, 1
        %s982 = scalar_select %p981, %s55, 1
        %s983 = smul.addr %s982, 4
        %s984 = smul.addr %s983, 4
        %s985 = scalar_lea.vmem %s5, %s984
        %p986 = pneg %p213
        %p987 = pneg %p210
        %s988 = sand.u32 %s50, 1
        %s989 = scalar_lea.sflag [#allocation10], %s988
        %s990 = sand.u32 %s226, 1
        %s991 = scalar_lea.vmem [#allocation11], %s990
        %p992 = pneg %p239
        %p993 = pneg %p236
        %p994 = scmp.lt.s32.totalorder %s55, 1
        %s995 = scalar_select %p994, %s55, 1
        %s996 = smul.addr %s995, 4
        %s997 = smul.addr %s996, 4
        %s998 = scalar_lea.vmem %s7, %s997
        %p999 = pneg %p265
        %p1000 = pneg %p262
        %p1001 = scmp.lt.s32.totalorder %s55, 1
        %s1002 = scalar_select %p1001, %s55, 1
        %s1003 = scalar_lea.vmem %s8, %s1002
        %p1004 = pneg %p291
        %p1005 = pneg %p288
        %s1006 = sand.u32 %s50, 1
        %s1007 = scalar_lea.sflag [#allocation13], %s1006
        %s1008 = sand.u32 %s304, 1
        %s1009 = smul.addr %s1008, 16
        %s1010 = scalar_lea.vmem [#allocation12], %s1009
        %p1011 = pneg %p317
        %p1012 = pneg %p314
        %p1013 = scmp.lt.s32.totalorder %s55, 1
        %s1014 = scalar_select %p1013, %s55, 1
        %s1015 = scalar_lea.vmem %s10, %s1014
        %p1016 = pneg %p343
        %p1017 = pneg %p340
        %s1018 = sand.u32 %s50, 1
        %s1019 = scalar_lea.sflag [#allocation13], %s1018
        %s1020 = sand.u32 %s356, 1
        %s1021 = smul.addr %s1020, 16
        %s1022 = scalar_lea.vmem [#allocation14], %s1021
        %p1023 = pneg %p369
        %p1024 = pneg %p366
        %p1025 = scmp.lt.s32.totalorder %s55, 1
        %s1026 = scalar_select %p1025, %s55, 1
        %s1027 = scalar_lea.vmem %s12, %s1026
        %p1028 = pneg %p395
        %p1029 = pneg %p392
        %s1030 = sand.u32 %s408, 1
        %s1031 = scalar_lea.sflag [#allocation16], %s1030
        %s1032 = sand.u32 %s408, 1
        %s1033 = smul.addr %s1032, 16
        %s1034 = scalar_lea.vmem [#allocation15], %s1033
        %p1035 = pneg %p421
        %p1036 = pneg %p418
        %p1037 = scmp.lt.s32.totalorder %s55, 1
        %s1038 = scalar_select %p1037, %s55, 1
        %s1039 = scalar_lea.vmem %s14, %s1038
        %p1040 = pneg %p447
        %p1041 = pneg %p444
        %p1042 = scmp.lt.s32.totalorder %s55, 1
        %s1043 = scalar_select %p1042, %s55, 1
        %s1044 = smul.addr %s1043, 8
        %s1045 = smul.addr %s1044, 4
        %s1046 = scalar_lea.vmem %s15, %s1045
        %p1047 = pneg %p473
        %p1048 = pneg %p470
        %p1049 = scmp.lt.s32.totalorder %s55, 1
        %s1050 = scalar_select %p1049, %s55, 1
        %s1051 = scalar_lea.vmem %s16, %s1050
        %p1052 = pneg %p499
        %p1053 = pneg %p496
        %s1054 = smul.u32 3, %s55
        %p1055 = scmp.lt.s32.totalorder %s1054, 5
        %s1056 = scalar_select %p1055, %s1054, 5
        %s1057 = scalar_lea.vmem %s17, %s1056
        %p1058 = pneg %p525
        %p1059 = pneg %p522
        %s1060 = smul.u32 3, %s55
        %p1061 = scmp.lt.s32.totalorder %s1060, 5
        %s1062 = scalar_select %p1061, %s1060, 5
        %s1063 = scalar_lea.vmem %s18, %s1062
        %p1064 = pneg %p551
        %p1065 = pneg %p548
        %p1066 = pneg %p572
        %p1067 = pneg %p569
        %p1068 = pneg %p593
        %p1069 = pneg %p590
        %p1070 = pneg %p619
        %p1071 = pneg %p616
        %s1072 = sand.u32 %s606, 1
        %s1073 = scalar_lea.sflag [#allocation5], %s1072
        %s1074 = sand.u32 %s606, 1
        %s1075 = smul.addr %s1074, 8
        %s1076 = scalar_lea.vmem [#allocation17], %s1075
        %p1077 = scmp.lt.s32.totalorder %s55, 1
        %s1078 = scalar_select %p1077, %s55, 1
        %s1079 = smul.addr %s1078, 4
        %s1080 = smul.addr %s1079, 4
        %s1081 = scalar_lea.vmem %s3, %s1080
        %p1082 = scmp.lt.s32.totalorder %s55, 1
        %s1083 = scalar_select %p1082, %s55, 1
        %s1084 = smul.addr %s1083, 4
        %s1085 = smul.addr %s1084, 4
        %s1086 = scalar_lea.vmem %s5, %s1085
        %p1087 = scmp.lt.s32.totalorder %s55, 1
        %s1088 = scalar_select %p1087, %s55, 1
        %s1089 = smul.addr %s1088, 4
        %s1090 = smul.addr %s1089, 4
        %s1091 = scalar_lea.vmem %s7, %s1090
        %p1092 = scmp.lt.s32.totalorder %s55, 1
        %s1093 = scalar_select %p1092, %s55, 1
        %s1094 = scalar_lea.vmem %s8, %s1093
        %p1095 = scmp.lt.s32.totalorder %s55, 1
        %s1096 = scalar_select %p1095, %s55, 1
        %s1097 = scalar_lea.vmem %s10, %s1096
        %p1098 = scmp.lt.s32.totalorder %s55, 1
        %s1099 = scalar_select %p1098, %s55, 1
        %s1100 = scalar_lea.vmem %s12, %s1099
        %p1101 = scmp.lt.s32.totalorder %s55, 1
        %s1102 = scalar_select %p1101, %s55, 1
        %s1103 = scalar_lea.vmem %s14, %s1102
        %p1104 = scmp.lt.s32.totalorder %s55, 1
        %s1105 = scalar_select %p1104, %s55, 1
        %s1106 = smul.addr %s1105, 8
        %s1107 = smul.addr %s1106, 4
        %s1108 = scalar_lea.vmem %s15, %s1107
        %p1109 = scmp.lt.s32.totalorder %s55, 1
        %s1110 = scalar_select %p1109, %s55, 1
        %s1111 = scalar_lea.vmem %s16, %s1110
        %s1112 = smul.u32 3, %s55
        %p1113 = scmp.lt.s32.totalorder %s1112, 5
        %s1114 = scalar_select %p1113, %s1112, 5
        %s1115 = scalar_lea.vmem %s17, %s1114
        %s1116 = smul.u32 3, %s55
        %s1117 = smul.u32 3, %s55
        %p1118 = scmp.lt.s32.totalorder %s1117, 5
        %s1119 = scalar_select %p1118, %s1117, 5
        %s1120 = scalar_lea.vmem %s18, %s1119
        %s1121 = smul.u32 3, %s55
        %p1123 = scmp.eq.s32.totalorder %s55, 0
        // Predicated region
        $region137: #{tpu_custom_call.1} parent=103 // pred_check
          %p1124 = pneg %p1123
        $region138: #{tpu_custom_call.1} parent=103 // pred_check_branch
          %1126 = sbr.rel (%p1124) target = $region140
        $region139: #{tpu_custom_call.1} parent=103 // pred_region
          %v1127 = vld [vmem:[%s883] sm:$0xff]
          %vm1128 = vcmask 261120
          %1129 = vst.msk [vmem:[#allocation2] sm:$0xff] %vm1128, %v1127
        $region140: #{tpu_custom_call.1} parent=103 // pred_fallthru
          _
        %v1130 = vld [vmem:[#allocation2] sm:$0xff]
        %v1131 = vld [vmem:[%s892] sm:$0xff]
        %v1132 = vld [vmem:[%s900] sm:$0x1]
        %vm1133 = vcmp.gt.f32.partialorder %v1132, 0.5
        %v1134 = vlaneseq
        %v1135 = vshrl.u32 %v1134, 7
        %v1136 = vadd.s32 %v1135, 8
        %v1137 = vadd.s32 %v1135, 16
        %v1138 = vadd.s32 %v1135, 24
        %v1139 = vlaneseq
        %v1140 = vand.u32 %v1139, 127
        %vm1141 = vcmp.lt.s32.totalorder %v1135, 0
        %v1142 = vsub.s32 0, %v1135
        %v1143 = vsel %vm1141, %v1142, %v1135
        %v1144 = vshrl.u32 %v1143, 3
        %v1145 = vand.u32 %v1143, 7
        %v1146 = vsub.s32 0, %v1145
        %v1147 = vsel %vm1141, %v1146, %v1145
        %vm1148 = vcmp.lt.s32.totalorder %v1136, 0
        %v1149 = vsub.s32 0, %v1136
        %v1150 = vsel %vm1148, %v1149, %v1136
        %v1151 = vshrl.u32 %v1150, 3
        %v1152 = vand.u32 %v1150, 7
        %v1153 = vsub.s32 0, %v1152
        %v1154 = vsel %vm1148, %v1153, %v1152
        %vm1155 = vcmp.lt.s32.totalorder %v1137, 0
        %v1156 = vsub.s32 0, %v1137
        %v1157 = vsel %vm1155, %v1156, %v1137
        %v1158 = vshrl.u32 %v1157, 3
        %v1159 = vand.u32 %v1157, 7
        %v1160 = vsub.s32 0, %v1159
        %v1161 = vsel %vm1155, %v1160, %v1159
        %vm1162 = vcmp.lt.s32.totalorder %v1138, 0
        %v1163 = vsub.s32 0, %v1138
        %v1164 = vsel %vm1162, %v1163, %v1138
        %v1165 = vshrl.u32 %v1164, 3
        %v1166 = vand.u32 %v1164, 7
        %v1167 = vsub.s32 0, %v1166
        %v1168 = vsel %vm1162, %v1167, %v1166
        %vm1169 = vcmp.ne.s32.totalorder %v1147, 0
        %vm1170 = vcmp.ne.s32.totalorder %v1154, 0
        %vm1171 = vcmp.ne.s32.totalorder %v1161, 0
        %vm1172 = vcmp.ne.s32.totalorder %v1168, 0
        %vm1173 = vcmp.lt.s32.totalorder %v1147, 0
        %vm1174 = vcmp.lt.s32.totalorder %v1154, 0
        %vm1175 = vcmp.lt.s32.totalorder %v1161, 0
        %vm1176 = vcmp.lt.s32.totalorder %v1168, 0
        %vm1177 = vmand %vm1173, %vm1169
        %vm1178 = vmand %vm1174, %vm1170
        %vm1179 = vmand %vm1175, %vm1171
        %vm1180 = vmand %vm1176, %vm1172
        %v1181 = vadd.s32 %v1147, 8
        %v1182 = vadd.s32 %v1154, 8
        %v1183 = vadd.s32 %v1161, 8
        %v1184 = vadd.s32 %v1168, 8
        %v1185 = vsel %vm1177, %v1181, %v1147
        %v1186 = vsel %vm1178, %v1182, %v1154
        %v1187 = vsel %vm1179, %v1183, %v1161
        %v1188 = vsel %vm1180, %v1184, %v1168
        %vm1189 = vcmp.ge.s32.totalorder %v1185, %v1140
        %vm1190 = vcmp.ge.s32.totalorder %v1186, %v1140
        %vm1191 = vcmp.ge.s32.totalorder %v1187, %v1140
        %vm1192 = vcmp.ge.s32.totalorder %v1188, %v1140
        %v1193 = vld [vmem:[%s1115] sm:$0x1]
        %v1194 = vld [vmem:[%s1120] sm:$0x1]
        %vm1195 = vcmask 261120
        %v1196 = vsel %vm1195, %v1130, 0.0
        %1197 = vadd.xlane.f32.xlu0 %v1196
        %v1198 = vpop.xlane.xlu0 %1197
        %v1199 = vrcp.pop 32.0
        %v1200 = vmul.f32 %v1198, %v1199
        %v1201 = vsub.f32 %v1130, %v1200
        %v1202 = vmul.f32 %v1201, %v1201
        %v1203 = vsel %vm1195, %v1202, 0.0
        %1204 = vadd.xlane.f32.xlu0 %v1203
        %v1205 = vpop.xlane.xlu0 %1204
        %v1206 = vrcp.pop 31.0
        %v1207 = vmul.f32 %v1205, %v1206
        %v1208 = vrsqrt.pop %v1207
        %v1209 = vmul.f32 %v1207, %v1208
        %vm1210 = vcmp.eq.f32.partialorder %v1207, inf
        %v1211 = vsel %vm1210, %v1207, %v1209
        %vm1212 = vcmp.eq.f32.partialorder %v1207, 0.0
        %v1213 = vand.u32 %v1207, 2147483648
        %v1214 = vsel %vm1212, %v1213, %v1211
        %v1215 = vadd.f32 %v1214, 1e-06
        %v1216 = vrcp.pop %v1215
        %v1218 = vlaneseq
        %v1219 = vshrl.u32 %v1218, 7
        %v1220 = vsub.s32 0, %v1219
        %v1221 = vrot.slane %v1193, %v1220
        %v1223 = vmul.f32 %v1221, %v1201
        %v1224 = vmul.f32 %v1223, %v1216
        %v1226 = vlaneseq
        %v1227 = vshrl.u32 %v1226, 7
        %v1228 = vsub.s32 0, %v1227
        %v1229 = vrot.slane %v1194, %v1228
        %v1231 = vadd.f32 %v1224, %v1229
        %v1232 = vpack.c.bf16 %v1231, %v1231
        %v1233 = vld [vmem:[%s1081] sm:$0xf]
        %v1234 = vld [vmem:[%s1081 + $0x4] sm:$0xf]
        %v1235 = vld [vmem:[%s1081 + $0x8] sm:$0xf]
        %v1236 = vld [vmem:[%s1081 + $0xc] sm:$0xf]
        %v1237 = vld [vmem:[%s908] sm:$0x1]
        %v1239 = vlaneseq
        %v1240 = vshrl.u32 %v1239, 7
        %v1241 = vsub.s32 0, %v1240
        %v1242 = vrot.slane %v1237, %v1241
        %v1248 = vunpack.c.l.b16 %v1233
        %v1249 = vunpack.c.l.b16 %v1234
        %v1250 = vunpack.c.l.b16 %v1235
        %v1251 = vunpack.c.l.b16 %v1236
        %v1252 = vpack.c.b16 %v1249, %v1248
        %v1253 = vpack.c.b16 %v1251, %v1250
        %v1257 = vsel %vm1195, %v1232, 0
        %1259 = vmatprep.subr.bf16.mxu0 0
        %1260 = vmatpush1.bf16.msra.mxu0 0
        %1261 = vmatprep.subr.bf16.mxu0 0
        %1262 = vmatpush1.bf16.msra.mxu0 0
        %1263 = vmatprep.subr.bf16.mxu0 0
        %1264 = vmatpush1.bf16.msra.mxu0 0
        %1265 = vmatprep.subr.bf16.mxu0 0
        %1266 = vmatpush1.bf16.msra.mxu0 0
        %1267 = vmatprep.subr.bf16.mxu0 0
        %1268 = vmatpush1.bf16.msra.mxu0 0
        %1269 = vmatprep.subr.bf16.mxu0 0
        %1270 = vmatpush1.bf16.msra.mxu0 0
        %1271 = vmatprep.subr.bf16.mxu0 0
        %1272 = vmatpush1.bf16.msra.mxu0 %v1253
        %1273 = vmatprep.subr.bf16.mxu0 0
        %1274 = vmatpush1.bf16.msra.mxu0 %v1252
        %1275 = vmatprep.subr.bf16.mxu0 0
        %1276 = vmatpush2.bf16.msra.mxu0 0
        %1277 = vmatprep.subr.bf16.mxu0 0
        %1278 = vmatpush2.bf16.msra.mxu0 0
        %1279 = vmatprep.subr.bf16.mxu0 0
        %1280 = vmatpush2.bf16.msra.mxu0 0
        %1281 = vmatprep.subr.bf16.mxu0 0
        %1282 = vmatpush2.bf16.msra.mxu0 0
        %1283 = vmatprep.subr.bf16.mxu0 0
        %1284 = vmatpush2.bf16.msra.mxu0 0
        %1285 = vmatprep.subr.bf16.mxu0 0
        %1286 = vmatpush2.bf16.msra.mxu0 0
        %1287 = vmatprep.subr.bf16.mxu0 0
        %1288 = vmatpush2.bf16.msra.mxu0 0
        %1289 = vmatprep.subr.bf16.mxu0 0
        %1290 = vmatpush2.bf16.msra.mxu0 0
        %1291 = vmatprep.mubr.bf16.mxu0 0
        %1292 = vmatmul.mubr.bf16.gmra.mxu0 %v1257
        %v1293 = vpop.f32.mrf.mxu0
        %v1294 = vadd.f32 %v1242, %v1293
        %v1295 = vpop.f32.mrf.mxu0
        %v1296 = vpop.f32.mrf.mxu0
        %v1297 = vpop.f32.mrf.mxu0
        %1298 = vdwg.mxu0
        %v1299 = vpack.c.bf16 %v1294, %v1294
        %1301 = vrot.lane.b32.xlu0 %v1299, 96
        %v1302 = vpop.permute.xlu0 %1301
        %vm1303 = vcmask 64512
        %v1305 = vsel %vm1303, %v1299, 0
        %v1308 = vsel %vm1303, %v1302, 0
        %1310 = vmatprep.subr.bf16.mxu0 0
        %1311 = vmatpush1.bf16.xpose.msra.mxu0 0
        %1312 = vmatprep.subr.bf16.mxu0 0
        %1313 = vmatpush1.bf16.xpose.msra.mxu0 0
        %1314 = vmatprep.subr.bf16.mxu0 0
        %1315 = vmatpush1.bf16.xpose.msra.mxu0 0
        %1316 = vmatprep.subr.bf16.mxu0 0
        %1317 = vmatpush1.bf16.xpose.msra.mxu0 0
        %1318 = vmatprep.subr.bf16.mxu0 0
        %1319 = vmatpush1.bf16.xpose.msra.mxu0 0
        %1320 = vmatprep.subr.bf16.mxu0 0
        %1321 = vmatpush1.bf16.xpose.msra.mxu0 0
        %1322 = vmatprep.subr.bf16.mxu0 0
        %1323 = vmatpush1.bf16.xpose.msra.mxu0 0
        %1324 = vmatprep.subr.bf16.mxu0 0
        %1325 = vmatpush1.bf16.xpose.msra.mxu0 %v1308
        %1326 = vmatprep.subr.bf16.mxu0 0
        %1327 = vmatpush2.bf16.xpose.msra.mxu0 0
        %1328 = vmatprep.subr.bf16.mxu0 0
        %1329 = vmatpush2.bf16.xpose.msra.mxu0 0
        %1330 = vmatprep.subr.bf16.mxu0 0
        %1331 = vmatpush2.bf16.xpose.msra.mxu0 0
        %1332 = vmatprep.subr.bf16.mxu0 0
        %1333 = vmatpush2.bf16.xpose.msra.mxu0 0
        %1334 = vmatprep.subr.bf16.mxu0 0
        %1335 = vmatpush2.bf16.xpose.msra.mxu0 0
        %1336 = vmatprep.subr.bf16.mxu0 0
        %1337 = vmatpush2.bf16.xpose.msra.mxu0 0
        %1338 = vmatprep.subr.bf16.mxu0 0
        %1339 = vmatpush2.bf16.xpose.msra.mxu0 0
        %1340 = vmatprep.subr.bf16.mxu0 0
        %1341 = vmatpush2.bf16.xpose.msra.mxu0 0
        %1342 = vmatprep.mubr.bf16.mxu0 0
        %1343 = vmatmul.mubr.bf16.gmra.mxu0 %v1305
        %v1344 = vpop.f32.mrf.mxu0
        %v1345 = vadd.f32 0.0, %v1344
        %v1346 = vpop.f32.mrf.mxu0
        %v1347 = vpop.f32.mrf.mxu0
        %v1348 = vpop.f32.mrf.mxu0
        %1349 = vdwg.mxu0
        %1350 = vrot.lane.b32.xlu0 %v1299, 120
        %v1351 = vpop.permute.xlu0 %1350
        %1352 = vrot.lane.b32.xlu0 %v1299, 88
        %v1353 = vpop.permute.xlu0 %1352
        %v1355 = vsel %vm1303, %v1351, 0
        %v1358 = vsel %vm1303, %v1353, 0
        %1360 = vmatprep.subr.bf16.mxu0 0
        %1361 = vmatpush1.bf16.xpose.msra.mxu0 0
        %1362 = vmatprep.subr.bf16.mxu0 0
        %1363 = vmatpush1.bf16.xpose.msra.mxu0 0
        %1364 = vmatprep.subr.bf16.mxu0 0
        %1365 = vmatpush1.bf16.xpose.msra.mxu0 0
        %1366 = vmatprep.subr.bf16.mxu0 0
        %1367 = vmatpush1.bf16.xpose.msra.mxu0 0
        %1368 = vmatprep.subr.bf16.mxu0 0
        %1369 = vmatpush1.bf16.xpose.msra.mxu0 0
        %1370 = vmatprep.subr.bf16.mxu0 0
        %1371 = vmatpush1.bf16.xpose.msra.mxu0 0
        %1372 = vmatprep.subr.bf16.mxu0 0
        %1373 = vmatpush1.bf16.xpose.msra.mxu0 0
        %1374 = vmatprep.subr.bf16.mxu0 0
        %1375 = vmatpush1.bf16.xpose.msra.mxu0 %v1358
        %1376 = vmatprep.subr.bf16.mxu0 0
        %1377 = vmatpush2.bf16.xpose.msra.mxu0 0
        %1378 = vmatprep.subr.bf16.mxu0 0
        %1379 = vmatpush2.bf16.xpose.msra.mxu0 0
        %1380 = vmatprep.subr.bf16.mxu0 0
        %1381 = vmatpush2.bf16.xpose.msra.mxu0 0
        %1382 = vmatprep.subr.bf16.mxu0 0
        %1383 = vmatpush2.bf16.xpose.msra.mxu0 0
        %1384 = vmatprep.subr.bf16.mxu0 0
        %1385 = vmatpush2.bf16.xpose.msra.mxu0 0
        %1386 = vmatprep.subr.bf16.mxu0 0
        %1387 = vmatpush2.bf16.xpose.msra.mxu0 0
        %1388 = vmatprep.subr.bf16.mxu0 0
        %1389 = vmatpush2.bf16.xpose.msra.mxu0 0
        %1390 = vmatprep.subr.bf16.mxu0 0
        %1391 = vmatpush2.bf16.xpose.msra.mxu0 0
        %1392 = vmatprep.mubr.bf16.mxu0 0
        %1393 = vmatmul.mubr.bf16.gmra.mxu0 %v1355
        %v1394 = vpop.f32.mrf.mxu0
        %v1395 = vadd.f32 0.0, %v1394
        %v1396 = vpop.f32.mrf.mxu0
        %v1397 = vpop.f32.mrf.mxu0
        %v1398 = vpop.f32.mrf.mxu0
        %1399 = vdwg.mxu0
        %1400 = vrot.lane.b32.xlu0 %v1299, 112
        %v1401 = vpop.permute.xlu0 %1400
        %1402 = vrot.lane.b32.xlu0 %v1299, 80
        %v1403 = vpop.permute.xlu0 %1402
        %v1405 = vsel %vm1303, %v1401, 0
        %v1408 = vsel %vm1303, %v1403, 0
        %1410 = vmatprep.subr.bf16.mxu0 0
        %1411 = vmatpush1.bf16.xpose.msra.mxu0 0
        %1412 = vmatprep.subr.bf16.mxu0 0
        %1413 = vmatpush1.bf16.xpose.msra.mxu0 0
        %1414 = vmatprep.subr.bf16.mxu0 0
        %1415 = vmatpush1.bf16.xpose.msra.mxu0 0
        %1416 = vmatprep.subr.bf16.mxu0 0
        %1417 = vmatpush1.bf16.xpose.msra.mxu0 0
        %1418 = vmatprep.subr.bf16.mxu0 0
        %1419 = vmatpush1.bf16.xpose.msra.mxu0 0
        %1420 = vmatprep.subr.bf16.mxu0 0
        %1421 = vmatpush1.bf16.xpose.msra.mxu0 0
        %1422 = vmatprep.subr.bf16.mxu0 0
        %1423 = vmatpush1.bf16.xpose.msra.mxu0 0
        %1424 = vmatprep.subr.bf16.mxu0 0
        %1425 = vmatpush1.bf16.xpose.msra.mxu0 %v1408
        %1426 = vmatprep.subr.bf16.mxu0 0
        %1427 = vmatpush2.bf16.xpose.msra.mxu0 0
        %1428 = vmatprep.subr.bf16.mxu0 0
        %1429 = vmatpush2.bf16.xpose.msra.mxu0 0
        %1430 = vmatprep.subr.bf16.mxu0 0
        %1431 = vmatpush2.bf16.xpose.msra.mxu0 0
        %1432 = vmatprep.subr.bf16.mxu0 0
        %1433 = vmatpush2.bf16.xpose.msra.mxu0 0
        %1434 = vmatprep.subr.bf16.mxu0 0
        %1435 = vmatpush2.bf16.xpose.msra.mxu0 0
        %1436 = vmatprep.subr.bf16.mxu0 0
        %1437 = vmatpush2.bf16.xpose.msra.mxu0 0
        %1438 = vmatprep.subr.bf16.mxu0 0
        %1439 = vmatpush2.bf16.xpose.msra.mxu0 0
        %1440 = vmatprep.subr.bf16.mxu0 0
        %1441 = vmatpush2.bf16.xpose.msra.mxu0 0
        %1442 = vmatprep.mubr.bf16.mxu0 0
        %1443 = vmatmul.mubr.bf16.gmra.mxu0 %v1405
        %v1444 = vpop.f32.mrf.mxu0
        %v1445 = vadd.f32 0.0, %v1444
        %v1446 = vpop.f32.mrf.mxu0
        %v1447 = vpop.f32.mrf.mxu0
        %v1448 = vpop.f32.mrf.mxu0
        %1449 = vdwg.mxu0
        %1450 = vrot.lane.b32.xlu0 %v1299, 104
        %v1451 = vpop.permute.xlu0 %1450
        %1452 = vrot.lane.b32.xlu0 %v1299, 72
        %v1453 = vpop.permute.xlu0 %1452
        %v1455 = vsel %vm1303, %v1451, 0
        %v1458 = vsel %vm1303, %v1453, 0
        %1460 = vmatprep.subr.bf16.mxu0 0
        %1461 = vmatpush1.bf16.xpose.msra.mxu0 0
        %1462 = vmatprep.subr.bf16.mxu0 0
        %1463 = vmatpush1.bf16.xpose.msra.mxu0 0
        %1464 = vmatprep.subr.bf16.mxu0 0
        %1465 = vmatpush1.bf16.xpose.msra.mxu0 0
        %1466 = vmatprep.subr.bf16.mxu0 0
        %1467 = vmatpush1.bf16.xpose.msra.mxu0 0
        %1468 = vmatprep.subr.bf16.mxu0 0
        %1469 = vmatpush1.bf16.xpose.msra.mxu0 0
        %1470 = vmatprep.subr.bf16.mxu0 0
        %1471 = vmatpush1.bf16.xpose.msra.mxu0 0
        %1472 = vmatprep.subr.bf16.mxu0 0
        %1473 = vmatpush1.bf16.xpose.msra.mxu0 0
        %1474 = vmatprep.subr.bf16.mxu0 0
        %1475 = vmatpush1.bf16.xpose.msra.mxu0 %v1458
        %1476 = vmatprep.subr.bf16.mxu0 0
        %1477 = vmatpush2.bf16.xpose.msra.mxu0 0
        %1478 = vmatprep.subr.bf16.mxu0 0
        %1479 = vmatpush2.bf16.xpose.msra.mxu0 0
        %1480 = vmatprep.subr.bf16.mxu0 0
        %1481 = vmatpush2.bf16.xpose.msra.mxu0 0
        %1482 = vmatprep.subr.bf16.mxu0 0
        %1483 = vmatpush2.bf16.xpose.msra.mxu0 0
        %1484 = vmatprep.subr.bf16.mxu0 0
        %1485 = vmatpush2.bf16.xpose.msra.mxu0 0
        %1486 = vmatprep.subr.bf16.mxu0 0
        %1487 = vmatpush2.bf16.xpose.msra.mxu0 0
        %1488 = vmatprep.subr.bf16.mxu0 0
        %1489 = vmatpush2.bf16.xpose.msra.mxu0 0
        %1490 = vmatprep.subr.bf16.mxu0 0
        %1491 = vmatpush2.bf16.xpose.msra.mxu0 0
        %1492 = vmatprep.mubr.bf16.mxu0 0
        %1493 = vmatmul.mubr.bf16.gmra.mxu0 %v1455
        %v1494 = vpop.f32.mrf.mxu0
        %v1495 = vadd.f32 0.0, %v1494
        %v1496 = vpop.f32.mrf.mxu0
        %v1497 = vpop.f32.mrf.mxu0
        %v1498 = vpop.f32.mrf.mxu0
        %1499 = vdwg.mxu0
        %v1500 = vmul.f32 %v1345, 0.35355338
        %v1501 = vmul.f32 %v1395, 0.35355338
        %v1502 = vmul.f32 %v1445, 0.35355338
        %v1503 = vmul.f32 %v1495, 0.35355338
        %v1504 = vsel %vm1189, %v1500, -1e+09
        %v1505 = vsel %vm1190, %v1501, -1e+09
        %v1506 = vsel %vm1191, %v1502, -1e+09
        %v1507 = vsel %vm1192, %v1503, -1e+09
        %v1508 = vsel %vm1303, %v1504, -inf
        %1509 = vmax.xlane.f32.xlu0 %v1508
        %v1510 = vpop.xlane.xlu0 %1509
        %v1511 = vsel %vm1303, %v1505, -inf
        %1512 = vmax.xlane.f32.xlu0 %v1511
        %v1513 = vpop.xlane.xlu0 %1512
        %v1514 = vsel %vm1303, %v1506, -inf
        %1515 = vmax.xlane.f32.xlu0 %v1514
        %v1516 = vpop.xlane.xlu0 %1515
        %v1517 = vsel %vm1303, %v1507, -inf
        %1518 = vmax.xlane.f32.xlu0 %v1517
        %v1519 = vpop.xlane.xlu0 %1518
        %v1520 = vsub.f32 %v1504, %v1510
        %v1521 = vsub.f32 %v1505, %v1513
        %v1522 = vsub.f32 %v1506, %v1516
        %v1523 = vsub.f32 %v1507, %v1519
        %v1524 = vmul.f32 %v1520, 1.442695
        %v1525 = vpow.pop %v1524
        %v1526 = vmul.f32 %v1521, 1.442695
        %v1527 = vpow.pop %v1526
        %v1528 = vmul.f32 %v1522, 1.442695
        %v1529 = vpow.pop %v1528
        %v1530 = vmul.f32 %v1523, 1.442695
        %v1531 = vpow.pop %v1530
        %v1532 = vsel %vm1303, %v1525, 0.0
        %1533 = vadd.xlane.f32.xlu0 %v1532
        %v1534 = vpop.xlane.xlu0 %1533
        %v1535 = vsel %vm1303, %v1527, 0.0
        %1536 = vadd.xlane.f32.xlu0 %v1535
        %v1537 = vpop.xlane.xlu0 %1536
        %v1538 = vsel %vm1303, %v1529, 0.0
        %1539 = vadd.xlane.f32.xlu0 %v1538
        %v1540 = vpop.xlane.xlu0 %1539
        %v1541 = vsel %vm1303, %v1531, 0.0
        %1542 = vadd.xlane.f32.xlu0 %v1541
        %v1543 = vpop.xlane.xlu0 %1542
        %v1544 = vrcp.pop %v1534
        %v1545 = vrcp.pop %v1537
        %v1546 = vrcp.pop %v1540
        %v1547 = vrcp.pop %v1543
        %v1548 = vmul.f32 %v1525, %v1544
        %v1549 = vmul.f32 %v1527, %v1545
        %v1550 = vmul.f32 %v1529, %v1546
        %v1551 = vmul.f32 %v1531, %v1547
        %v1552 = vpack.c.bf16 %v1549, %v1548
        %v1553 = vpack.c.bf16 %v1551, %v1550
        %1554 = vrot.lane.b32.xlu0 %v1299, 64
        %v1555 = vpop.permute.xlu0 %1554
        %v1557 = vsel %vm1303, %v1552, 0
        %vm1559 = vcmask 1043456
        %v1561 = vsel %vm1559, %v1555, 0
        %1563 = vmatprep.subr.bf16.mxu0 0
        %1564 = vmatpush1.bf16.msra.mxu0 0
        %1565 = vmatprep.subr.bf16.mxu0 0
        %1566 = vmatpush1.bf16.msra.mxu0 0
        %1567 = vmatprep.subr.bf16.mxu0 0
        %1568 = vmatpush1.bf16.msra.mxu0 0
        %1569 = vmatprep.subr.bf16.mxu0 0
        %1570 = vmatpush1.bf16.msra.mxu0 0
        %1571 = vmatprep.subr.bf16.mxu0 0
        %1572 = vmatpush1.bf16.msra.mxu0 0
        %1573 = vmatprep.subr.bf16.mxu0 0
        %1574 = vmatpush1.bf16.msra.mxu0 0
        %1575 = vmatprep.subr.bf16.mxu0 0
        %1576 = vmatpush1.bf16.msra.mxu0 0
        %1577 = vmatprep.subr.bf16.mxu0 0
        %1578 = vmatpush1.bf16.msra.mxu0 %v1561
        %1579 = vmatprep.subr.bf16.mxu0 0
        %1580 = vmatpush2.bf16.msra.mxu0 0
        %1581 = vmatprep.subr.bf16.mxu0 0
        %1582 = vmatpush2.bf16.msra.mxu0 0
        %1583 = vmatprep.subr.bf16.mxu0 0
        %1584 = vmatpush2.bf16.msra.mxu0 0
        %1585 = vmatprep.subr.bf16.mxu0 0
        %1586 = vmatpush2.bf16.msra.mxu0 0
        %1587 = vmatprep.subr.bf16.mxu0 0
        %1588 = vmatpush2.bf16.msra.mxu0 0
        %1589 = vmatprep.subr.bf16.mxu0 0
        %1590 = vmatpush2.bf16.msra.mxu0 0
        %1591 = vmatprep.subr.bf16.mxu0 0
        %1592 = vmatpush2.bf16.msra.mxu0 0
        %1593 = vmatprep.subr.bf16.mxu0 0
        %1594 = vmatpush2.bf16.msra.mxu0 0
        %1595 = vmatprep.mubr.bf16.mxu0 0
        %1596 = vmatmul.mubr.bf16.gmra.mxu0 %v1557
        %v1597 = vpop.f32.mrf.mxu0
        %v1598 = vadd.f32 0.0, %v1597
        %v1599 = vpop.f32.mrf.mxu0
        %v1600 = vpop.f32.mrf.mxu0
        %v1601 = vpop.f32.mrf.mxu0
        %1602 = vdwg.mxu0
        %v1604 = vrot.slane %v1552, 4
        %1605 = vrot.lane.b32.xlu0 %v1299, 56
        %v1606 = vpop.permute.xlu0 %1605
        %v1608 = vsel %vm1303, %v1604, 0
        %v1611 = vsel %vm1559, %v1606, 0
        %1613 = vmatprep.subr.bf16.mxu0 0
        %1614 = vmatpush1.bf16.msra.mxu0 0
        %1615 = vmatprep.subr.bf16.mxu0 0
        %1616 = vmatpush1.bf16.msra.mxu0 0
        %1617 = vmatprep.subr.bf16.mxu0 0
        %1618 = vmatpush1.bf16.msra.mxu0 0
        %1619 = vmatprep.subr.bf16.mxu0 0
        %1620 = vmatpush1.bf16.msra.mxu0 0
        %1621 = vmatprep.subr.bf16.mxu0 0
        %1622 = vmatpush1.bf16.msra.mxu0 0
        %1623 = vmatprep.subr.bf16.mxu0 0
        %1624 = vmatpush1.bf16.msra.mxu0 0
        %1625 = vmatprep.subr.bf16.mxu0 0
        %1626 = vmatpush1.bf16.msra.mxu0 0
        %1627 = vmatprep.subr.bf16.mxu0 0
        %1628 = vmatpush1.bf16.msra.mxu0 %v1611
        %1629 = vmatprep.subr.bf16.mxu0 0
        %1630 = vmatpush2.bf16.msra.mxu0 0
        %1631 = vmatprep.subr.bf16.mxu0 0
        %1632 = vmatpush2.bf16.msra.mxu0 0
        %1633 = vmatprep.subr.bf16.mxu0 0
        %1634 = vmatpush2.bf16.msra.mxu0 0
        %1635 = vmatprep.subr.bf16.mxu0 0
        %1636 = vmatpush2.bf16.msra.mxu0 0
        %1637 = vmatprep.subr.bf16.mxu0 0
        %1638 = vmatpush2.bf16.msra.mxu0 0
        %1639 = vmatprep.subr.bf16.mxu0 0
        %1640 = vmatpush2.bf16.msra.mxu0 0
        %1641 = vmatprep.subr.bf16.mxu0 0
        %1642 = vmatpush2.bf16.msra.mxu0 0
        %1643 = vmatprep.subr.bf16.mxu0 0
        %1644 = vmatpush2.bf16.msra.mxu0 0
        %1645 = vmatprep.mubr.bf16.mxu0 0
        %1646 = vmatmul.mubr.bf16.gmra.mxu0 %v1608
        %v1647 = vpop.f32.mrf.mxu0
        %v1648 = vadd.f32 0.0, %v1647
        %v1649 = vpop.f32.mrf.mxu0
        %v1650 = vpop.f32.mrf.mxu0
        %v1651 = vpop.f32.mrf.mxu0
        %1652 = vdwg.mxu0
        %1653 = vrot.lane.b32.xlu0 %v1299, 48
        %v1654 = vpop.permute.xlu0 %1653
        %v1656 = vsel %vm1303, %v1553, 0
        %v1659 = vsel %vm1559, %v1654, 0
        %1661 = vmatprep.subr.bf16.mxu0 0
        %1662 = vmatpush1.bf16.msra.mxu0 0
        %1663 = vmatprep.subr.bf16.mxu0 0
        %1664 = vmatpush1.bf16.msra.mxu0 0
        %1665 = vmatprep.subr.bf16.mxu0 0
        %1666 = vmatpush1.bf16.msra.mxu0 0
        %1667 = vmatprep.subr.bf16.mxu0 0
        %1668 = vmatpush1.bf16.msra.mxu0 0
        %1669 = vmatprep.subr.bf16.mxu0 0
        %1670 = vmatpush1.bf16.msra.mxu0 0
        %1671 = vmatprep.subr.bf16.mxu0 0
        %1672 = vmatpush1.bf16.msra.mxu0 0
        %1673 = vmatprep.subr.bf16.mxu0 0
        %1674 = vmatpush1.bf16.msra.mxu0 0
        %1675 = vmatprep.subr.bf16.mxu0 0
        %1676 = vmatpush1.bf16.msra.mxu0 %v1659
        %1677 = vmatprep.subr.bf16.mxu0 0
        %1678 = vmatpush2.bf16.msra.mxu0 0
        %1679 = vmatprep.subr.bf16.mxu0 0
        %1680 = vmatpush2.bf16.msra.mxu0 0
        %1681 = vmatprep.subr.bf16.mxu0 0
        %1682 = vmatpush2.bf16.msra.mxu0 0
        %1683 = vmatprep.subr.bf16.mxu0 0
        %1684 = vmatpush2.bf16.msra.mxu0 0
        %1685 = vmatprep.subr.bf16.mxu0 0
        %1686 = vmatpush2.bf16.msra.mxu0 0
        %1687 = vmatprep.subr.bf16.mxu0 0
        %1688 = vmatpush2.bf16.msra.mxu0 0
        %1689 = vmatprep.subr.bf16.mxu0 0
        %1690 = vmatpush2.bf16.msra.mxu0 0
        %1691 = vmatprep.subr.bf16.mxu0 0
        %1692 = vmatpush2.bf16.msra.mxu0 0
        %1693 = vmatprep.mubr.bf16.mxu0 0
        %1694 = vmatmul.mubr.bf16.gmra.mxu0 %v1656
        %v1695 = vpop.f32.mrf.mxu0
        %v1696 = vadd.f32 0.0, %v1695
        %v1697 = vpop.f32.mrf.mxu0
        %v1698 = vpop.f32.mrf.mxu0
        %v1699 = vpop.f32.mrf.mxu0
        %1700 = vdwg.mxu0
        %v1702 = vrot.slane %v1553, 4
        %1703 = vrot.lane.b32.xlu0 %v1299, 40
        %v1704 = vpop.permute.xlu0 %1703
        %v1706 = vsel %vm1303, %v1702, 0
        %v1709 = vsel %vm1559, %v1704, 0
        %1711 = vmatprep.subr.bf16.mxu0 0
        %1712 = vmatpush1.bf16.msra.mxu0 0
        %1713 = vmatprep.subr.bf16.mxu0 0
        %1714 = vmatpush1.bf16.msra.mxu0 0
        %1715 = vmatprep.subr.bf16.mxu0 0
        %1716 = vmatpush1.bf16.msra.mxu0 0
        %1717 = vmatprep.subr.bf16.mxu0 0
        %1718 = vmatpush1.bf16.msra.mxu0 0
        %1719 = vmatprep.subr.bf16.mxu0 0
        %1720 = vmatpush1.bf16.msra.mxu0 0
        %1721 = vmatprep.subr.bf16.mxu0 0
        %1722 = vmatpush1.bf16.msra.mxu0 0
        %1723 = vmatprep.subr.bf16.mxu0 0
        %1724 = vmatpush1.bf16.msra.mxu0 0
        %1725 = vmatprep.subr.bf16.mxu0 0
        %1726 = vmatpush1.bf16.msra.mxu0 %v1709
        %1727 = vmatprep.subr.bf16.mxu0 0
        %1728 = vmatpush2.bf16.msra.mxu0 0
        %1729 = vmatprep.subr.bf16.mxu0 0
        %1730 = vmatpush2.bf16.msra.mxu0 0
        %1731 = vmatprep.subr.bf16.mxu0 0
        %1732 = vmatpush2.bf16.msra.mxu0 0
        %1733 = vmatprep.subr.bf16.mxu0 0
        %1734 = vmatpush2.bf16.msra.mxu0 0
        %1735 = vmatprep.subr.bf16.mxu0 0
        %1736 = vmatpush2.bf16.msra.mxu0 0
        %1737 = vmatprep.subr.bf16.mxu0 0
        %1738 = vmatpush2.bf16.msra.mxu0 0
        %1739 = vmatprep.subr.bf16.mxu0 0
        %1740 = vmatpush2.bf16.msra.mxu0 0
        %1741 = vmatprep.subr.bf16.mxu0 0
        %1742 = vmatpush2.bf16.msra.mxu0 0
        %1743 = vmatprep.mubr.bf16.mxu0 0
        %1744 = vmatmul.mubr.bf16.gmra.mxu0 %v1706
        %v1745 = vpop.f32.mrf.mxu0
        %v1746 = vadd.f32 0.0, %v1745
        %v1747 = vpop.f32.mrf.mxu0
        %v1748 = vpop.f32.mrf.mxu0
        %v1749 = vpop.f32.mrf.mxu0
        %1750 = vdwg.mxu0
        %1752 = vrot.lane.b32.xlu0 %v1648, 8
        %v1753 = vpop.permute.xlu0 %1752
        %1756 = vrot.lane.b32.xlu0 %v1696, 16
        %v1757 = vpop.permute.xlu0 %1756
        %1760 = vrot.lane.b32.xlu0 %v1746, 24
        %v1761 = vpop.permute.xlu0 %1760
        %v1763 = vsel %vm1303, %v1598, %v1753
        %vm1764 = vcmask 130048
        %v1765 = vsel %vm1764, %v1763, %v1757
        %vm1766 = vcmask 195584
        %v1767 = vsel %vm1766, %v1765, %v1761
        %v1768 = vpack.c.bf16 %v1767, %v1767
        %v1769 = vld [vmem:[%s1086] sm:$0xf]
        %v1770 = vld [vmem:[%s1086 + $0x4] sm:$0xf]
        %v1771 = vld [vmem:[%s1086 + $0x8] sm:$0xf]
        %v1772 = vld [vmem:[%s1086 + $0xc] sm:$0xf]
        %v1773 = vld [vmem:[%s916] sm:$0x1]
        %v1775 = vlaneseq
        %v1776 = vshrl.u32 %v1775, 7
        %v1777 = vsub.s32 0, %v1776
        %v1778 = vrot.slane %v1773, %v1777
        %v1784 = vunpack.c.l.b16 %v1769
        %v1785 = vunpack.c.l.b16 %v1770
        %v1786 = vunpack.c.l.b16 %v1771
        %v1787 = vunpack.c.l.b16 %v1772
        %v1788 = vpack.c.b16 %v1785, %v1784
        %v1789 = vpack.c.b16 %v1787, %v1786
        %v1793 = vsel %vm1195, %v1768, 0
        %1795 = vmatprep.subr.bf16.mxu0 0
        %1796 = vmatpush1.bf16.msra.mxu0 0
        %1797 = vmatprep.subr.bf16.mxu0 0
        %1798 = vmatpush1.bf16.msra.mxu0 0
        %1799 = vmatprep.subr.bf16.mxu0 0
        %1800 = vmatpush1.bf16.msra.mxu0 0
        %1801 = vmatprep.subr.bf16.mxu0 0
        %1802 = vmatpush1.bf16.msra.mxu0 0
        %1803 = vmatprep.subr.bf16.mxu0 0
        %1804 = vmatpush1.bf16.msra.mxu0 0
        %1805 = vmatprep.subr.bf16.mxu0 0
        %1806 = vmatpush1.bf16.msra.mxu0 0
        %1807 = vmatprep.subr.bf16.mxu0 0
        %1808 = vmatpush1.bf16.msra.mxu0 %v1789
        %1809 = vmatprep.subr.bf16.mxu0 0
        %1810 = vmatpush1.bf16.msra.mxu0 %v1788
        %1811 = vmatprep.subr.bf16.mxu0 0
        %1812 = vmatpush2.bf16.msra.mxu0 0
        %1813 = vmatprep.subr.bf16.mxu0 0
        %1814 = vmatpush2.bf16.msra.mxu0 0
        %1815 = vmatprep.subr.bf16.mxu0 0
        %1816 = vmatpush2.bf16.msra.mxu0 0
        %1817 = vmatprep.subr.bf16.mxu0 0
        %1818 = vmatpush2.bf16.msra.mxu0 0
        %1819 = vmatprep.subr.bf16.mxu0 0
        %1820 = vmatpush2.bf16.msra.mxu0 0
        %1821 = vmatprep.subr.bf16.mxu0 0
        %1822 = vmatpush2.bf16.msra.mxu0 0
        %1823 = vmatprep.subr.bf16.mxu0 0
        %1824 = vmatpush2.bf16.msra.mxu0 0
        %1825 = vmatprep.subr.bf16.mxu0 0
        %1826 = vmatpush2.bf16.msra.mxu0 0
        %1827 = vmatprep.mubr.bf16.mxu0 0
        %1828 = vmatmul.mubr.bf16.gmra.mxu0 %v1793
        %v1829 = vpop.f32.mrf.mxu0
        %v1830 = vadd.f32 %v1778, %v1829
        %v1831 = vpop.f32.mrf.mxu0
        %v1832 = vpop.f32.mrf.mxu0
        %v1833 = vpop.f32.mrf.mxu0
        %1834 = vdwg.mxu0
        %v1835 = vadd.f32 %v1130, %v1830
        %s1836 = scalar_lea.vmem %s1115, 1
        %v1837 = vld [vmem:[%s1836] sm:$0x1]
        %s1838 = scalar_lea.vmem %s1120, 1
        %v1839 = vld [vmem:[%s1838] sm:$0x1]
        %v1840 = vsel %vm1195, %v1835, 0.0
        %1841 = vadd.xlane.f32.xlu0 %v1840
        %v1842 = vpop.xlane.xlu0 %1841
        %v1843 = vmul.f32 %v1842, %v1199
        %v1844 = vsub.f32 %v1835, %v1843
        %v1845 = vmul.f32 %v1844, %v1844
        %v1846 = vsel %vm1195, %v1845, 0.0
        %1847 = vadd.xlane.f32.xlu0 %v1846
        %v1848 = vpop.xlane.xlu0 %1847
        %v1849 = vmul.f32 %v1848, %v1206
        %v1850 = vrsqrt.pop %v1849
        %v1851 = vmul.f32 %v1849, %v1850
        %vm1852 = vcmp.eq.f32.partialorder %v1849, inf
        %v1853 = vsel %vm1852, %v1849, %v1851
        %vm1854 = vcmp.eq.f32.partialorder %v1849, 0.0
        %v1855 = vand.u32 %v1849, 2147483648
        %v1856 = vsel %vm1854, %v1855, %v1853
        %v1857 = vadd.f32 %v1856, 1e-06
        %v1858 = vrcp.pop %v1857
        %v1860 = vlaneseq
        %v1861 = vshrl.u32 %v1860, 7
        %v1862 = vsub.s32 0, %v1861
        %v1863 = vrot.slane %v1837, %v1862
        %v1865 = vmul.f32 %v1863, %v1844
        %v1866 = vmul.f32 %v1865, %v1858
        %v1868 = vlaneseq
        %v1869 = vshrl.u32 %v1868, 7
        %v1870 = vsub.s32 0, %v1869
        %v1871 = vrot.slane %v1839, %v1870
        %v1873 = vadd.f32 %v1866, %v1871
        %v1874 = vpack.c.bf16 %v1873, %v1873
        %v1875 = vld [vmem:[%s1091] sm:$0xf]
        %v1876 = vld [vmem:[%s1091 + $0x4] sm:$0xf]
        %v1877 = vld [vmem:[%s1091 + $0x8] sm:$0xf]
        %v1878 = vld [vmem:[%s1091 + $0xc] sm:$0xf]
        %v1879 = vld [vmem:[%s1094] sm:$0x1]
        %v1881 = vlaneseq
        %v1882 = vshrl.u32 %v1881, 7
        %v1883 = vsub.s32 0, %v1882
        %v1884 = vrot.slane %v1879, %v1883
        %v1890 = vunpack.c.l.b16 %v1875
        %v1891 = vunpack.c.l.b16 %v1876
        %v1892 = vunpack.c.l.b16 %v1877
        %v1893 = vunpack.c.l.b16 %v1878
        %v1894 = vpack.c.b16 %v1891, %v1890
        %v1895 = vpack.c.b16 %v1893, %v1892
        %v1899 = vsel %vm1195, %v1874, 0
        %1901 = vmatprep.subr.bf16.mxu0 0
        %1902 = vmatpush1.bf16.msra.mxu0 0
        %1903 = vmatprep.subr.bf16.mxu0 0
        %1904 = vmatpush1.bf16.msra.mxu0 0
        %1905 = vmatprep.subr.bf16.mxu0 0
        %1906 = vmatpush1.bf16.msra.mxu0 0
        %1907 = vmatprep.subr.bf16.mxu0 0
        %1908 = vmatpush1.bf16.msra.mxu0 0
        %1909 = vmatprep.subr.bf16.mxu0 0
        %1910 = vmatpush1.bf16.msra.mxu0 0
        %1911 = vmatprep.subr.bf16.mxu0 0
        %1912 = vmatpush1.bf16.msra.mxu0 0
        %1913 = vmatprep.subr.bf16.mxu0 0
        %1914 = vmatpush1.bf16.msra.mxu0 %v1895
        %1915 = vmatprep.subr.bf16.mxu0 0
        %1916 = vmatpush1.bf16.msra.mxu0 %v1894
        %1917 = vmatprep.subr.bf16.mxu0 0
        %1918 = vmatpush2.bf16.msra.mxu0 0
        %1919 = vmatprep.subr.bf16.mxu0 0
        %1920 = vmatpush2.bf16.msra.mxu0 0
        %1921 = vmatprep.subr.bf16.mxu0 0
        %1922 = vmatpush2.bf16.msra.mxu0 0
        %1923 = vmatprep.subr.bf16.mxu0 0
        %1924 = vmatpush2.bf16.msra.mxu0 0
        %1925 = vmatprep.subr.bf16.mxu0 0
        %1926 = vmatpush2.bf16.msra.mxu0 0
        %1927 = vmatprep.subr.bf16.mxu0 0
        %1928 = vmatpush2.bf16.msra.mxu0 0
        %1929 = vmatprep.subr.bf16.mxu0 0
        %1930 = vmatpush2.bf16.msra.mxu0 0
        %1931 = vmatprep.subr.bf16.mxu0 0
        %1932 = vmatpush2.bf16.msra.mxu0 0
        %1933 = vmatprep.mubr.bf16.mxu0 0
        %1934 = vmatmul.mubr.bf16.gmra.mxu0 %v1899
        %v1935 = vpop.f32.mrf.mxu0
        %v1936 = vadd.f32 %v1884, %v1935
        %v1937 = vpop.f32.mrf.mxu0
        %v1938 = vpop.f32.mrf.mxu0
        %v1939 = vpop.f32.mrf.mxu0
        %1940 = vdwg.mxu0
        %v1941 = vpack.c.bf16 %v1131, %v1131
        %v1942 = vld [vmem:[%s925] sm:$0xf]
        %v1943 = vld [vmem:[%s925 + $0x4] sm:$0xf]
        %v1944 = vld [vmem:[%s925 + $0x8] sm:$0xf]
        %v1945 = vld [vmem:[%s925 + $0xc] sm:$0xf]
        %v1946 = vld [vmem:[%s1097] sm:$0x1]
        %v1948 = vlaneseq
        %v1949 = vshrl.u32 %v1948, 7
        %v1950 = vsub.s32 0, %v1949
        %v1951 = vrot.slane %v1946, %v1950
        %v1957 = vunpack.c.l.b16 %v1942
        %v1958 = vunpack.c.l.b16 %v1943
        %v1959 = vunpack.c.l.b16 %v1944
        %v1960 = vunpack.c.l.b16 %v1945
        %v1961 = vpack.c.b16 %v1958, %v1957
        %v1962 = vpack.c.b16 %v1960, %v1959
        %v1966 = vsel %vm1195, %v1941, 0
        %1968 = vmatprep.subr.bf16.mxu0 0
        %1969 = vmatpush1.bf16.msra.mxu0 0
        %1970 = vmatprep.subr.bf16.mxu0 0
        %1971 = vmatpush1.bf16.msra.mxu0 0
        %1972 = vmatprep.subr.bf16.mxu0 0
        %1973 = vmatpush1.bf16.msra.mxu0 0
        %1974 = vmatprep.subr.bf16.mxu0 0
        %1975 = vmatpush1.bf16.msra.mxu0 0
        %1976 = vmatprep.subr.bf16.mxu0 0
        %1977 = vmatpush1.bf16.msra.mxu0 0
        %1978 = vmatprep.subr.bf16.mxu0 0
        %1979 = vmatpush1.bf16.msra.mxu0 0
        %1980 = vmatprep.subr.bf16.mxu0 0
        %1981 = vmatpush1.bf16.msra.mxu0 %v1962
        %1982 = vmatprep.subr.bf16.mxu0 0
        %1983 = vmatpush1.bf16.msra.mxu0 %v1961
        %1984 = vmatprep.subr.bf16.mxu0 0
        %1985 = vmatpush2.bf16.msra.mxu0 0
        %1986 = vmatprep.subr.bf16.mxu0 0
        %1987 = vmatpush2.bf16.msra.mxu0 0
        %1988 = vmatprep.subr.bf16.mxu0 0
        %1989 = vmatpush2.bf16.msra.mxu0 0
        %1990 = vmatprep.subr.bf16.mxu0 0
        %1991 = vmatpush2.bf16.msra.mxu0 0
        %1992 = vmatprep.subr.bf16.mxu0 0
        %1993 = vmatpush2.bf16.msra.mxu0 0
        %1994 = vmatprep.subr.bf16.mxu0 0
        %1995 = vmatpush2.bf16.msra.mxu0 0
        %1996 = vmatprep.subr.bf16.mxu0 0
        %1997 = vmatpush2.bf16.msra.mxu0 0
        %1998 = vmatprep.subr.bf16.mxu0 0
        %1999 = vmatpush2.bf16.msra.mxu0 0
        %2000 = vmatprep.mubr.bf16.mxu0 0
        %2001 = vmatmul.mubr.bf16.gmra.mxu0 %v1966
        %v2002 = vpop.f32.mrf.mxu0
        %v2003 = vadd.f32 %v1951, %v2002
        %v2004 = vpop.f32.mrf.mxu0
        %v2005 = vpop.f32.mrf.mxu0
        %v2006 = vpop.f32.mrf.mxu0
        %2007 = vdwg.mxu0
        %v2008 = vpack.c.bf16 %v1936, %v1936
        %v2009 = vpack.c.bf16 %v2003, %v2003
        %v2011 = vsel %vm1303, %v2008, 0
        %v2014 = vsel %vm1303, %v2009, 0
        %2016 = vmatprep.subr.bf16.mxu0 0
        %2017 = vmatpush1.bf16.xpose.msra.mxu0 0
        %2018 = vmatprep.subr.bf16.mxu0 0
        %2019 = vmatpush1.bf16.xpose.msra.mxu0 0
        %2020 = vmatprep.subr.bf16.mxu0 0
        %2021 = vmatpush1.bf16.xpose.msra.mxu0 0
        %2022 = vmatprep.subr.bf16.mxu0 0
        %2023 = vmatpush1.bf16.xpose.msra.mxu0 0
        %2024 = vmatprep.subr.bf16.mxu0 0
        %2025 = vmatpush1.bf16.xpose.msra.mxu0 0
        %2026 = vmatprep.subr.bf16.mxu0 0
        %2027 = vmatpush1.bf16.xpose.msra.mxu0 0
        %2028 = vmatprep.subr.bf16.mxu0 0
        %2029 = vmatpush1.bf16.xpose.msra.mxu0 0
        %2030 = vmatprep.subr.bf16.mxu0 0
        %2031 = vmatpush1.bf16.xpose.msra.mxu0 %v2014
        %2032 = vmatprep.subr.bf16.mxu0 0
        %2033 = vmatpush2.bf16.xpose.msra.mxu0 0
        %2034 = vmatprep.subr.bf16.mxu0 0
        %2035 = vmatpush2.bf16.xpose.msra.mxu0 0
        %2036 = vmatprep.subr.bf16.mxu0 0
        %2037 = vmatpush2.bf16.xpose.msra.mxu0 0
        %2038 = vmatprep.subr.bf16.mxu0 0
        %2039 = vmatpush2.bf16.xpose.msra.mxu0 0
        %2040 = vmatprep.subr.bf16.mxu0 0
        %2041 = vmatpush2.bf16.xpose.msra.mxu0 0
        %2042 = vmatprep.subr.bf16.mxu0 0
        %2043 = vmatpush2.bf16.xpose.msra.mxu0 0
        %2044 = vmatprep.subr.bf16.mxu0 0
        %2045 = vmatpush2.bf16.xpose.msra.mxu0 0
        %2046 = vmatprep.subr.bf16.mxu0 0
        %2047 = vmatpush2.bf16.xpose.msra.mxu0 0
        %2048 = vmatprep.mubr.bf16.mxu0 0
        %2049 = vmatmul.mubr.bf16.gmra.mxu0 %v2011
        %v2050 = vpop.f32.mrf.mxu0
        %v2051 = vadd.f32 0.0, %v2050
        %v2052 = vpop.f32.mrf.mxu0
        %v2053 = vpop.f32.mrf.mxu0
        %v2054 = vpop.f32.mrf.mxu0
        %2055 = vdwg.mxu0
        %2057 = vrot.lane.b32.xlu0 %v2008, 120
        %v2058 = vpop.permute.xlu0 %2057
        %2060 = vrot.lane.b32.xlu0 %v2009, 120
        %v2061 = vpop.permute.xlu0 %2060
        %v2063 = vsel %vm1303, %v2058, 0
        %v2066 = vsel %vm1303, %v2061, 0
        %2068 = vmatprep.subr.bf16.mxu0 0
        %2069 = vmatpush1.bf16.xpose.msra.mxu0 0
        %2070 = vmatprep.subr.bf16.mxu0 0
        %2071 = vmatpush1.bf16.xpose.msra.mxu0 0
        %2072 = vmatprep.subr.bf16.mxu0 0
        %2073 = vmatpush1.bf16.xpose.msra.mxu0 0
        %2074 = vmatprep.subr.bf16.mxu0 0
        %2075 = vmatpush1.bf16.xpose.msra.mxu0 0
        %2076 = vmatprep.subr.bf16.mxu0 0
        %2077 = vmatpush1.bf16.xpose.msra.mxu0 0
        %2078 = vmatprep.subr.bf16.mxu0 0
        %2079 = vmatpush1.bf16.xpose.msra.mxu0 0
        %2080 = vmatprep.subr.bf16.mxu0 0
        %2081 = vmatpush1.bf16.xpose.msra.mxu0 0
        %2082 = vmatprep.subr.bf16.mxu0 0
        %2083 = vmatpush1.bf16.xpose.msra.mxu0 %v2066
        %2084 = vmatprep.subr.bf16.mxu0 0
        %2085 = vmatpush2.bf16.xpose.msra.mxu0 0
        %2086 = vmatprep.subr.bf16.mxu0 0
        %2087 = vmatpush2.bf16.xpose.msra.mxu0 0
        %2088 = vmatprep.subr.bf16.mxu0 0
        %2089 = vmatpush2.bf16.xpose.msra.mxu0 0
        %2090 = vmatprep.subr.bf16.mxu0 0
        %2091 = vmatpush2.bf16.xpose.msra.mxu0 0
        %2092 = vmatprep.subr.bf16.mxu0 0
        %2093 = vmatpush2.bf16.xpose.msra.mxu0 0
        %2094 = vmatprep.subr.bf16.mxu0 0
        %2095 = vmatpush2.bf16.xpose.msra.mxu0 0
        %2096 = vmatprep.subr.bf16.mxu0 0
        %2097 = vmatpush2.bf16.xpose.msra.mxu0 0
        %2098 = vmatprep.subr.bf16.mxu0 0
        %2099 = vmatpush2.bf16.xpose.msra.mxu0 0
        %2100 = vmatprep.mubr.bf16.mxu0 0
        %2101 = vmatmul.mubr.bf16.gmra.mxu0 %v2063
        %v2102 = vpop.f32.mrf.mxu0
        %v2103 = vadd.f32 0.0, %v2102
        %v2104 = vpop.f32.mrf.mxu0
        %v2105 = vpop.f32.mrf.mxu0
        %v2106 = vpop.f32.mrf.mxu0
        %2107 = vdwg.mxu0
        %2108 = vrot.lane.b32.xlu0 %v2008, 112
        %v2109 = vpop.permute.xlu0 %2108
        %2110 = vrot.lane.b32.xlu0 %v2009, 112
        %v2111 = vpop.permute.xlu0 %2110
        %v2113 = vsel %vm1303, %v2109, 0
        %v2116 = vsel %vm1303, %v2111, 0
        %2118 = vmatprep.subr.bf16.mxu0 0
        %2119 = vmatpush1.bf16.xpose.msra.mxu0 0
        %2120 = vmatprep.subr.bf16.mxu0 0
        %2121 = vmatpush1.bf16.xpose.msra.mxu0 0
        %2122 = vmatprep.subr.bf16.mxu0 0
        %2123 = vmatpush1.bf16.xpose.msra.mxu0 0
        %2124 = vmatprep.subr.bf16.mxu0 0
        %2125 = vmatpush1.bf16.xpose.msra.mxu0 0
        %2126 = vmatprep.subr.bf16.mxu0 0
        %2127 = vmatpush1.bf16.xpose.msra.mxu0 0
        %2128 = vmatprep.subr.bf16.mxu0 0
        %2129 = vmatpush1.bf16.xpose.msra.mxu0 0
        %2130 = vmatprep.subr.bf16.mxu0 0
        %2131 = vmatpush1.bf16.xpose.msra.mxu0 0
        %2132 = vmatprep.subr.bf16.mxu0 0
        %2133 = vmatpush1.bf16.xpose.msra.mxu0 %v2116
        %2134 = vmatprep.subr.bf16.mxu0 0
        %2135 = vmatpush2.bf16.xpose.msra.mxu0 0
        %2136 = vmatprep.subr.bf16.mxu0 0
        %2137 = vmatpush2.bf16.xpose.msra.mxu0 0
        %2138 = vmatprep.subr.bf16.mxu0 0
        %2139 = vmatpush2.bf16.xpose.msra.mxu0 0
        %2140 = vmatprep.subr.bf16.mxu0 0
        %2141 = vmatpush2.bf16.xpose.msra.mxu0 0
        %2142 = vmatprep.subr.bf16.mxu0 0
        %2143 = vmatpush2.bf16.xpose.msra.mxu0 0
        %2144 = vmatprep.subr.bf16.mxu0 0
        %2145 = vmatpush2.bf16.xpose.msra.mxu0 0
        %2146 = vmatprep.subr.bf16.mxu0 0
        %2147 = vmatpush2.bf16.xpose.msra.mxu0 0
        %2148 = vmatprep.subr.bf16.mxu0 0
        %2149 = vmatpush2.bf16.xpose.msra.mxu0 0
        %2150 = vmatprep.mubr.bf16.mxu0 0
        %2151 = vmatmul.mubr.bf16.gmra.mxu0 %v2113
        %v2152 = vpop.f32.mrf.mxu0
        %v2153 = vadd.f32 0.0, %v2152
        %v2154 = vpop.f32.mrf.mxu0
        %v2155 = vpop.f32.mrf.mxu0
        %v2156 = vpop.f32.mrf.mxu0
        %2157 = vdwg.mxu0
        %2158 = vrot.lane.b32.xlu0 %v2008, 104
        %v2159 = vpop.permute.xlu0 %2158
        %2160 = vrot.lane.b32.xlu0 %v2009, 104
        %v2161 = vpop.permute.xlu0 %2160
        %v2163 = vsel %vm1303, %v2159, 0
        %v2166 = vsel %vm1303, %v2161, 0
        %2168 = vmatprep.subr.bf16.mxu0 0
        %2169 = vmatpush1.bf16.xpose.msra.mxu0 0
        %2170 = vmatprep.subr.bf16.mxu0 0
        %2171 = vmatpush1.bf16.xpose.msra.mxu0 0
        %2172 = vmatprep.subr.bf16.mxu0 0
        %2173 = vmatpush1.bf16.xpose.msra.mxu0 0
        %2174 = vmatprep.subr.bf16.mxu0 0
        %2175 = vmatpush1.bf16.xpose.msra.mxu0 0
        %2176 = vmatprep.subr.bf16.mxu0 0
        %2177 = vmatpush1.bf16.xpose.msra.mxu0 0
        %2178 = vmatprep.subr.bf16.mxu0 0
        %2179 = vmatpush1.bf16.xpose.msra.mxu0 0
        %2180 = vmatprep.subr.bf16.mxu0 0
        %2181 = vmatpush1.bf16.xpose.msra.mxu0 0
        %2182 = vmatprep.subr.bf16.mxu0 0
        %2183 = vmatpush1.bf16.xpose.msra.mxu0 %v2166
        %2184 = vmatprep.subr.bf16.mxu0 0
        %2185 = vmatpush2.bf16.xpose.msra.mxu0 0
        %2186 = vmatprep.subr.bf16.mxu0 0
        %2187 = vmatpush2.bf16.xpose.msra.mxu0 0
        %2188 = vmatprep.subr.bf16.mxu0 0
        %2189 = vmatpush2.bf16.xpose.msra.mxu0 0
        %2190 = vmatprep.subr.bf16.mxu0 0
        %2191 = vmatpush2.bf16.xpose.msra.mxu0 0
        %2192 = vmatprep.subr.bf16.mxu0 0
        %2193 = vmatpush2.bf16.xpose.msra.mxu0 0
        %2194 = vmatprep.subr.bf16.mxu0 0
        %2195 = vmatpush2.bf16.xpose.msra.mxu0 0
        %2196 = vmatprep.subr.bf16.mxu0 0
        %2197 = vmatpush2.bf16.xpose.msra.mxu0 0
        %2198 = vmatprep.subr.bf16.mxu0 0
        %2199 = vmatpush2.bf16.xpose.msra.mxu0 0
        %2200 = vmatprep.mubr.bf16.mxu0 0
        %2201 = vmatmul.mubr.bf16.gmra.mxu0 %v2163
        %v2202 = vpop.f32.mrf.mxu0
        %v2203 = vadd.f32 0.0, %v2202
        %v2204 = vpop.f32.mrf.mxu0
        %v2205 = vpop.f32.mrf.mxu0
        %v2206 = vpop.f32.mrf.mxu0
        %2207 = vdwg.mxu0
        %v2208 = vmul.f32 %v2051, 0.35355338
        %v2209 = vmul.f32 %v2103, 0.35355338
        %v2210 = vmul.f32 %v2153, 0.35355338
        %v2211 = vmul.f32 %v2203, 0.35355338
        %v2212 = vsel %vm1133, 1, 0
        %v2213 = vlaneseq
        %v2214 = vshrl.u32 %v2213, 7
        %v2215 = vsub.s32 0, %v2214
        %v2216 = vrot.slane %v2212, %v2215
        %vm2217 = vcmp.eq.s32.totalorder %v2216, 1
        %v2218 = vsel %vm2217, %v2208, -1e+09
        %v2219 = vsel %vm2217, %v2209, -1e+09
        %v2220 = vsel %vm2217, %v2210, -1e+09
        %v2221 = vsel %vm2217, %v2211, -1e+09
        %v2222 = vsel %vm1303, %v2218, -inf
        %2223 = vmax.xlane.f32.xlu0 %v2222
        %v2224 = vpop.xlane.xlu0 %2223
        %v2225 = vsel %vm1303, %v2219, -inf
        %2226 = vmax.xlane.f32.xlu0 %v2225
        %v2227 = vpop.xlane.xlu0 %2226
        %v2228 = vsel %vm1303, %v2220, -inf
        %2229 = vmax.xlane.f32.xlu0 %v2228
        %v2230 = vpop.xlane.xlu0 %2229
        %v2231 = vsel %vm1303, %v2221, -inf
        %2232 = vmax.xlane.f32.xlu0 %v2231
        %v2233 = vpop.xlane.xlu0 %2232
        %v2234 = vsub.f32 %v2218, %v2224
        %v2235 = vsub.f32 %v2219, %v2227
        %v2236 = vsub.f32 %v2220, %v2230
        %v2237 = vsub.f32 %v2221, %v2233
        %v2238 = vmul.f32 %v2234, 1.442695
        %v2239 = vpow.pop %v2238
        %v2240 = vmul.f32 %v2235, 1.442695
        %v2241 = vpow.pop %v2240
        %v2242 = vmul.f32 %v2236, 1.442695
        %v2243 = vpow.pop %v2242
        %v2244 = vmul.f32 %v2237, 1.442695
        %v2245 = vpow.pop %v2244
        %v2246 = vsel %vm1303, %v2239, 0.0
        %2247 = vadd.xlane.f32.xlu0 %v2246
        %v2248 = vpop.xlane.xlu0 %2247
        %v2249 = vsel %vm1303, %v2241, 0.0
        %2250 = vadd.xlane.f32.xlu0 %v2249
        %v2251 = vpop.xlane.xlu0 %2250
        %v2252 = vsel %vm1303, %v2243, 0.0
        %2253 = vadd.xlane.f32.xlu0 %v2252
        %v2254 = vpop.xlane.xlu0 %2253
        %v2255 = vsel %vm1303, %v2245, 0.0
        %2256 = vadd.xlane.f32.xlu0 %v2255
        %v2257 = vpop.xlane.xlu0 %2256
        %v2258 = vrcp.pop %v2248
        %v2259 = vrcp.pop %v2251
        %v2260 = vrcp.pop %v2254
        %v2261 = vrcp.pop %v2257
        %v2262 = vmul.f32 %v2239, %v2258
        %v2263 = vmul.f32 %v2241, %v2259
        %v2264 = vmul.f32 %v2243, %v2260
        %v2265 = vmul.f32 %v2245, %v2261
        %v2266 = vpack.c.bf16 %v2263, %v2262
        %v2267 = vpack.c.bf16 %v2265, %v2264
        %2268 = vrot.lane.b32.xlu0 %v2009, 96
        %v2269 = vpop.permute.xlu0 %2268
        %v2271 = vsel %vm1303, %v2266, 0
        %v2274 = vsel %vm1559, %v2269, 0
        %2276 = vmatprep.subr.bf16.mxu0 0
        %2277 = vmatpush1.bf16.msra.mxu0 0
        %2278 = vmatprep.subr.bf16.mxu0 0
        %2279 = vmatpush1.bf16.msra.mxu0 0
        %2280 = vmatprep.subr.bf16.mxu0 0
        %2281 = vmatpush1.bf16.msra.mxu0 0
        %2282 = vmatprep.subr.bf16.mxu0 0
        %2283 = vmatpush1.bf16.msra.mxu0 0
        %2284 = vmatprep.subr.bf16.mxu0 0
        %2285 = vmatpush1.bf16.msra.mxu0 0
        %2286 = vmatprep.subr.bf16.mxu0 0
        %2287 = vmatpush1.bf16.msra.mxu0 0
        %2288 = vmatprep.subr.bf16.mxu0 0
        %2289 = vmatpush1.bf16.msra.mxu0 0
        %2290 = vmatprep.subr.bf16.mxu0 0
        %2291 = vmatpush1.bf16.msra.mxu0 %v2274
        %2292 = vmatprep.subr.bf16.mxu0 0
        %2293 = vmatpush2.bf16.msra.mxu0 0
        %2294 = vmatprep.subr.bf16.mxu0 0
        %2295 = vmatpush2.bf16.msra.mxu0 0
        %2296 = vmatprep.subr.bf16.mxu0 0
        %2297 = vmatpush2.bf16.msra.mxu0 0
        %2298 = vmatprep.subr.bf16.mxu0 0
        %2299 = vmatpush2.bf16.msra.mxu0 0
        %2300 = vmatprep.subr.bf16.mxu0 0
        %2301 = vmatpush2.bf16.msra.mxu0 0
        %2302 = vmatprep.subr.bf16.mxu0 0
        %2303 = vmatpush2.bf16.msra.mxu0 0
        %2304 = vmatprep.subr.bf16.mxu0 0
        %2305 = vmatpush2.bf16.msra.mxu0 0
        %2306 = vmatprep.subr.bf16.mxu0 0
        %2307 = vmatpush2.bf16.msra.mxu0 0
        %2308 = vmatprep.mubr.bf16.mxu0 0
        %2309 = vmatmul.mubr.bf16.gmra.mxu0 %v2271
        %v2310 = vpop.f32.mrf.mxu0
        %v2311 = vadd.f32 0.0, %v2310
        %v2312 = vpop.f32.mrf.mxu0
        %v2313 = vpop.f32.mrf.mxu0
        %v2314 = vpop.f32.mrf.mxu0
        %2315 = vdwg.mxu0
        %v2317 = vrot.slane %v2266, 4
        %2318 = vrot.lane.b32.xlu0 %v2009, 88
        %v2319 = vpop.permute.xlu0 %2318
        %v2321 = vsel %vm1303, %v2317, 0
        %v2324 = vsel %vm1559, %v2319, 0
        %2326 = vmatprep.subr.bf16.mxu0 0
        %2327 = vmatpush1.bf16.msra.mxu0 0
        %2328 = vmatprep.subr.bf16.mxu0 0
        %2329 = vmatpush1.bf16.msra.mxu0 0
        %2330 = vmatprep.subr.bf16.mxu0 0
        %2331 = vmatpush1.bf16.msra.mxu0 0
        %2332 = vmatprep.subr.bf16.mxu0 0
        %2333 = vmatpush1.bf16.msra.mxu0 0
        %2334 = vmatprep.subr.bf16.mxu0 0
        %2335 = vmatpush1.bf16.msra.mxu0 0
        %2336 = vmatprep.subr.bf16.mxu0 0
        %2337 = vmatpush1.bf16.msra.mxu0 0
        %2338 = vmatprep.subr.bf16.mxu0 0
        %2339 = vmatpush1.bf16.msra.mxu0 0
        %2340 = vmatprep.subr.bf16.mxu0 0
        %2341 = vmatpush1.bf16.msra.mxu0 %v2324
        %2342 = vmatprep.subr.bf16.mxu0 0
        %2343 = vmatpush2.bf16.msra.mxu0 0
        %2344 = vmatprep.subr.bf16.mxu0 0
        %2345 = vmatpush2.bf16.msra.mxu0 0
        %2346 = vmatprep.subr.bf16.mxu0 0
        %2347 = vmatpush2.bf16.msra.mxu0 0
        %2348 = vmatprep.subr.bf16.mxu0 0
        %2349 = vmatpush2.bf16.msra.mxu0 0
        %2350 = vmatprep.subr.bf16.mxu0 0
        %2351 = vmatpush2.bf16.msra.mxu0 0
        %2352 = vmatprep.subr.bf16.mxu0 0
        %2353 = vmatpush2.bf16.msra.mxu0 0
        %2354 = vmatprep.subr.bf16.mxu0 0
        %2355 = vmatpush2.bf16.msra.mxu0 0
        %2356 = vmatprep.subr.bf16.mxu0 0
        %2357 = vmatpush2.bf16.msra.mxu0 0
        %2358 = vmatprep.mubr.bf16.mxu0 0
        %2359 = vmatmul.mubr.bf16.gmra.mxu0 %v2321
        %v2360 = vpop.f32.mrf.mxu0
        %v2361 = vadd.f32 0.0, %v2360
        %v2362 = vpop.f32.mrf.mxu0
        %v2363 = vpop.f32.mrf.mxu0
        %v2364 = vpop.f32.mrf.mxu0
        %2365 = vdwg.mxu0
        %2366 = vrot.lane.b32.xlu0 %v2009, 80
        %v2367 = vpop.permute.xlu0 %2366
        %v2369 = vsel %vm1303, %v2267, 0
        %v2372 = vsel %vm1559, %v2367, 0
        %2374 = vmatprep.subr.bf16.mxu0 0
        %2375 = vmatpush1.bf16.msra.mxu0 0
        %2376 = vmatprep.subr.bf16.mxu0 0
        %2377 = vmatpush1.bf16.msra.mxu0 0
        %2378 = vmatprep.subr.bf16.mxu0 0
        %2379 = vmatpush1.bf16.msra.mxu0 0
        %2380 = vmatprep.subr.bf16.mxu0 0
        %2381 = vmatpush1.bf16.msra.mxu0 0
        %2382 = vmatprep.subr.bf16.mxu0 0
        %2383 = vmatpush1.bf16.msra.mxu0 0
        %2384 = vmatprep.subr.bf16.mxu0 0
        %2385 = vmatpush1.bf16.msra.mxu0 0
        %2386 = vmatprep.subr.bf16.mxu0 0
        %2387 = vmatpush1.bf16.msra.mxu0 0
        %2388 = vmatprep.subr.bf16.mxu0 0
        %2389 = vmatpush1.bf16.msra.mxu0 %v2372
        %2390 = vmatprep.subr.bf16.mxu0 0
        %2391 = vmatpush2.bf16.msra.mxu0 0
        %2392 = vmatprep.subr.bf16.mxu0 0
        %2393 = vmatpush2.bf16.msra.mxu0 0
        %2394 = vmatprep.subr.bf16.mxu0 0
        %2395 = vmatpush2.bf16.msra.mxu0 0
        %2396 = vmatprep.subr.bf16.mxu0 0
        %2397 = vmatpush2.bf16.msra.mxu0 0
        %2398 = vmatprep.subr.bf16.mxu0 0
        %2399 = vmatpush2.bf16.msra.mxu0 0
        %2400 = vmatprep.subr.bf16.mxu0 0
        %2401 = vmatpush2.bf16.msra.mxu0 0
        %2402 = vmatprep.subr.bf16.mxu0 0
        %2403 = vmatpush2.bf16.msra.mxu0 0
        %2404 = vmatprep.subr.bf16.mxu0 0
        %2405 = vmatpush2.bf16.msra.mxu0 0
        %2406 = vmatprep.mubr.bf16.mxu0 0
        %2407 = vmatmul.mubr.bf16.gmra.mxu0 %v2369
        %v2408 = vpop.f32.mrf.mxu0
        %v2409 = vadd.f32 0.0, %v2408
        %v2410 = vpop.f32.mrf.mxu0
        %v2411 = vpop.f32.mrf.mxu0
        %v2412 = vpop.f32.mrf.mxu0
        %2413 = vdwg.mxu0
        %v2415 = vrot.slane %v2267, 4
        %2416 = vrot.lane.b32.xlu0 %v2009, 72
        %v2417 = vpop.permute.xlu0 %2416
        %v2419 = vsel %vm1303, %v2415, 0
        %v2422 = vsel %vm1559, %v2417, 0
        %2424 = vmatprep.subr.bf16.mxu0 0
        %2425 = vmatpush1.bf16.msra.mxu0 0
        %2426 = vmatprep.subr.bf16.mxu0 0
        %2427 = vmatpush1.bf16.msra.mxu0 0
        %2428 = vmatprep.subr.bf16.mxu0 0
        %2429 = vmatpush1.bf16.msra.mxu0 0
        %2430 = vmatprep.subr.bf16.mxu0 0
        %2431 = vmatpush1.bf16.msra.mxu0 0
        %2432 = vmatprep.subr.bf16.mxu0 0
        %2433 = vmatpush1.bf16.msra.mxu0 0
        %2434 = vmatprep.subr.bf16.mxu0 0
        %2435 = vmatpush1.bf16.msra.mxu0 0
        %2436 = vmatprep.subr.bf16.mxu0 0
        %2437 = vmatpush1.bf16.msra.mxu0 0
        %2438 = vmatprep.subr.bf16.mxu0 0
        %2439 = vmatpush1.bf16.msra.mxu0 %v2422
        %2440 = vmatprep.subr.bf16.mxu0 0
        %2441 = vmatpush2.bf16.msra.mxu0 0
        %2442 = vmatprep.subr.bf16.mxu0 0
        %2443 = vmatpush2.bf16.msra.mxu0 0
        %2444 = vmatprep.subr.bf16.mxu0 0
        %2445 = vmatpush2.bf16.msra.mxu0 0
        %2446 = vmatprep.subr.bf16.mxu0 0
        %2447 = vmatpush2.bf16.msra.mxu0 0
        %2448 = vmatprep.subr.bf16.mxu0 0
        %2449 = vmatpush2.bf16.msra.mxu0 0
        %2450 = vmatprep.subr.bf16.mxu0 0
        %2451 = vmatpush2.bf16.msra.mxu0 0
        %2452 = vmatprep.subr.bf16.mxu0 0
        %2453 = vmatpush2.bf16.msra.mxu0 0
        %2454 = vmatprep.subr.bf16.mxu0 0
        %2455 = vmatpush2.bf16.msra.mxu0 0
        %2456 = vmatprep.mubr.bf16.mxu0 0
        %2457 = vmatmul.mubr.bf16.gmra.mxu0 %v2419
        %v2458 = vpop.f32.mrf.mxu0
        %v2459 = vadd.f32 0.0, %v2458
        %v2460 = vpop.f32.mrf.mxu0
        %v2461 = vpop.f32.mrf.mxu0
        %v2462 = vpop.f32.mrf.mxu0
        %2463 = vdwg.mxu0
        %2465 = vrot.lane.b32.xlu0 %v2361, 8
        %v2466 = vpop.permute.xlu0 %2465
        %2469 = vrot.lane.b32.xlu0 %v2409, 16
        %v2470 = vpop.permute.xlu0 %2469
        %2473 = vrot.lane.b32.xlu0 %v2459, 24
        %v2474 = vpop.permute.xlu0 %2473
        %v2476 = vsel %vm1303, %v2311, %v2466
        %v2477 = vsel %vm1764, %v2476, %v2470
        %v2478 = vsel %vm1766, %v2477, %v2474
        %v2479 = vpack.c.bf16 %v2478, %v2478
        %v2480 = vld [vmem:[%s934] sm:$0xf]
        %v2481 = vld [vmem:[%s934 + $0x4] sm:$0xf]
        %v2482 = vld [vmem:[%s934 + $0x8] sm:$0xf]
        %v2483 = vld [vmem:[%s934 + $0xc] sm:$0xf]
        %v2484 = vld [vmem:[%s1100] sm:$0x1]
        %v2486 = vlaneseq
        %v2487 = vshrl.u32 %v2486, 7
        %v2488 = vsub.s32 0, %v2487
        %v2489 = vrot.slane %v2484, %v2488
        %v2495 = vunpack.c.l.b16 %v2480
        %v2496 = vunpack.c.l.b16 %v2481
        %v2497 = vunpack.c.l.b16 %v2482
        %v2498 = vunpack.c.l.b16 %v2483
        %v2499 = vpack.c.b16 %v2496, %v2495
        %v2500 = vpack.c.b16 %v2498, %v2497
        %v2504 = vsel %vm1195, %v2479, 0
        %2506 = vmatprep.subr.bf16.mxu0 0
        %2507 = vmatpush1.bf16.msra.mxu0 0
        %2508 = vmatprep.subr.bf16.mxu0 0
        %2509 = vmatpush1.bf16.msra.mxu0 0
        %2510 = vmatprep.subr.bf16.mxu0 0
        %2511 = vmatpush1.bf16.msra.mxu0 0
        %2512 = vmatprep.subr.bf16.mxu0 0
        %2513 = vmatpush1.bf16.msra.mxu0 0
        %2514 = vmatprep.subr.bf16.mxu0 0
        %2515 = vmatpush1.bf16.msra.mxu0 0
        %2516 = vmatprep.subr.bf16.mxu0 0
        %2517 = vmatpush1.bf16.msra.mxu0 0
        %2518 = vmatprep.subr.bf16.mxu0 0
        %2519 = vmatpush1.bf16.msra.mxu0 %v2500
        %2520 = vmatprep.subr.bf16.mxu0 0
        %2521 = vmatpush1.bf16.msra.mxu0 %v2499
        %2522 = vmatprep.subr.bf16.mxu0 0
        %2523 = vmatpush2.bf16.msra.mxu0 0
        %2524 = vmatprep.subr.bf16.mxu0 0
        %2525 = vmatpush2.bf16.msra.mxu0 0
        %2526 = vmatprep.subr.bf16.mxu0 0
        %2527 = vmatpush2.bf16.msra.mxu0 0
        %2528 = vmatprep.subr.bf16.mxu0 0
        %2529 = vmatpush2.bf16.msra.mxu0 0
        %2530 = vmatprep.subr.bf16.mxu0 0
        %2531 = vmatpush2.bf16.msra.mxu0 0
        %2532 = vmatprep.subr.bf16.mxu0 0
        %2533 = vmatpush2.bf16.msra.mxu0 0
        %2534 = vmatprep.subr.bf16.mxu0 0
        %2535 = vmatpush2.bf16.msra.mxu0 0
        %2536 = vmatprep.subr.bf16.mxu0 0
        %2537 = vmatpush2.bf16.msra.mxu0 0
        %2538 = vmatprep.mubr.bf16.mxu0 0
        %2539 = vmatmul.mubr.bf16.gmra.mxu0 %v2504
        %v2540 = vpop.f32.mrf.mxu0
        %v2541 = vadd.f32 %v2489, %v2540
        %v2542 = vpop.f32.mrf.mxu0
        %v2543 = vpop.f32.mrf.mxu0
        %v2544 = vpop.f32.mrf.mxu0
        %2545 = vdwg.mxu0
        %v2546 = vadd.f32 %v1835, %v2541
        %s2547 = scalar_lea.vmem %s1115, 2
        %v2548 = vld [vmem:[%s2547] sm:$0x1]
        %s2549 = scalar_lea.vmem %s1120, 2
        %v2550 = vld [vmem:[%s2549] sm:$0x1]
        %v2551 = vsel %vm1195, %v2546, 0.0
        %2552 = vadd.xlane.f32.xlu0 %v2551
        %v2553 = vpop.xlane.xlu0 %2552
        %v2554 = vmul.f32 %v2553, %v1199
        %v2555 = vsub.f32 %v2546, %v2554
        %v2556 = vmul.f32 %v2555, %v2555
        %v2557 = vsel %vm1195, %v2556, 0.0
        %2558 = vadd.xlane.f32.xlu0 %v2557
        %v2559 = vpop.xlane.xlu0 %2558
        %v2560 = vmul.f32 %v2559, %v1206
        %v2561 = vrsqrt.pop %v2560
        %v2562 = vmul.f32 %v2560, %v2561
        %vm2563 = vcmp.eq.f32.partialorder %v2560, inf
        %v2564 = vsel %vm2563, %v2560, %v2562
        %vm2565 = vcmp.eq.f32.partialorder %v2560, 0.0
        %v2566 = vand.u32 %v2560, 2147483648
        %v2567 = vsel %vm2565, %v2566, %v2564
        %v2568 = vadd.f32 %v2567, 1e-06
        %v2569 = vrcp.pop %v2568
        %v2571 = vlaneseq
        %v2572 = vshrl.u32 %v2571, 7
        %v2573 = vsub.s32 0, %v2572
        %v2574 = vrot.slane %v2548, %v2573
        %v2576 = vmul.f32 %v2574, %v2555
        %v2577 = vmul.f32 %v2576, %v2569
        %v2579 = vlaneseq
        %v2580 = vshrl.u32 %v2579, 7
        %v2581 = vsub.s32 0, %v2580
        %v2582 = vrot.slane %v2550, %v2581
        %v2584 = vadd.f32 %v2577, %v2582
        %v2585 = vpack.c.bf16 %v2584, %v2584
        %v2586 = vld [vmem:[%s943] sm:$0xf]
        %v2587 = vld [vmem:[%s943 + $0x4] sm:$0xf]
        %v2588 = vld [vmem:[%s943 + $0x8] sm:$0xf]
        %v2589 = vld [vmem:[%s943 + $0xc] sm:$0xf]
        %v2590 = vld [vmem:[%s1103] sm:$0x1]
        %v2592 = vlaneseq
        %v2593 = vshrl.u32 %v2592, 7
        %v2594 = vsub.s32 0, %v2593
        %v2595 = vrot.slane %v2590, %v2594
        %v2601 = vunpack.c.l.b16 %v2586
        %v2602 = vunpack.c.l.b16 %v2587
        %v2603 = vunpack.c.l.b16 %v2588
        %v2604 = vunpack.c.l.b16 %v2589
        %v2605 = vpack.c.b16 %v2602, %v2601
        %v2606 = vpack.c.b16 %v2604, %v2603
        %v2610 = vsel %vm1195, %v2585, 0
        %2612 = vmatprep.subr.bf16.mxu0 0
        %2613 = vmatpush1.bf16.msra.mxu0 0
        %2614 = vmatprep.subr.bf16.mxu0 0
        %2615 = vmatpush1.bf16.msra.mxu0 0
        %2616 = vmatprep.subr.bf16.mxu0 0
        %2617 = vmatpush1.bf16.msra.mxu0 0
        %2618 = vmatprep.subr.bf16.mxu0 0
        %2619 = vmatpush1.bf16.msra.mxu0 0
        %2620 = vmatprep.subr.bf16.mxu0 0
        %2621 = vmatpush1.bf16.msra.mxu0 0
        %2622 = vmatprep.subr.bf16.mxu0 0
        %2623 = vmatpush1.bf16.msra.mxu0 0
        %2624 = vmatprep.subr.bf16.mxu0 0
        %2625 = vmatpush1.bf16.msra.mxu0 %v2606
        %2626 = vmatprep.subr.bf16.mxu0 0
        %2627 = vmatpush1.bf16.msra.mxu0 %v2605
        %2628 = vmatprep.subr.bf16.mxu0 0
        %2629 = vmatpush2.bf16.msra.mxu0 0
        %2630 = vmatprep.subr.bf16.mxu0 0
        %2631 = vmatpush2.bf16.msra.mxu0 0
        %2632 = vmatprep.subr.bf16.mxu0 0
        %2633 = vmatpush2.bf16.msra.mxu0 0
        %2634 = vmatprep.subr.bf16.mxu0 0
        %2635 = vmatpush2.bf16.msra.mxu0 0
        %2636 = vmatprep.subr.bf16.mxu0 0
        %2637 = vmatpush2.bf16.msra.mxu0 0
        %2638 = vmatprep.subr.bf16.mxu0 0
        %2639 = vmatpush2.bf16.msra.mxu0 0
        %2640 = vmatprep.subr.bf16.mxu0 0
        %2641 = vmatpush2.bf16.msra.mxu0 0
        %2642 = vmatprep.subr.bf16.mxu0 0
        %2643 = vmatpush2.bf16.msra.mxu0 0
        %2644 = vmatprep.mubr.bf16.mxu0 0
        %2645 = vmatmul.mubr.bf16.gmra.mxu0 %v2610
        %v2646 = vpop.f32.mrf.mxu0
        %v2647 = vadd.f32 %v2595, %v2646
        %v2648 = vpop.f32.mrf.mxu0
        %v2649 = vpop.f32.mrf.mxu0
        %v2650 = vpop.f32.mrf.mxu0
        %2651 = vdwg.mxu0
        %v2652 = vmax.f32 %v2647, 0.0
        %v2653 = vpack.c.bf16 %v2652, %v2652
        %v2654 = vld [vmem:[%s1108] sm:$0xf]
        %v2655 = vld [vmem:[%s1108 + $0x4] sm:$0xf]
        %v2656 = vld [vmem:[%s1108 + $0x8] sm:$0xf]
        %v2657 = vld [vmem:[%s1108 + $0xc] sm:$0xf]
        %v2658 = vld [vmem:[%s1108 + $0x10] sm:$0xf]
        %v2659 = vld [vmem:[%s1108 + $0x14] sm:$0xf]
        %v2660 = vld [vmem:[%s1108 + $0x18] sm:$0xf]
        %v2661 = vld [vmem:[%s1108 + $0x1c] sm:$0xf]
        %v2662 = vld [vmem:[%s1111] sm:$0x1]
        %v2664 = vlaneseq
        %v2665 = vshrl.u32 %v2664, 7
        %v2666 = vsub.s32 0, %v2665
        %v2667 = vrot.slane %v2662, %v2666
        %v2677 = vunpack.c.l.b16 %v2654
        %v2678 = vunpack.c.l.b16 %v2655
        %v2679 = vunpack.c.l.b16 %v2656
        %v2680 = vunpack.c.l.b16 %v2657
        %v2681 = vunpack.c.l.b16 %v2658
        %v2682 = vunpack.c.l.b16 %v2659
        %v2683 = vunpack.c.l.b16 %v2660
        %v2684 = vunpack.c.l.b16 %v2661
        %v2685 = vpack.c.b16 %v2678, %v2677
        %v2686 = vpack.c.b16 %v2680, %v2679
        %v2687 = vpack.c.b16 %v2682, %v2681
        %v2688 = vpack.c.b16 %v2684, %v2683
        %vm2693 = vcmask 523264
        %v2695 = vsel %vm2693, %v2653, 0
        %2697 = vmatprep.subr.bf16.mxu0 0
        %2698 = vmatpush1.bf16.msra.mxu0 0
        %2699 = vmatprep.subr.bf16.mxu0 0
        %2700 = vmatpush1.bf16.msra.mxu0 0
        %2701 = vmatprep.subr.bf16.mxu0 0
        %2702 = vmatpush1.bf16.msra.mxu0 0
        %2703 = vmatprep.subr.bf16.mxu0 0
        %2704 = vmatpush1.bf16.msra.mxu0 0
        %2705 = vmatprep.subr.bf16.mxu0 0
        %2706 = vmatpush1.bf16.msra.mxu0 %v2688
        %2707 = vmatprep.subr.bf16.mxu0 0
        %2708 = vmatpush1.bf16.msra.mxu0 %v2687
        %2709 = vmatprep.subr.bf16.mxu0 0
        %2710 = vmatpush1.bf16.msra.mxu0 %v2686
        %2711 = vmatprep.subr.bf16.mxu0 0
        %2712 = vmatpush1.bf16.msra.mxu0 %v2685
        %2713 = vmatprep.subr.bf16.mxu0 0
        %2714 = vmatpush2.bf16.msra.mxu0 0
        %2715 = vmatprep.subr.bf16.mxu0 0
        %2716 = vmatpush2.bf16.msra.mxu0 0
        %2717 = vmatprep.subr.bf16.mxu0 0
        %2718 = vmatpush2.bf16.msra.mxu0 0
        %2719 = vmatprep.subr.bf16.mxu0 0
        %2720 = vmatpush2.bf16.msra.mxu0 0
        %2721 = vmatprep.subr.bf16.mxu0 0
        %2722 = vmatpush2.bf16.msra.mxu0 0
        %2723 = vmatprep.subr.bf16.mxu0 0
        %2724 = vmatpush2.bf16.msra.mxu0 0
        %2725 = vmatprep.subr.bf16.mxu0 0
        %2726 = vmatpush2.bf16.msra.mxu0 0
        %2727 = vmatprep.subr.bf16.mxu0 0
        %2728 = vmatpush2.bf16.msra.mxu0 0
        %2729 = vmatprep.mubr.bf16.mxu0 0
        %2730 = vmatmul.mubr.bf16.gmra.mxu0 %v2695
        %v2731 = vpop.f32.mrf.mxu0
        %v2732 = vadd.f32 %v2667, %v2731
        %v2733 = vpop.f32.mrf.mxu0
        %v2734 = vpop.f32.mrf.mxu0
        %v2735 = vpop.f32.mrf.mxu0
        %2736 = vdwg.mxu0
        %v2737 = vadd.f32 %v2546, %v2732
        %2738 = vst.msk [vmem:[#allocation2] sm:$0xff] %vm1195, %v2737
        %p2739 = scmp.eq.s32.totalorder %s55, 1
        // Predicated region
        $region141: #{tpu_custom_call.1} parent=103 // pred_check
          %p2740 = pneg %p2739
        $region142: #{tpu_custom_call.1} parent=103 // pred_check_branch
          %2742 = sbr.rel (%p2740) target = $region144
        $region143: #{tpu_custom_call.1} parent=103 // pred_region
          %v2743 = vld [vmem:[%s19] sm:$0x1]
          %v2744 = vld [vmem:[%s20] sm:$0x1]
          %v2745 = vsel %vm1195, %v2737, 0.0
          %2746 = vadd.xlane.f32.xlu0 %v2745
          %v2747 = vpop.xlane.xlu0 %2746
          %v2748 = vmul.f32 %v2747, %v1199
          %v2749 = vsub.f32 %v2737, %v2748
          %v2750 = vmul.f32 %v2749, %v2749
          %v2751 = vsel %vm1195, %v2750, 0.0
          %2752 = vadd.xlane.f32.xlu0 %v2751
          %v2753 = vpop.xlane.xlu0 %2752
          %v2754 = vmul.f32 %v2753, %v1206
          %v2755 = vrsqrt.pop %v2754
          %v2756 = vmul.f32 %v2754, %v2755
          %vm2757 = vcmp.eq.f32.partialorder %v2754, inf
          %v2758 = vsel %vm2757, %v2754, %v2756
          %vm2759 = vcmp.eq.f32.partialorder %v2754, 0.0
          %v2760 = vand.u32 %v2754, 2147483648
          %v2761 = vsel %vm2759, %v2760, %v2758
          %v2762 = vadd.f32 %v2761, 1e-06
          %v2763 = vrcp.pop %v2762
          %v2765 = vlaneseq
          %v2766 = vshrl.u32 %v2765, 7
          %v2767 = vsub.s32 0, %v2766
          %v2768 = vrot.slane %v2743, %v2767
          %v2770 = vmul.f32 %v2768, %v2749
          %v2771 = vmul.f32 %v2770, %v2763
          %v2773 = vlaneseq
          %v2774 = vshrl.u32 %v2773, 7
          %v2775 = vsub.s32 0, %v2774
          %v2776 = vrot.slane %v2744, %v2775
          %v2778 = vadd.f32 %v2771, %v2776
          %2779 = vst.msk [vmem:[%s1076] sm:$0xff] %vm1195, %v2778
        $region144: #{tpu_custom_call.1} parent=103 // pred_fallthru
          _
        %s2780 = sand.u32 %s606, 1
        %s2781 = scalar_lea.sflag [#allocation5], %s2780
        %s2782 = sand.u32 %s606, 1
        %s2783 = smul.addr %s2782, 8
        %s2784 = scalar_lea.vmem [#allocation17], %s2783
        // Predicated region
        $region145: #{tpu_custom_call.1} parent=103 // pred_check
          %p2785 = pneg %p616
        $region146: #{tpu_custom_call.1} parent=103 // pred_check_branch
          %2787 = sbr.rel (%p2785) target = $region148
        $region147: #{tpu_custom_call.1} parent=103 // pred_region
          %s2789 = ssub.s32 128, 128
          %2790 = vsyncadd %s2781, %s2789
          %s2791 = smul.addr %s54, 128
          %s2792 = scalar_lea.hbm %s21, %s2791
          %s2794 = sshll.u32 %s2784, 4
          %s2795 = int_to_ptr.vmem [resolvable:$true] %s2794
          %2797 = dma.vmem_to_hbm [thread:$0]  %s2795, 128, %s2792, %s2781
        $region148: #{tpu_custom_call.1} parent=103 // pred_fallthru
          _
      $region104: #{tpu_custom_call.1} parent=5 // pred_fallthru
        _
      %p2798 = scmp.le.s32.totalorder 2, %s45
      // Predicated region
      $region149: #{tpu_custom_call.1} parent=5 // pred_check
        %p2799 = pneg %p2798
      $region150: #{tpu_custom_call.1} parent=5 // pred_check_branch
        %2801 = sbr.rel (%p2799) target = $region152
      $region151: #{tpu_custom_call.1} parent=5 // pred_region
        %s2802 = ssub.s32 %s45, 2
        // Predicated region
        $region153: #{tpu_custom_call.1} parent=151 // pred_check
          %p2803 = pneg %p622
        $region154: #{tpu_custom_call.1} parent=151 // pred_check_branch
          %2805 = sbr.rel (%p2803) target = $region156
        $region155: #{tpu_custom_call.1} parent=151 // pred_region
          %s2806 = sand.u32 %s607, 1
          %s2807 = scalar_lea.sflag [#allocation5], %s2806
          %s2808 = sand.u32 %s607, 1
          %s2809 = smul.addr %s2808, 8
          %s2810 = scalar_lea.vmem [#allocation17], %s2809
          %2811 = dma.done %s2807, 128
        $region156: #{tpu_custom_call.1} parent=151 // pred_fallthru
          _
      $region152: #{tpu_custom_call.1} parent=5 // pred_fallthru
        _
    $region6: #{tpu_custom_call.1} parent=1 // loop_footer
      %s49 = sadd.s32 1, %s45
    $region7: #{tpu_custom_call.1} parent=1 // loop_footer_branch
      %44 = sbr.rel target = $region3
    $region8: #{tpu_custom_call.1} parent=1 // loop_exit
      _
    %2812 = vsyncpa [#allocation4], 1
    %s2813 = scalar_lea.sflag [#allocation4], 1
    %2814 = vsyncpa %s2813, 1
    %2815 = vsyncpa [#allocation7], 1
    %s2816 = scalar_lea.sflag [#allocation7], 1
    %2817 = vsyncpa %s2816, 1
    %2818 = vsyncpa [#allocation10], 1
    %s2819 = scalar_lea.sflag [#allocation10], 1
    %2820 = vsyncpa %s2819, 1
    %2821 = vsyncpa [#allocation13], 1
    %s2822 = scalar_lea.sflag [#allocation13], 1
    %2823 = vsyncpa %s2822, 1
    %2824 = vsyncpa [#allocation16], 1
    %s2825 = scalar_lea.sflag [#allocation16], 1
    %2826 = vsyncpa %s2825, 1
    %2827 = vsyncpa [#allocation5], 1
    %s2828 = scalar_lea.sflag [#allocation5], 1
    %2829 = vsyncpa %s2828, 1

</llo_original>
